<compile_context>
chip_gen: v7x
topology: tpu7x:2x2x1
jax: 0.10.0
libtpu: 0.0.40
codegen_flags: <defaults>
</compile_context>

<pallas_src>
import jax
import jax.numpy as jnp
from jax.experimental import pallas as pl
from jax.experimental.pallas import tpu as pltpu


# ---------------------------------------------------------------------------
# Fused encoder+decoder kernel (single invocation, interleaved unrolled loop)
# ---------------------------------------------------------------------------
def _lstm_ae_kernel(x_ref, wih_e_ref, whh_e_ref, b_e_ref,
                    wih_d_ref, whh_d_ref, b_d_ref, out_ref):
    f32 = jnp.float32
    B = out_ref.shape[0]                  # padded batch (multiple of 8)
    P = whh_e_ref.shape[0]                # lane-padded per-gate width (128)
    Dd = whh_d_ref.shape[0]               # decoder hidden size (= input_dim)
    T = x_ref.shape[0] // B               # sequence length

    # Hoisted encoder input projection for ALL timesteps.  For input_dim == 1
    # this is a pure VPU broadcast-multiply (no K=1 MXU matmul in the loop).
    if x_ref.shape[1] == 1:
        x_proj = x_ref[...] * wih_e_ref[...]                       # (T*B, 4P)
    else:
        x_proj = jnp.dot(x_ref[...], wih_e_ref[...],
                         preferred_element_type=f32)               # (T*B, 4P)

    whh_e = whh_e_ref[...]                                         # (P, 4P)
    b_e = b_e_ref[...]                                             # (1, 4P)
    wih_d = wih_d_ref[...]                                         # (P, 4*Dd)
    whh_d = whh_d_ref[...]                                         # (Dd, 4*Dd)
    b_d = b_d_ref[...]                                             # (1, 4*Dd)

    h_e = jnp.zeros((B, P), f32)
    c_e = jnp.zeros((B, P), f32)
    h_d = jnp.zeros((B, Dd), f32)
    c_d = jnp.zeros((B, Dd), f32)

    # Fully unrolled time loop (T static) -> full LLO scheduler visibility.
    for t in range(T):
        # ---------------- encoder step t (the serial MXU chain) --------------
        gates = (x_proj[t * B:(t + 1) * B, :]
                 + jnp.dot(h_e, whh_e, preferred_element_type=f32)
                 + b_e)                                            # (B, 4P)
        # vreg-aligned gate slices (lane offsets 0, P, 2P, 3P with P == 128)
        i_e = jax.nn.sigmoid(gates[:, 0 * P:1 * P])
        f_e = jax.nn.sigmoid(gates[:, 1 * P:2 * P])
        g_e = jnp.tanh(gates[:, 2 * P:3 * P])
        o_e = jax.nn.sigmoid(gates[:, 3 * P:4 * P])
        c_e = f_e * c_e + i_e * g_e
        h_e = o_e * jnp.tanh(c_e)

        # ---------------- decoder step t (hangs off h_e(t), overlaps) --------
        # Nothing on the encoder chain depends on this, so it fills otherwise
        # idle MXU/EUP/VPU slots while the next encoder matmul is in flight.
        d_in = jnp.dot(h_e, wih_d, preferred_element_type=f32)    # (B, 4*Dd)
        if Dd == 1:
            rec = h_d * whh_d          # K=1 recurrence -> VPU broadcast, not MXU
        else:
            rec = jnp.dot(h_d, whh_d, preferred_element_type=f32)
        g_all = d_in + rec + b_d                                   # (B, 4*Dd)
        i_d = jax.nn.sigmoid(g_all[:, 0 * Dd:1 * Dd])
        f_d = jax.nn.sigmoid(g_all[:, 1 * Dd:2 * Dd])
        g_d = jnp.tanh(g_all[:, 2 * Dd:3 * Dd])
        o_d = jax.nn.sigmoid(g_all[:, 3 * Dd:4 * Dd])
        c_d = f_d * c_d + i_d * g_d
        h_d = o_d * jnp.tanh(c_d)
        out_ref[:, t * Dd:(t + 1) * Dd] = h_d      # VMEM write; 1 HBM writeback


# ---------------------------------------------------------------------------
# Weight re-layout (PyTorch (4H, D) weights -> lane-aligned kernel layout)
# ---------------------------------------------------------------------------
def _round_up(x, m):
    return ((x + m - 1) // m) * m


def _prep_params(params, input_dim, hidden_dim, lane=128):
    H = hidden_dim
    P = _round_up(H, lane)                # lane-aligned per-gate block width
    Dd = input_dim                        # decoder hidden size

    def pad_gate_lanes(w_t, h, p):
        # w_t: (K, 4h) -> (K, 4p) with gate k placed at lane offset k*p.
        K = w_t.shape[0]
        out = jnp.zeros((K, 4 * p), jnp.float32)
        for k in range(4):
            out = out.at[:, k * p:k * p + h].set(w_t[:, k * h:(k + 1) * h])
        return out

    # encoder: W_ih (4H, D_in), W_hh (4H, H), biases (4H,)
    wih_e = pad_gate_lanes(jnp.asarray(params["enc_w_ih"], jnp.float32).T, H, P)    # (D_in, 4P)
    whh_e_g = pad_gate_lanes(jnp.asarray(params["enc_w_hh"], jnp.float32).T, H, P)  # (H, 4P)
    whh_e = jnp.zeros((P, 4 * P), jnp.float32).at[:H, :].set(whh_e_g)               # (P, 4P)
    b_e = pad_gate_lanes((params["enc_b_ih"] + params["enc_b_hh"])
                         .astype(jnp.float32).reshape(1, 4 * H), H, P)              # (1, 4P)

    # decoder: W_ih (4*Dd, H), W_hh (4*Dd, Dd), biases (4*Dd,)
    wih_d_t = jnp.asarray(params["dec_w_ih"], jnp.float32).T                        # (H, 4*Dd)
    wih_d = jnp.zeros((P, 4 * Dd), jnp.float32).at[:H, :].set(wih_d_t)              # (P, 4*Dd)
    whh_d = jnp.asarray(params["dec_w_hh"], jnp.float32).T                          # (Dd, 4*Dd)
    b_d = (params["dec_b_ih"] + params["dec_b_hh"]).astype(jnp.float32).reshape(1, 4 * Dd)

    return P, wih_e, whh_e, b_e, wih_d, whh_d, b_d


# ---------------------------------------------------------------------------
# Full autoencoder forward (matches PyTorch module semantics, batch-first)
# ---------------------------------------------------------------------------
def lstm_autoencoder_forward(x, params):
    """x: (B, T, input_dim) float32 -> (B, T, input_dim)."""
    B, T, D_in = x.shape
    H = params["enc_w_hh"].shape[1]
    B_pad = _round_up(B, 8)               # fill all 8 sublanes of every vreg

    P, wih_e, whh_e, b_e, wih_d, whh_d, b_d = _prep_params(params, D_in, H)

    # (B, T, D_in) -> batch-padded, time-major, flattened to (T*B_pad, D_in)
    x_p = jnp.zeros((B_pad, T, D_in), jnp.float32).at[:B].set(x.astype(jnp.float32))
    x_flat = jnp.transpose(x_p, (1, 0, 2)).reshape(T * B_pad, D_in)

    vmem = pl.BlockSpec(memory_space=pltpu.MemorySpace.VMEM)
    out = pl.pallas_call(
        _lstm_ae_kernel,
        out_shape=jax.ShapeDtypeStruct((B_pad, T * D_in), jnp.float32),
        in_specs=[vmem] * 7,
        out_specs=vmem,
    )(x_flat, wih_e, whh_e, b_e, wih_d, whh_d, b_d)

    # TODO(synk): for large batches on v7x, add a leading "parallel" batch grid
    # axis to split across the 2 TensorCores.
    return out[:B].reshape(B, T, D_in)


# ---------------------------------------------------------------------------
# Pure-JAX reference (lax.scan) to validate the Pallas kernel
# ---------------------------------------------------------------------------
def _lstm_layer_ref(x_tm, w_ih, w_hh, b_ih, b_hh):
    T, B, _ = x_tm.shape
    H = w_hh.shape[1]

    def step(carry, x_t):
        h, c = carry
        gates = x_t @ w_ih.T + h @ w_hh.T + b_ih + b_hh
        i = jax.nn.sigmoid(gates[:, :H])
        f = jax.nn.sigmoid(gates[:, H:2 * H])
        g = jnp.tanh(gates[:, 2 * H:3 * H])
        o = jax.nn.sigmoid(gates[:, 3 * H:4 * H])
        c = f * c + i * g
        h = o * jnp.tanh(c)
        return (h, c), h

    init = (jnp.zeros((B, H), jnp.float32), jnp.zeros((B, H), jnp.float32))
    _, hs = jax.lax.scan(step, init, x_tm)
    return hs


def _autoencoder_ref(x, params):
    x_tm = jnp.transpose(x, (1, 0, 2))
    enc = _lstm_layer_ref(x_tm, params["enc_w_ih"], params["enc_w_hh"],
                          params["enc_b_ih"], params["enc_b_hh"])
    dec = _lstm_layer_ref(enc, params["dec_w_ih"], params["dec_w_hh"],
                          params["dec_b_ih"], params["dec_b_hh"])
    return jnp.transpose(dec, (1, 0, 2))


# ---------------------------------------------------------------------------
# Deterministic parameter init (PyTorch nn.LSTM default: U(-1/sqrt(H), 1/sqrt(H)))
# ---------------------------------------------------------------------------
def init_params(key, input_dim=1, hidden_dim=64):
    keys = jax.random.split(key, 8)

    def u(k, shape, bound):
        return jax.random.uniform(k, shape, jnp.float32, -bound, bound)

    k_enc = 1.0 / jnp.sqrt(hidden_dim)
    k_dec = 1.0 / jnp.sqrt(input_dim)   # decoder hidden_size == input_dim
    return {
        # encoder: input_dim -> hidden_dim
        "enc_w_ih": u(keys[0], (4 * hidden_dim, input_dim), k_enc),
        "enc_w_hh": u(keys[1], (4 * hidden_dim, hidden_dim), k_enc),
        "enc_b_ih": u(keys[2], (4 * hidden_dim,), k_enc),
        "enc_b_hh": u(keys[3], (4 * hidden_dim,), k_enc),
        # decoder: hidden_dim -> input_dim
        "dec_w_ih": u(keys[4], (4 * input_dim, hidden_dim), k_dec),
        "dec_w_hh": u(keys[5], (4 * input_dim, input_dim), k_dec),
        "dec_b_ih": u(keys[6], (4 * input_dim,), k_dec),
        "dec_b_hh": u(keys[7], (4 * input_dim,), k_dec),
    }


if __name__ == "__main__":
    key = jax.random.PRNGKey(0)
    k_param, k_x = jax.random.split(key)

    B, T, D_IN, H = 4, 8, 1, 64
    params = init_params(k_param, input_dim=D_IN, hidden_dim=H)
    x = jax.random.normal(k_x, (B, T, D_IN), jnp.float32)

    out = lstm_autoencoder_forward(x, params)
    out = jax.block_until_ready(out)

    ref = _autoencoder_ref(x, params)
    assert out.shape == (B, T, D_IN)
    assert jnp.allclose(out, ref, atol=1e-5, rtol=1e-5), "mismatch vs reference"

    print("KERNEL_OK")
</pallas_src>

<mosaic_0001>
module attributes {stable_mosaic.version = 11 : i64} {
  func.func @_lstm_ae_kernel(%arg0: memref<64x1xf32, #tpu.memory_space<vmem>>, %arg1: memref<1x512xf32, #tpu.memory_space<vmem>>, %arg2: memref<128x512xf32, #tpu.memory_space<vmem>>, %arg3: memref<1x512xf32, #tpu.memory_space<vmem>>, %arg4: memref<128x4xf32, #tpu.memory_space<vmem>>, %arg5: memref<1x4xf32, #tpu.memory_space<vmem>>, %arg6: memref<1x4xf32, #tpu.memory_space<vmem>>, %arg7: memref<8x8xf32, #tpu.memory_space<vmem>>) attributes {dimension_semantics = [], scalar_prefetch = 0 : i64, scratch_operands = 0 : i64, tpu.core_type = #tpu.core_type<tc>} {
    %c0 = arith.constant 0 : index
    %c0_0 = arith.constant 0 : index
    %0 = vector.load %arg0[%c0, %c0_0] : memref<64x1xf32, #tpu.memory_space<vmem>>, vector<64x1xf32>
    %c0_1 = arith.constant 0 : index
    %c0_2 = arith.constant 0 : index
    %1 = vector.load %arg1[%c0_1, %c0_2] : memref<1x512xf32, #tpu.memory_space<vmem>>, vector<1x512xf32>
    %2 = vector.broadcast %0 : vector<64x1xf32> to vector<64x512xf32>
    %3 = vector.broadcast %1 : vector<1x512xf32> to vector<64x512xf32>
    %4 = arith.mulf %2, %3 : vector<64x512xf32>
    %c0_3 = arith.constant 0 : index
    %c0_4 = arith.constant 0 : index
    %5 = vector.load %arg2[%c0_3, %c0_4] : memref<128x512xf32, #tpu.memory_space<vmem>>, vector<128x512xf32>
    %c0_5 = arith.constant 0 : index
    %c0_6 = arith.constant 0 : index
    %6 = vector.load %arg3[%c0_5, %c0_6] : memref<1x512xf32, #tpu.memory_space<vmem>>, vector<1x512xf32>
    %c0_7 = arith.constant 0 : index
    %c0_8 = arith.constant 0 : index
    %7 = vector.load %arg4[%c0_7, %c0_8] : memref<128x4xf32, #tpu.memory_space<vmem>>, vector<128x4xf32>
    %c0_9 = arith.constant 0 : index
    %c0_10 = arith.constant 0 : index
    %8 = vector.load %arg5[%c0_9, %c0_10] : memref<1x4xf32, #tpu.memory_space<vmem>>, vector<1x4xf32>
    %c0_11 = arith.constant 0 : index
    %c0_12 = arith.constant 0 : index
    %9 = vector.load %arg6[%c0_11, %c0_12] : memref<1x4xf32, #tpu.memory_space<vmem>>, vector<1x4xf32>
    %cst = arith.constant 0.000000e+00 : f32
    %10 = vector.broadcast %cst : f32 to vector<8x128xf32>
    %cst_13 = arith.constant 0.000000e+00 : f32
    %11 = vector.broadcast %cst_13 : f32 to vector<8x128xf32>
    %cst_14 = arith.constant 0.000000e+00 : f32
    %12 = vector.broadcast %cst_14 : f32 to vector<8x1xf32>
    %cst_15 = arith.constant 0.000000e+00 : f32
    %13 = vector.broadcast %cst_15 : f32 to vector<8x1xf32>
    %14 = vector.extract_strided_slice %4 {offsets = [0, 0], sizes = [8, 512], strides = [1, 1]} : vector<64x512xf32> to vector<8x512xf32>
    %cst_16 = arith.constant dense<0.000000e+00> : vector<8x512xf32>
    %15 = tpu.matmul %10, %5, %cst_16 {dimension_numbers = #tpu.dot_dimension_numbers<[1], [0], [0], [1], [0, 0, 1, 1], [], []>} : vector<8x128xf32>, vector<128x512xf32>, vector<8x512xf32> -> vector<8x512xf32>
    %16 = arith.addf %14, %15 : vector<8x512xf32>
    %17 = vector.broadcast %6 : vector<1x512xf32> to vector<8x512xf32>
    %18 = arith.addf %16, %17 : vector<8x512xf32>
    %19 = vector.extract_strided_slice %18 {offsets = [0, 0], sizes = [8, 128], strides = [1, 1]} : vector<8x512xf32> to vector<8x128xf32>
    %20 = arith.negf %19 : vector<8x128xf32>
    %21 = math.exp %20 : vector<8x128xf32>
    %cst_17 = arith.constant 1.000000e+00 : f32
    %22 = vector.broadcast %cst_17 : f32 to vector<8x128xf32>
    %23 = arith.addf %22, %21 : vector<8x128xf32>
    %24 = arith.divf %22, %23 : vector<8x128xf32>
    %25 = vector.extract_strided_slice %18 {offsets = [0, 128], sizes = [8, 128], strides = [1, 1]} : vector<8x512xf32> to vector<8x128xf32>
    %26 = arith.negf %25 : vector<8x128xf32>
    %27 = math.exp %26 : vector<8x128xf32>
    %cst_18 = arith.constant 1.000000e+00 : f32
    %28 = vector.broadcast %cst_18 : f32 to vector<8x128xf32>
    %29 = arith.addf %28, %27 : vector<8x128xf32>
    %30 = arith.divf %28, %29 : vector<8x128xf32>
    %31 = vector.extract_strided_slice %18 {offsets = [0, 256], sizes = [8, 128], strides = [1, 1]} : vector<8x512xf32> to vector<8x128xf32>
    %32 = math.tanh %31 : vector<8x128xf32>
    %33 = vector.extract_strided_slice %18 {offsets = [0, 384], sizes = [8, 128], strides = [1, 1]} : vector<8x512xf32> to vector<8x128xf32>
    %34 = arith.negf %33 : vector<8x128xf32>
    %35 = math.exp %34 : vector<8x128xf32>
    %cst_19 = arith.constant 1.000000e+00 : f32
    %36 = vector.broadcast %cst_19 : f32 to vector<8x128xf32>
    %37 = arith.addf %36, %35 : vector<8x128xf32>
    %38 = arith.divf %36, %37 : vector<8x128xf32>
    %39 = arith.mulf %30, %11 : vector<8x128xf32>
    %40 = arith.mulf %24, %32 : vector<8x128xf32>
    %41 = arith.addf %39, %40 : vector<8x128xf32>
    %42 = math.tanh %41 : vector<8x128xf32>
    %43 = arith.mulf %38, %42 : vector<8x128xf32>
    %cst_20 = arith.constant dense<0.000000e+00> : vector<8x4xf32>
    %44 = tpu.matmul %43, %7, %cst_20 {dimension_numbers = #tpu.dot_dimension_numbers<[1], [0], [0], [1], [0, 0, 1, 1], [], []>} : vector<8x128xf32>, vector<128x4xf32>, vector<8x4xf32> -> vector<8x4xf32>
    %45 = vector.broadcast %12 : vector<8x1xf32> to vector<8x4xf32>
    %46 = vector.broadcast %8 : vector<1x4xf32> to vector<8x4xf32>
    %47 = arith.mulf %45, %46 : vector<8x4xf32>
    %48 = arith.addf %44, %47 : vector<8x4xf32>
    %49 = vector.broadcast %9 : vector<1x4xf32> to vector<8x4xf32>
    %50 = arith.addf %48, %49 : vector<8x4xf32>
    %51 = vector.extract_strided_slice %50 {offsets = [0, 0], sizes = [8, 1], strides = [1, 1]} : vector<8x4xf32> to vector<8x1xf32>
    %52 = arith.negf %51 : vector<8x1xf32>
    %53 = math.exp %52 : vector<8x1xf32>
    %cst_21 = arith.constant 1.000000e+00 : f32
    %54 = vector.broadcast %cst_21 : f32 to vector<8x1xf32>
    %55 = arith.addf %54, %53 : vector<8x1xf32>
    %56 = arith.divf %54, %55 : vector<8x1xf32>
    %57 = vector.extract_strided_slice %50 {offsets = [0, 1], sizes = [8, 1], strides = [1, 1]} : vector<8x4xf32> to vector<8x1xf32>
    %58 = arith.negf %57 : vector<8x1xf32>
    %59 = math.exp %58 : vector<8x1xf32>
    %cst_22 = arith.constant 1.000000e+00 : f32
    %60 = vector.broadcast %cst_22 : f32 to vector<8x1xf32>
    %61 = arith.addf %60, %59 : vector<8x1xf32>
    %62 = arith.divf %60, %61 : vector<8x1xf32>
    %63 = vector.extract_strided_slice %50 {offsets = [0, 2], sizes = [8, 1], strides = [1, 1]} : vector<8x4xf32> to vector<8x1xf32>
    %64 = math.tanh %63 : vector<8x1xf32>
    %65 = vector.extract_strided_slice %50 {offsets = [0, 3], sizes = [8, 1], strides = [1, 1]} : vector<8x4xf32> to vector<8x1xf32>
    %66 = arith.negf %65 : vector<8x1xf32>
    %67 = math.exp %66 : vector<8x1xf32>
    %cst_23 = arith.constant 1.000000e+00 : f32
    %68 = vector.broadcast %cst_23 : f32 to vector<8x1xf32>
    %69 = arith.addf %68, %67 : vector<8x1xf32>
    %70 = arith.divf %68, %69 : vector<8x1xf32>
    %71 = arith.mulf %62, %13 : vector<8x1xf32>
    %72 = arith.mulf %56, %64 : vector<8x1xf32>
    %73 = arith.addf %71, %72 : vector<8x1xf32>
    %74 = math.tanh %73 : vector<8x1xf32>
    %75 = arith.mulf %70, %74 : vector<8x1xf32>
    %c0_24 = arith.constant 0 : index
    %c0_25 = arith.constant 0 : index
    %76 = vector.load %arg7[%c0_24, %c0_25] : memref<8x8xf32, #tpu.memory_space<vmem>>, vector<8x1xf32>
    tpu.vector_store %arg7[%c0_24, %c0_25], %75 {strides = array<i32>} : memref<8x8xf32, #tpu.memory_space<vmem>>, vector<8x1xf32>,
    %77 = vector.extract_strided_slice %4 {offsets = [8, 0], sizes = [8, 512], strides = [1, 1]} : vector<64x512xf32> to vector<8x512xf32>
    %cst_26 = arith.constant dense<0.000000e+00> : vector<8x512xf32>
    %78 = tpu.matmul %43, %5, %cst_26 {dimension_numbers = #tpu.dot_dimension_numbers<[1], [0], [0], [1], [0, 0, 1, 1], [], []>} : vector<8x128xf32>, vector<128x512xf32>, vector<8x512xf32> -> vector<8x512xf32>
    %79 = arith.addf %77, %78 : vector<8x512xf32>
    %80 = vector.broadcast %6 : vector<1x512xf32> to vector<8x512xf32>
    %81 = arith.addf %79, %80 : vector<8x512xf32>
    %82 = vector.extract_strided_slice %81 {offsets = [0, 0], sizes = [8, 128], strides = [1, 1]} : vector<8x512xf32> to vector<8x128xf32>
    %83 = arith.negf %82 : vector<8x128xf32>
    %84 = math.exp %83 : vector<8x128xf32>
    %cst_27 = arith.constant 1.000000e+00 : f32
    %85 = vector.broadcast %cst_27 : f32 to vector<8x128xf32>
    %86 = arith.addf %85, %84 : vector<8x128xf32>
    %87 = arith.divf %85, %86 : vector<8x128xf32>
    %88 = vector.extract_strided_slice %81 {offsets = [0, 128], sizes = [8, 128], strides = [1, 1]} : vector<8x512xf32> to vector<8x128xf32>
    %89 = arith.negf %88 : vector<8x128xf32>
    %90 = math.exp %89 : vector<8x128xf32>
    %cst_28 = arith.constant 1.000000e+00 : f32
    %91 = vector.broadcast %cst_28 : f32 to vector<8x128xf32>
    %92 = arith.addf %91, %90 : vector<8x128xf32>
    %93 = arith.divf %91, %92 : vector<8x128xf32>
    %94 = vector.extract_strided_slice %81 {offsets = [0, 256], sizes = [8, 128], strides = [1, 1]} : vector<8x512xf32> to vector<8x128xf32>
    %95 = math.tanh %94 : vector<8x128xf32>
    %96 = vector.extract_strided_slice %81 {offsets = [0, 384], sizes = [8, 128], strides = [1, 1]} : vector<8x512xf32> to vector<8x128xf32>
    %97 = arith.negf %96 : vector<8x128xf32>
    %98 = math.exp %97 : vector<8x128xf32>
    %cst_29 = arith.constant 1.000000e+00 : f32
    %99 = vector.broadcast %cst_29 : f32 to vector<8x128xf32>
    %100 = arith.addf %99, %98 : vector<8x128xf32>
    %101 = arith.divf %99, %100 : vector<8x128xf32>
    %102 = arith.mulf %93, %41 : vector<8x128xf32>
    %103 = arith.mulf %87, %95 : vector<8x128xf32>
    %104 = arith.addf %102, %103 : vector<8x128xf32>
    %105 = math.tanh %104 : vector<8x128xf32>
    %106 = arith.mulf %101, %105 : vector<8x128xf32>
    %cst_30 = arith.constant dense<0.000000e+00> : vector<8x4xf32>
    %107 = tpu.matmul %106, %7, %cst_30 {dimension_numbers = #tpu.dot_dimension_numbers<[1], [0], [0], [1], [0, 0, 1, 1], [], []>} : vector<8x128xf32>, vector<128x4xf32>, vector<8x4xf32> -> vector<8x4xf32>
    %108 = vector.broadcast %75 : vector<8x1xf32> to vector<8x4xf32>
    %109 = vector.broadcast %8 : vector<1x4xf32> to vector<8x4xf32>
    %110 = arith.mulf %108, %109 : vector<8x4xf32>
    %111 = arith.addf %107, %110 : vector<8x4xf32>
    %112 = vector.broadcast %9 : vector<1x4xf32> to vector<8x4xf32>
    %113 = arith.addf %111, %112 : vector<8x4xf32>
    %114 = vector.extract_strided_slice %113 {offsets = [0, 0], sizes = [8, 1], strides = [1, 1]} : vector<8x4xf32> to vector<8x1xf32>
    %115 = arith.negf %114 : vector<8x1xf32>
    %116 = math.exp %115 : vector<8x1xf32>
    %cst_31 = arith.constant 1.000000e+00 : f32
    %117 = vector.broadcast %cst_31 : f32 to vector<8x1xf32>
    %118 = arith.addf %117, %116 : vector<8x1xf32>
    %119 = arith.divf %117, %118 : vector<8x1xf32>
    %120 = vector.extract_strided_slice %113 {offsets = [0, 1], sizes = [8, 1], strides = [1, 1]} : vector<8x4xf32> to vector<8x1xf32>
    %121 = arith.negf %120 : vector<8x1xf32>
    %122 = math.exp %121 : vector<8x1xf32>
    %cst_32 = arith.constant 1.000000e+00 : f32
    %123 = vector.broadcast %cst_32 : f32 to vector<8x1xf32>
    %124 = arith.addf %123, %122 : vector<8x1xf32>
    %125 = arith.divf %123, %124 : vector<8x1xf32>
    %126 = vector.extract_strided_slice %113 {offsets = [0, 2], sizes = [8, 1], strides = [1, 1]} : vector<8x4xf32> to vector<8x1xf32>
    %127 = math.tanh %126 : vector<8x1xf32>
    %128 = vector.extract_strided_slice %113 {offsets = [0, 3], sizes = [8, 1], strides = [1, 1]} : vector<8x4xf32> to vector<8x1xf32>
    %129 = arith.negf %128 : vector<8x1xf32>
    %130 = math.exp %129 : vector<8x1xf32>
    %cst_33 = arith.constant 1.000000e+00 : f32
    %131 = vector.broadcast %cst_33 : f32 to vector<8x1xf32>
    %132 = arith.addf %131, %130 : vector<8x1xf32>
    %133 = arith.divf %131, %132 : vector<8x1xf32>
    %134 = arith.mulf %125, %73 : vector<8x1xf32>
    %135 = arith.mulf %119, %127 : vector<8x1xf32>
    %136 = arith.addf %134, %135 : vector<8x1xf32>
    %137 = math.tanh %136 : vector<8x1xf32>
    %138 = arith.mulf %133, %137 : vector<8x1xf32>
    %c0_34 = arith.constant 0 : index
    %c1 = arith.constant 1 : index
    %139 = vector.load %arg7[%c0_34, %c1] : memref<8x8xf32, #tpu.memory_space<vmem>>, vector<8x1xf32>
    tpu.vector_store %arg7[%c0_34, %c1], %138 {strides = array<i32>} : memref<8x8xf32, #tpu.memory_space<vmem>>, vector<8x1xf32>,
    %140 = vector.extract_strided_slice %4 {offsets = [16, 0], sizes = [8, 512], strides = [1, 1]} : vector<64x512xf32> to vector<8x512xf32>
    %cst_35 = arith.constant dense<0.000000e+00> : vector<8x512xf32>
    %141 = tpu.matmul %106, %5, %cst_35 {dimension_numbers = #tpu.dot_dimension_numbers<[1], [0], [0], [1], [0, 0, 1, 1], [], []>} : vector<8x128xf32>, vector<128x512xf32>, vector<8x512xf32> -> vector<8x512xf32>
    %142 = arith.addf %140, %141 : vector<8x512xf32>
    %143 = vector.broadcast %6 : vector<1x512xf32> to vector<8x512xf32>
    %144 = arith.addf %142, %143 : vector<8x512xf32>
    %145 = vector.extract_strided_slice %144 {offsets = [0, 0], sizes = [8, 128], strides = [1, 1]} : vector<8x512xf32> to vector<8x128xf32>
    %146 = arith.negf %145 : vector<8x128xf32>
    %147 = math.exp %146 : vector<8x128xf32>
    %cst_36 = arith.constant 1.000000e+00 : f32
    %148 = vector.broadcast %cst_36 : f32 to vector<8x128xf32>
    %149 = arith.addf %148, %147 : vector<8x128xf32>
    %150 = arith.divf %148, %149 : vector<8x128xf32>
    %151 = vector.extract_strided_slice %144 {offsets = [0, 128], sizes = [8, 128], strides = [1, 1]} : vector<8x512xf32> to vector<8x128xf32>
    %152 = arith.negf %151 : vector<8x128xf32>
    %153 = math.exp %152 : vector<8x128xf32>
    %cst_37 = arith.constant 1.000000e+00 : f32
    %154 = vector.broadcast %cst_37 : f32 to vector<8x128xf32>
    %155 = arith.addf %154, %153 : vector<8x128xf32>
    %156 = arith.divf %154, %155 : vector<8x128xf32>
    %157 = vector.extract_strided_slice %144 {offsets = [0, 256], sizes = [8, 128], strides = [1, 1]} : vector<8x512xf32> to vector<8x128xf32>
    %158 = math.tanh %157 : vector<8x128xf32>
    %159 = vector.extract_strided_slice %144 {offsets = [0, 384], sizes = [8, 128], strides = [1, 1]} : vector<8x512xf32> to vector<8x128xf32>
    %160 = arith.negf %159 : vector<8x128xf32>
    %161 = math.exp %160 : vector<8x128xf32>
    %cst_38 = arith.constant 1.000000e+00 : f32
    %162 = vector.broadcast %cst_38 : f32 to vector<8x128xf32>
    %163 = arith.addf %162, %161 : vector<8x128xf32>
    %164 = arith.divf %162, %163 : vector<8x128xf32>
    %165 = arith.mulf %156, %104 : vector<8x128xf32>
    %166 = arith.mulf %150, %158 : vector<8x128xf32>
    %167 = arith.addf %165, %166 : vector<8x128xf32>
    %168 = math.tanh %167 : vector<8x128xf32>
    %169 = arith.mulf %164, %168 : vector<8x128xf32>
    %cst_39 = arith.constant dense<0.000000e+00> : vector<8x4xf32>
    %170 = tpu.matmul %169, %7, %cst_39 {dimension_numbers = #tpu.dot_dimension_numbers<[1], [0], [0], [1], [0, 0, 1, 1], [], []>} : vector<8x128xf32>, vector<128x4xf32>, vector<8x4xf32> -> vector<8x4xf32>
    %171 = vector.broadcast %138 : vector<8x1xf32> to vector<8x4xf32>
    %172 = vector.broadcast %8 : vector<1x4xf32> to vector<8x4xf32>
    %173 = arith.mulf %171, %172 : vector<8x4xf32>
    %174 = arith.addf %170, %173 : vector<8x4xf32>
    %175 = vector.broadcast %9 : vector<1x4xf32> to vector<8x4xf32>
    %176 = arith.addf %174, %175 : vector<8x4xf32>
    %177 = vector.extract_strided_slice %176 {offsets = [0, 0], sizes = [8, 1], strides = [1, 1]} : vector<8x4xf32> to vector<8x1xf32>
    %178 = arith.negf %177 : vector<8x1xf32>
    %179 = math.exp %178 : vector<8x1xf32>
    %cst_40 = arith.constant 1.000000e+00 : f32
    %180 = vector.broadcast %cst_40 : f32 to vector<8x1xf32>
    %181 = arith.addf %180, %179 : vector<8x1xf32>
    %182 = arith.divf %180, %181 : vector<8x1xf32>
    %183 = vector.extract_strided_slice %176 {offsets = [0, 1], sizes = [8, 1], strides = [1, 1]} : vector<8x4xf32> to vector<8x1xf32>
    %184 = arith.negf %183 : vector<8x1xf32>
    %185 = math.exp %184 : vector<8x1xf32>
    %cst_41 = arith.constant 1.000000e+00 : f32
    %186 = vector.broadcast %cst_41 : f32 to vector<8x1xf32>
    %187 = arith.addf %186, %185 : vector<8x1xf32>
    %188 = arith.divf %186, %187 : vector<8x1xf32>
    %189 = vector.extract_strided_slice %176 {offsets = [0, 2], sizes = [8, 1], strides = [1, 1]} : vector<8x4xf32> to vector<8x1xf32>
    %190 = math.tanh %189 : vector<8x1xf32>
    %191 = vector.extract_strided_slice %176 {offsets = [0, 3], sizes = [8, 1], strides = [1, 1]} : vector<8x4xf32> to vector<8x1xf32>
    %192 = arith.negf %191 : vector<8x1xf32>
    %193 = math.exp %192 : vector<8x1xf32>
    %cst_42 = arith.constant 1.000000e+00 : f32
    %194 = vector.broadcast %cst_42 : f32 to vector<8x1xf32>
    %195 = arith.addf %194, %193 : vector<8x1xf32>
    %196 = arith.divf %194, %195 : vector<8x1xf32>
    %197 = arith.mulf %188, %136 : vector<8x1xf32>
    %198 = arith.mulf %182, %190 : vector<8x1xf32>
    %199 = arith.addf %197, %198 : vector<8x1xf32>
    %200 = math.tanh %199 : vector<8x1xf32>
    %201 = arith.mulf %196, %200 : vector<8x1xf32>
    %c0_43 = arith.constant 0 : index
    %c2 = arith.constant 2 : index
    %202 = vector.load %arg7[%c0_43, %c2] : memref<8x8xf32, #tpu.memory_space<vmem>>, vector<8x1xf32>
    tpu.vector_store %arg7[%c0_43, %c2], %201 {strides = array<i32>} : memref<8x8xf32, #tpu.memory_space<vmem>>, vector<8x1xf32>,
    %203 = vector.extract_strided_slice %4 {offsets = [24, 0], sizes = [8, 512], strides = [1, 1]} : vector<64x512xf32> to vector<8x512xf32>
    %cst_44 = arith.constant dense<0.000000e+00> : vector<8x512xf32>
    %204 = tpu.matmul %169, %5, %cst_44 {dimension_numbers = #tpu.dot_dimension_numbers<[1], [0], [0], [1], [0, 0, 1, 1], [], []>} : vector<8x128xf32>, vector<128x512xf32>, vector<8x512xf32> -> vector<8x512xf32>
    %205 = arith.addf %203, %204 : vector<8x512xf32>
    %206 = vector.broadcast %6 : vector<1x512xf32> to vector<8x512xf32>
    %207 = arith.addf %205, %206 : vector<8x512xf32>
    %208 = vector.extract_strided_slice %207 {offsets = [0, 0], sizes = [8, 128], strides = [1, 1]} : vector<8x512xf32> to vector<8x128xf32>
    %209 = arith.negf %208 : vector<8x128xf32>
    %210 = math.exp %209 : vector<8x128xf32>
    %cst_45 = arith.constant 1.000000e+00 : f32
    %211 = vector.broadcast %cst_45 : f32 to vector<8x128xf32>
    %212 = arith.addf %211, %210 : vector<8x128xf32>
    %213 = arith.divf %211, %212 : vector<8x128xf32>
    %214 = vector.extract_strided_slice %207 {offsets = [0, 128], sizes = [8, 128], strides = [1, 1]} : vector<8x512xf32> to vector<8x128xf32>
    %215 = arith.negf %214 : vector<8x128xf32>
    %216 = math.exp %215 : vector<8x128xf32>
    %cst_46 = arith.constant 1.000000e+00 : f32
    %217 = vector.broadcast %cst_46 : f32 to vector<8x128xf32>
    %218 = arith.addf %217, %216 : vector<8x128xf32>
    %219 = arith.divf %217, %218 : vector<8x128xf32>
    %220 = vector.extract_strided_slice %207 {offsets = [0, 256], sizes = [8, 128], strides = [1, 1]} : vector<8x512xf32> to vector<8x128xf32>
    %221 = math.tanh %220 : vector<8x128xf32>
    %222 = vector.extract_strided_slice %207 {offsets = [0, 384], sizes = [8, 128], strides = [1, 1]} : vector<8x512xf32> to vector<8x128xf32>
    %223 = arith.negf %222 : vector<8x128xf32>
    %224 = math.exp %223 : vector<8x128xf32>
    %cst_47 = arith.constant 1.000000e+00 : f32
    %225 = vector.broadcast %cst_47 : f32 to vector<8x128xf32>
    %226 = arith.addf %225, %224 : vector<8x128xf32>
    %227 = arith.divf %225, %226 : vector<8x128xf32>
    %228 = arith.mulf %219, %167 : vector<8x128xf32>
    %229 = arith.mulf %213, %221 : vector<8x128xf32>
    %230 = arith.addf %228, %229 : vector<8x128xf32>
    %231 = math.tanh %230 : vector<8x128xf32>
    %232 = arith.mulf %227, %231 : vector<8x128xf32>
    %cst_48 = arith.constant dense<0.000000e+00> : vector<8x4xf32>
    %233 = tpu.matmul %232, %7, %cst_48 {dimension_numbers = #tpu.dot_dimension_numbers<[1], [0], [0], [1], [0, 0, 1, 1], [], []>} : vector<8x128xf32>, vector<128x4xf32>, vector<8x4xf32> -> vector<8x4xf32>
    %234 = vector.broadcast %201 : vector<8x1xf32> to vector<8x4xf32>
    %235 = vector.broadcast %8 : vector<1x4xf32> to vector<8x4xf32>
    %236 = arith.mulf %234, %235 : vector<8x4xf32>
    %237 = arith.addf %233, %236 : vector<8x4xf32>
    %238 = vector.broadcast %9 : vector<1x4xf32> to vector<8x4xf32>
    %239 = arith.addf %237, %238 : vector<8x4xf32>
    %240 = vector.extract_strided_slice %239 {offsets = [0, 0], sizes = [8, 1], strides = [1, 1]} : vector<8x4xf32> to vector<8x1xf32>
    %241 = arith.negf %240 : vector<8x1xf32>
    %242 = math.exp %241 : vector<8x1xf32>
    %cst_49 = arith.constant 1.000000e+00 : f32
    %243 = vector.broadcast %cst_49 : f32 to vector<8x1xf32>
    %244 = arith.addf %243, %242 : vector<8x1xf32>
    %245 = arith.divf %243, %244 : vector<8x1xf32>
    %246 = vector.extract_strided_slice %239 {offsets = [0, 1], sizes = [8, 1], strides = [1, 1]} : vector<8x4xf32> to vector<8x1xf32>
    %247 = arith.negf %246 : vector<8x1xf32>
    %248 = math.exp %247 : vector<8x1xf32>
    %cst_50 = arith.constant 1.000000e+00 : f32
    %249 = vector.broadcast %cst_50 : f32 to vector<8x1xf32>
    %250 = arith.addf %249, %248 : vector<8x1xf32>
    %251 = arith.divf %249, %250 : vector<8x1xf32>
    %252 = vector.extract_strided_slice %239 {offsets = [0, 2], sizes = [8, 1], strides = [1, 1]} : vector<8x4xf32> to vector<8x1xf32>
    %253 = math.tanh %252 : vector<8x1xf32>
    %254 = vector.extract_strided_slice %239 {offsets = [0, 3], sizes = [8, 1], strides = [1, 1]} : vector<8x4xf32> to vector<8x1xf32>
    %255 = arith.negf %254 : vector<8x1xf32>
    %256 = math.exp %255 : vector<8x1xf32>
    %cst_51 = arith.constant 1.000000e+00 : f32
    %257 = vector.broadcast %cst_51 : f32 to vector<8x1xf32>
    %258 = arith.addf %257, %256 : vector<8x1xf32>
    %259 = arith.divf %257, %258 : vector<8x1xf32>
    %260 = arith.mulf %251, %199 : vector<8x1xf32>
    %261 = arith.mulf %245, %253 : vector<8x1xf32>
    %262 = arith.addf %260, %261 : vector<8x1xf32>
    %263 = math.tanh %262 : vector<8x1xf32>
    %264 = arith.mulf %259, %263 : vector<8x1xf32>
    %c0_52 = arith.constant 0 : index
    %c3 = arith.constant 3 : index
    %265 = vector.load %arg7[%c0_52, %c3] : memref<8x8xf32, #tpu.memory_space<vmem>>, vector<8x1xf32>
    tpu.vector_store %arg7[%c0_52, %c3], %264 {strides = array<i32>} : memref<8x8xf32, #tpu.memory_space<vmem>>, vector<8x1xf32>,
    %266 = vector.extract_strided_slice %4 {offsets = [32, 0], sizes = [8, 512], strides = [1, 1]} : vector<64x512xf32> to vector<8x512xf32>
    %cst_53 = arith.constant dense<0.000000e+00> : vector<8x512xf32>
    %267 = tpu.matmul %232, %5, %cst_53 {dimension_numbers = #tpu.dot_dimension_numbers<[1], [0], [0], [1], [0, 0, 1, 1], [], []>} : vector<8x128xf32>, vector<128x512xf32>, vector<8x512xf32> -> vector<8x512xf32>
    %268 = arith.addf %266, %267 : vector<8x512xf32>
    %269 = vector.broadcast %6 : vector<1x512xf32> to vector<8x512xf32>
    %270 = arith.addf %268, %269 : vector<8x512xf32>
    %271 = vector.extract_strided_slice %270 {offsets = [0, 0], sizes = [8, 128], strides = [1, 1]} : vector<8x512xf32> to vector<8x128xf32>
    %272 = arith.negf %271 : vector<8x128xf32>
    %273 = math.exp %272 : vector<8x128xf32>
    %cst_54 = arith.constant 1.000000e+00 : f32
    %274 = vector.broadcast %cst_54 : f32 to vector<8x128xf32>
    %275 = arith.addf %274, %273 : vector<8x128xf32>
    %276 = arith.divf %274, %275 : vector<8x128xf32>
    %277 = vector.extract_strided_slice %270 {offsets = [0, 128], sizes = [8, 128], strides = [1, 1]} : vector<8x512xf32> to vector<8x128xf32>
    %278 = arith.negf %277 : vector<8x128xf32>
    %279 = math.exp %278 : vector<8x128xf32>
    %cst_55 = arith.constant 1.000000e+00 : f32
    %280 = vector.broadcast %cst_55 : f32 to vector<8x128xf32>
    %281 = arith.addf %280, %279 : vector<8x128xf32>
    %282 = arith.divf %280, %281 : vector<8x128xf32>
    %283 = vector.extract_strided_slice %270 {offsets = [0, 256], sizes = [8, 128], strides = [1, 1]} : vector<8x512xf32> to vector<8x128xf32>
    %284 = math.tanh %283 : vector<8x128xf32>
    %285 = vector.extract_strided_slice %270 {offsets = [0, 384], sizes = [8, 128], strides = [1, 1]} : vector<8x512xf32> to vector<8x128xf32>
    %286 = arith.negf %285 : vector<8x128xf32>
    %287 = math.exp %286 : vector<8x128xf32>
    %cst_56 = arith.constant 1.000000e+00 : f32
    %288 = vector.broadcast %cst_56 : f32 to vector<8x128xf32>
    %289 = arith.addf %288, %287 : vector<8x128xf32>
    %290 = arith.divf %288, %289 : vector<8x128xf32>
    %291 = arith.mulf %282, %230 : vector<8x128xf32>
    %292 = arith.mulf %276, %284 : vector<8x128xf32>
    %293 = arith.addf %291, %292 : vector<8x128xf32>
    %294 = math.tanh %293 : vector<8x128xf32>
    %295 = arith.mulf %290, %294 : vector<8x128xf32>
    %cst_57 = arith.constant dense<0.000000e+00> : vector<8x4xf32>
    %296 = tpu.matmul %295, %7, %cst_57 {dimension_numbers = #tpu.dot_dimension_numbers<[1], [0], [0], [1], [0, 0, 1, 1], [], []>} : vector<8x128xf32>, vector<128x4xf32>, vector<8x4xf32> -> vector<8x4xf32>
    %297 = vector.broadcast %264 : vector<8x1xf32> to vector<8x4xf32>
    %298 = vector.broadcast %8 : vector<1x4xf32> to vector<8x4xf32>
    %299 = arith.mulf %297, %298 : vector<8x4xf32>
    %300 = arith.addf %296, %299 : vector<8x4xf32>
    %301 = vector.broadcast %9 : vector<1x4xf32> to vector<8x4xf32>
    %302 = arith.addf %300, %301 : vector<8x4xf32>
    %303 = vector.extract_strided_slice %302 {offsets = [0, 0], sizes = [8, 1], strides = [1, 1]} : vector<8x4xf32> to vector<8x1xf32>
    %304 = arith.negf %303 : vector<8x1xf32>
    %305 = math.exp %304 : vector<8x1xf32>
    %cst_58 = arith.constant 1.000000e+00 : f32
    %306 = vector.broadcast %cst_58 : f32 to vector<8x1xf32>
    %307 = arith.addf %306, %305 : vector<8x1xf32>
    %308 = arith.divf %306, %307 : vector<8x1xf32>
    %309 = vector.extract_strided_slice %302 {offsets = [0, 1], sizes = [8, 1], strides = [1, 1]} : vector<8x4xf32> to vector<8x1xf32>
    %310 = arith.negf %309 : vector<8x1xf32>
    %311 = math.exp %310 : vector<8x1xf32>
    %cst_59 = arith.constant 1.000000e+00 : f32
    %312 = vector.broadcast %cst_59 : f32 to vector<8x1xf32>
    %313 = arith.addf %312, %311 : vector<8x1xf32>
    %314 = arith.divf %312, %313 : vector<8x1xf32>
    %315 = vector.extract_strided_slice %302 {offsets = [0, 2], sizes = [8, 1], strides = [1, 1]} : vector<8x4xf32> to vector<8x1xf32>
    %316 = math.tanh %315 : vector<8x1xf32>
    %317 = vector.extract_strided_slice %302 {offsets = [0, 3], sizes = [8, 1], strides = [1, 1]} : vector<8x4xf32> to vector<8x1xf32>
    %318 = arith.negf %317 : vector<8x1xf32>
    %319 = math.exp %318 : vector<8x1xf32>
    %cst_60 = arith.constant 1.000000e+00 : f32
    %320 = vector.broadcast %cst_60 : f32 to vector<8x1xf32>
    %321 = arith.addf %320, %319 : vector<8x1xf32>
    %322 = arith.divf %320, %321 : vector<8x1xf32>
    %323 = arith.mulf %314, %262 : vector<8x1xf32>
    %324 = arith.mulf %308, %316 : vector<8x1xf32>
    %325 = arith.addf %323, %324 : vector<8x1xf32>
    %326 = math.tanh %325 : vector<8x1xf32>
    %327 = arith.mulf %322, %326 : vector<8x1xf32>
    %c0_61 = arith.constant 0 : index
    %c4 = arith.constant 4 : index
    %328 = vector.load %arg7[%c0_61, %c4] : memref<8x8xf32, #tpu.memory_space<vmem>>, vector<8x1xf32>
    tpu.vector_store %arg7[%c0_61, %c4], %327 {strides = array<i32>} : memref<8x8xf32, #tpu.memory_space<vmem>>, vector<8x1xf32>,
    %329 = vector.extract_strided_slice %4 {offsets = [40, 0], sizes = [8, 512], strides = [1, 1]} : vector<64x512xf32> to vector<8x512xf32>
    %cst_62 = arith.constant dense<0.000000e+00> : vector<8x512xf32>
    %330 = tpu.matmul %295, %5, %cst_62 {dimension_numbers = #tpu.dot_dimension_numbers<[1], [0], [0], [1], [0, 0, 1, 1], [], []>} : vector<8x128xf32>, vector<128x512xf32>, vector<8x512xf32> -> vector<8x512xf32>
    %331 = arith.addf %329, %330 : vector<8x512xf32>
    %332 = vector.broadcast %6 : vector<1x512xf32> to vector<8x512xf32>
    %333 = arith.addf %331, %332 : vector<8x512xf32>
    %334 = vector.extract_strided_slice %333 {offsets = [0, 0], sizes = [8, 128], strides = [1, 1]} : vector<8x512xf32> to vector<8x128xf32>
    %335 = arith.negf %334 : vector<8x128xf32>
    %336 = math.exp %335 : vector<8x128xf32>
    %cst_63 = arith.constant 1.000000e+00 : f32
    %337 = vector.broadcast %cst_63 : f32 to vector<8x128xf32>
    %338 = arith.addf %337, %336 : vector<8x128xf32>
    %339 = arith.divf %337, %338 : vector<8x128xf32>
    %340 = vector.extract_strided_slice %333 {offsets = [0, 128], sizes = [8, 128], strides = [1, 1]} : vector<8x512xf32> to vector<8x128xf32>
    %341 = arith.negf %340 : vector<8x128xf32>
    %342 = math.exp %341 : vector<8x128xf32>
    %cst_64 = arith.constant 1.000000e+00 : f32
    %343 = vector.broadcast %cst_64 : f32 to vector<8x128xf32>
    %344 = arith.addf %343, %342 : vector<8x128xf32>
    %345 = arith.divf %343, %344 : vector<8x128xf32>
    %346 = vector.extract_strided_slice %333 {offsets = [0, 256], sizes = [8, 128], strides = [1, 1]} : vector<8x512xf32> to vector<8x128xf32>
    %347 = math.tanh %346 : vector<8x128xf32>
    %348 = vector.extract_strided_slice %333 {offsets = [0, 384], sizes = [8, 128], strides = [1, 1]} : vector<8x512xf32> to vector<8x128xf32>
    %349 = arith.negf %348 : vector<8x128xf32>
    %350 = math.exp %349 : vector<8x128xf32>
    %cst_65 = arith.constant 1.000000e+00 : f32
    %351 = vector.broadcast %cst_65 : f32 to vector<8x128xf32>
    %352 = arith.addf %351, %350 : vector<8x128xf32>
    %353 = arith.divf %351, %352 : vector<8x128xf32>
    %354 = arith.mulf %345, %293 : vector<8x128xf32>
    %355 = arith.mulf %339, %347 : vector<8x128xf32>
    %356 = arith.addf %354, %355 : vector<8x128xf32>
    %357 = math.tanh %356 : vector<8x128xf32>
    %358 = arith.mulf %353, %357 : vector<8x128xf32>
    %cst_66 = arith.constant dense<0.000000e+00> : vector<8x4xf32>
    %359 = tpu.matmul %358, %7, %cst_66 {dimension_numbers = #tpu.dot_dimension_numbers<[1], [0], [0], [1], [0, 0, 1, 1], [], []>} : vector<8x128xf32>, vector<128x4xf32>, vector<8x4xf32> -> vector<8x4xf32>
    %360 = vector.broadcast %327 : vector<8x1xf32> to vector<8x4xf32>
    %361 = vector.broadcast %8 : vector<1x4xf32> to vector<8x4xf32>
    %362 = arith.mulf %360, %361 : vector<8x4xf32>
    %363 = arith.addf %359, %362 : vector<8x4xf32>
    %364 = vector.broadcast %9 : vector<1x4xf32> to vector<8x4xf32>
    %365 = arith.addf %363, %364 : vector<8x4xf32>
    %366 = vector.extract_strided_slice %365 {offsets = [0, 0], sizes = [8, 1], strides = [1, 1]} : vector<8x4xf32> to vector<8x1xf32>
    %367 = arith.negf %366 : vector<8x1xf32>
    %368 = math.exp %367 : vector<8x1xf32>
    %cst_67 = arith.constant 1.000000e+00 : f32
    %369 = vector.broadcast %cst_67 : f32 to vector<8x1xf32>
    %370 = arith.addf %369, %368 : vector<8x1xf32>
    %371 = arith.divf %369, %370 : vector<8x1xf32>
    %372 = vector.extract_strided_slice %365 {offsets = [0, 1], sizes = [8, 1], strides = [1, 1]} : vector<8x4xf32> to vector<8x1xf32>
    %373 = arith.negf %372 : vector<8x1xf32>
    %374 = math.exp %373 : vector<8x1xf32>
    %cst_68 = arith.constant 1.000000e+00 : f32
    %375 = vector.broadcast %cst_68 : f32 to vector<8x1xf32>
    %376 = arith.addf %375, %374 : vector<8x1xf32>
    %377 = arith.divf %375, %376 : vector<8x1xf32>
    %378 = vector.extract_strided_slice %365 {offsets = [0, 2], sizes = [8, 1], strides = [1, 1]} : vector<8x4xf32> to vector<8x1xf32>
    %379 = math.tanh %378 : vector<8x1xf32>
    %380 = vector.extract_strided_slice %365 {offsets = [0, 3], sizes = [8, 1], strides = [1, 1]} : vector<8x4xf32> to vector<8x1xf32>
    %381 = arith.negf %380 : vector<8x1xf32>
    %382 = math.exp %381 : vector<8x1xf32>
    %cst_69 = arith.constant 1.000000e+00 : f32
    %383 = vector.broadcast %cst_69 : f32 to vector<8x1xf32>
    %384 = arith.addf %383, %382 : vector<8x1xf32>
    %385 = arith.divf %383, %384 : vector<8x1xf32>
    %386 = arith.mulf %377, %325 : vector<8x1xf32>
    %387 = arith.mulf %371, %379 : vector<8x1xf32>
    %388 = arith.addf %386, %387 : vector<8x1xf32>
    %389 = math.tanh %388 : vector<8x1xf32>
    %390 = arith.mulf %385, %389 : vector<8x1xf32>
    %c0_70 = arith.constant 0 : index
    %c5 = arith.constant 5 : index
    %391 = vector.load %arg7[%c0_70, %c5] : memref<8x8xf32, #tpu.memory_space<vmem>>, vector<8x1xf32>
    tpu.vector_store %arg7[%c0_70, %c5], %390 {strides = array<i32>} : memref<8x8xf32, #tpu.memory_space<vmem>>, vector<8x1xf32>,
    %392 = vector.extract_strided_slice %4 {offsets = [48, 0], sizes = [8, 512], strides = [1, 1]} : vector<64x512xf32> to vector<8x512xf32>
    %cst_71 = arith.constant dense<0.000000e+00> : vector<8x512xf32>
    %393 = tpu.matmul %358, %5, %cst_71 {dimension_numbers = #tpu.dot_dimension_numbers<[1], [0], [0], [1], [0, 0, 1, 1], [], []>} : vector<8x128xf32>, vector<128x512xf32>, vector<8x512xf32> -> vector<8x512xf32>
    %394 = arith.addf %392, %393 : vector<8x512xf32>
    %395 = vector.broadcast %6 : vector<1x512xf32> to vector<8x512xf32>
    %396 = arith.addf %394, %395 : vector<8x512xf32>
    %397 = vector.extract_strided_slice %396 {offsets = [0, 0], sizes = [8, 128], strides = [1, 1]} : vector<8x512xf32> to vector<8x128xf32>
    %398 = arith.negf %397 : vector<8x128xf32>
    %399 = math.exp %398 : vector<8x128xf32>
    %cst_72 = arith.constant 1.000000e+00 : f32
    %400 = vector.broadcast %cst_72 : f32 to vector<8x128xf32>
    %401 = arith.addf %400, %399 : vector<8x128xf32>
    %402 = arith.divf %400, %401 : vector<8x128xf32>
    %403 = vector.extract_strided_slice %396 {offsets = [0, 128], sizes = [8, 128], strides = [1, 1]} : vector<8x512xf32> to vector<8x128xf32>
    %404 = arith.negf %403 : vector<8x128xf32>
    %405 = math.exp %404 : vector<8x128xf32>
    %cst_73 = arith.constant 1.000000e+00 : f32
    %406 = vector.broadcast %cst_73 : f32 to vector<8x128xf32>
    %407 = arith.addf %406, %405 : vector<8x128xf32>
    %408 = arith.divf %406, %407 : vector<8x128xf32>
    %409 = vector.extract_strided_slice %396 {offsets = [0, 256], sizes = [8, 128], strides = [1, 1]} : vector<8x512xf32> to vector<8x128xf32>
    %410 = math.tanh %409 : vector<8x128xf32>
    %411 = vector.extract_strided_slice %396 {offsets = [0, 384], sizes = [8, 128], strides = [1, 1]} : vector<8x512xf32> to vector<8x128xf32>
    %412 = arith.negf %411 : vector<8x128xf32>
    %413 = math.exp %412 : vector<8x128xf32>
    %cst_74 = arith.constant 1.000000e+00 : f32
    %414 = vector.broadcast %cst_74 : f32 to vector<8x128xf32>
    %415 = arith.addf %414, %413 : vector<8x128xf32>
    %416 = arith.divf %414, %415 : vector<8x128xf32>
    %417 = arith.mulf %408, %356 : vector<8x128xf32>
    %418 = arith.mulf %402, %410 : vector<8x128xf32>
    %419 = arith.addf %417, %418 : vector<8x128xf32>
    %420 = math.tanh %419 : vector<8x128xf32>
    %421 = arith.mulf %416, %420 : vector<8x128xf32>
    %cst_75 = arith.constant dense<0.000000e+00> : vector<8x4xf32>
    %422 = tpu.matmul %421, %7, %cst_75 {dimension_numbers = #tpu.dot_dimension_numbers<[1], [0], [0], [1], [0, 0, 1, 1], [], []>} : vector<8x128xf32>, vector<128x4xf32>, vector<8x4xf32> -> vector<8x4xf32>
    %423 = vector.broadcast %390 : vector<8x1xf32> to vector<8x4xf32>
    %424 = vector.broadcast %8 : vector<1x4xf32> to vector<8x4xf32>
    %425 = arith.mulf %423, %424 : vector<8x4xf32>
    %426 = arith.addf %422, %425 : vector<8x4xf32>
    %427 = vector.broadcast %9 : vector<1x4xf32> to vector<8x4xf32>
    %428 = arith.addf %426, %427 : vector<8x4xf32>
    %429 = vector.extract_strided_slice %428 {offsets = [0, 0], sizes = [8, 1], strides = [1, 1]} : vector<8x4xf32> to vector<8x1xf32>
    %430 = arith.negf %429 : vector<8x1xf32>
    %431 = math.exp %430 : vector<8x1xf32>
    %cst_76 = arith.constant 1.000000e+00 : f32
    %432 = vector.broadcast %cst_76 : f32 to vector<8x1xf32>
    %433 = arith.addf %432, %431 : vector<8x1xf32>
    %434 = arith.divf %432, %433 : vector<8x1xf32>
    %435 = vector.extract_strided_slice %428 {offsets = [0, 1], sizes = [8, 1], strides = [1, 1]} : vector<8x4xf32> to vector<8x1xf32>
    %436 = arith.negf %435 : vector<8x1xf32>
    %437 = math.exp %436 : vector<8x1xf32>
    %cst_77 = arith.constant 1.000000e+00 : f32
    %438 = vector.broadcast %cst_77 : f32 to vector<8x1xf32>
    %439 = arith.addf %438, %437 : vector<8x1xf32>
    %440 = arith.divf %438, %439 : vector<8x1xf32>
    %441 = vector.extract_strided_slice %428 {offsets = [0, 2], sizes = [8, 1], strides = [1, 1]} : vector<8x4xf32> to vector<8x1xf32>
    %442 = math.tanh %441 : vector<8x1xf32>
    %443 = vector.extract_strided_slice %428 {offsets = [0, 3], sizes = [8, 1], strides = [1, 1]} : vector<8x4xf32> to vector<8x1xf32>
    %444 = arith.negf %443 : vector<8x1xf32>
    %445 = math.exp %444 : vector<8x1xf32>
    %cst_78 = arith.constant 1.000000e+00 : f32
    %446 = vector.broadcast %cst_78 : f32 to vector<8x1xf32>
    %447 = arith.addf %446, %445 : vector<8x1xf32>
    %448 = arith.divf %446, %447 : vector<8x1xf32>
    %449 = arith.mulf %440, %388 : vector<8x1xf32>
    %450 = arith.mulf %434, %442 : vector<8x1xf32>
    %451 = arith.addf %449, %450 : vector<8x1xf32>
    %452 = math.tanh %451 : vector<8x1xf32>
    %453 = arith.mulf %448, %452 : vector<8x1xf32>
    %c0_79 = arith.constant 0 : index
    %c6 = arith.constant 6 : index
    %454 = vector.load %arg7[%c0_79, %c6] : memref<8x8xf32, #tpu.memory_space<vmem>>, vector<8x1xf32>
    tpu.vector_store %arg7[%c0_79, %c6], %453 {strides = array<i32>} : memref<8x8xf32, #tpu.memory_space<vmem>>, vector<8x1xf32>,
    %455 = vector.extract_strided_slice %4 {offsets = [56, 0], sizes = [8, 512], strides = [1, 1]} : vector<64x512xf32> to vector<8x512xf32>
    %cst_80 = arith.constant dense<0.000000e+00> : vector<8x512xf32>
    %456 = tpu.matmul %421, %5, %cst_80 {dimension_numbers = #tpu.dot_dimension_numbers<[1], [0], [0], [1], [0, 0, 1, 1], [], []>} : vector<8x128xf32>, vector<128x512xf32>, vector<8x512xf32> -> vector<8x512xf32>
    %457 = arith.addf %455, %456 : vector<8x512xf32>
    %458 = vector.broadcast %6 : vector<1x512xf32> to vector<8x512xf32>
    %459 = arith.addf %457, %458 : vector<8x512xf32>
    %460 = vector.extract_strided_slice %459 {offsets = [0, 0], sizes = [8, 128], strides = [1, 1]} : vector<8x512xf32> to vector<8x128xf32>
    %461 = arith.negf %460 : vector<8x128xf32>
    %462 = math.exp %461 : vector<8x128xf32>
    %cst_81 = arith.constant 1.000000e+00 : f32
    %463 = vector.broadcast %cst_81 : f32 to vector<8x128xf32>
    %464 = arith.addf %463, %462 : vector<8x128xf32>
    %465 = arith.divf %463, %464 : vector<8x128xf32>
    %466 = vector.extract_strided_slice %459 {offsets = [0, 128], sizes = [8, 128], strides = [1, 1]} : vector<8x512xf32> to vector<8x128xf32>
    %467 = arith.negf %466 : vector<8x128xf32>
    %468 = math.exp %467 : vector<8x128xf32>
    %cst_82 = arith.constant 1.000000e+00 : f32
    %469 = vector.broadcast %cst_82 : f32 to vector<8x128xf32>
    %470 = arith.addf %469, %468 : vector<8x128xf32>
    %471 = arith.divf %469, %470 : vector<8x128xf32>
    %472 = vector.extract_strided_slice %459 {offsets = [0, 256], sizes = [8, 128], strides = [1, 1]} : vector<8x512xf32> to vector<8x128xf32>
    %473 = math.tanh %472 : vector<8x128xf32>
    %474 = vector.extract_strided_slice %459 {offsets = [0, 384], sizes = [8, 128], strides = [1, 1]} : vector<8x512xf32> to vector<8x128xf32>
    %475 = arith.negf %474 : vector<8x128xf32>
    %476 = math.exp %475 : vector<8x128xf32>
    %cst_83 = arith.constant 1.000000e+00 : f32
    %477 = vector.broadcast %cst_83 : f32 to vector<8x128xf32>
    %478 = arith.addf %477, %476 : vector<8x128xf32>
    %479 = arith.divf %477, %478 : vector<8x128xf32>
    %480 = arith.mulf %471, %419 : vector<8x128xf32>
    %481 = arith.mulf %465, %473 : vector<8x128xf32>
    %482 = arith.addf %480, %481 : vector<8x128xf32>
    %483 = math.tanh %482 : vector<8x128xf32>
    %484 = arith.mulf %479, %483 : vector<8x128xf32>
    %cst_84 = arith.constant dense<0.000000e+00> : vector<8x4xf32>
    %485 = tpu.matmul %484, %7, %cst_84 {dimension_numbers = #tpu.dot_dimension_numbers<[1], [0], [0], [1], [0, 0, 1, 1], [], []>} : vector<8x128xf32>, vector<128x4xf32>, vector<8x4xf32> -> vector<8x4xf32>
    %486 = vector.broadcast %453 : vector<8x1xf32> to vector<8x4xf32>
    %487 = vector.broadcast %8 : vector<1x4xf32> to vector<8x4xf32>
    %488 = arith.mulf %486, %487 : vector<8x4xf32>
    %489 = arith.addf %485, %488 : vector<8x4xf32>
    %490 = vector.broadcast %9 : vector<1x4xf32> to vector<8x4xf32>
    %491 = arith.addf %489, %490 : vector<8x4xf32>
    %492 = vector.extract_strided_slice %491 {offsets = [0, 0], sizes = [8, 1], strides = [1, 1]} : vector<8x4xf32> to vector<8x1xf32>
    %493 = arith.negf %492 : vector<8x1xf32>
    %494 = math.exp %493 : vector<8x1xf32>
    %cst_85 = arith.constant 1.000000e+00 : f32
    %495 = vector.broadcast %cst_85 : f32 to vector<8x1xf32>
    %496 = arith.addf %495, %494 : vector<8x1xf32>
    %497 = arith.divf %495, %496 : vector<8x1xf32>
    %498 = vector.extract_strided_slice %491 {offsets = [0, 1], sizes = [8, 1], strides = [1, 1]} : vector<8x4xf32> to vector<8x1xf32>
    %499 = arith.negf %498 : vector<8x1xf32>
    %500 = math.exp %499 : vector<8x1xf32>
    %cst_86 = arith.constant 1.000000e+00 : f32
    %501 = vector.broadcast %cst_86 : f32 to vector<8x1xf32>
    %502 = arith.addf %501, %500 : vector<8x1xf32>
    %503 = arith.divf %501, %502 : vector<8x1xf32>
    %504 = vector.extract_strided_slice %491 {offsets = [0, 2], sizes = [8, 1], strides = [1, 1]} : vector<8x4xf32> to vector<8x1xf32>
    %505 = math.tanh %504 : vector<8x1xf32>
    %506 = vector.extract_strided_slice %491 {offsets = [0, 3], sizes = [8, 1], strides = [1, 1]} : vector<8x4xf32> to vector<8x1xf32>
    %507 = arith.negf %506 : vector<8x1xf32>
    %508 = math.exp %507 : vector<8x1xf32>
    %cst_87 = arith.constant 1.000000e+00 : f32
    %509 = vector.broadcast %cst_87 : f32 to vector<8x1xf32>
    %510 = arith.addf %509, %508 : vector<8x1xf32>
    %511 = arith.divf %509, %510 : vector<8x1xf32>
    %512 = arith.mulf %503, %451 : vector<8x1xf32>
    %513 = arith.mulf %497, %505 : vector<8x1xf32>
    %514 = arith.addf %512, %513 : vector<8x1xf32>
    %515 = math.tanh %514 : vector<8x1xf32>
    %516 = arith.mulf %511, %515 : vector<8x1xf32>
    %c0_88 = arith.constant 0 : index
    %c7 = arith.constant 7 : index
    %517 = vector.load %arg7[%c0_88, %c7] : memref<8x8xf32, #tpu.memory_space<vmem>>, vector<8x1xf32>
    tpu.vector_store %arg7[%c0_88, %c7], %516 {strides = array<i32>} : memref<8x8xf32, #tpu.memory_space<vmem>>, vector<8x1xf32>,
    return
  }
}

</mosaic_0001>

<llo_original>
// kernel: tpu_custom_call.1
$region0: #{tpu_custom_call.1}
  #allocation0 [shape = 'u32[]', space=smem, size = 0x4, offset = 0x4, fixed_abs, tag = 'smem constant byte address 0x4 - core index']
  #allocation1 [shape = 'u32[144,128]{1,0:T(1,128)}', space=vmem, size = 0x12000, scoped, tag = 'internal scratch']
  %s0 = inlined_call_operand.vmem [shape: f32[64,1], index: 0, kind: input, shape index: {}]
  %s1 = inlined_call_operand.vmem [shape: f32[1,512], index: 1, kind: input, shape index: {}]
  %s2 = inlined_call_operand.hbm [shape: f32[128,512], index: 2, kind: input, shape index: {}]
  %s3 = inlined_call_operand.vmem [shape: f32[1,512], index: 3, kind: input, shape index: {}]
  %s4 = inlined_call_operand.vmem [shape: f32[128,4], index: 4, kind: input, shape index: {}]
  %s5 = inlined_call_operand.vmem [shape: f32[1,4], index: 5, kind: input, shape index: {}]
  %s6 = inlined_call_operand.vmem [shape: f32[1,4], index: 6, kind: input, shape index: {}]
  %s7 = inlined_call_operand.hbm [shape: f32[8,8], index: 7, kind: output, shape index: {}]
  %s8 = sld [smem:[#allocation0]]
  $region42: #{tpu_custom_call.1} parent=0
    _
  %s10 = ssub.s32 1, %s8
  %s11 = scalar_select 0, %s10, %s8
  $region1: #{tpu_custom_call.1} parent=0
    #allocation2 [shape = 'u8[262144]{0}', space=vmem, size = 0x40000, scoped, tag = 'input window, operand 2, single buffered']
    #allocation3 [shape = 's32[1]{0}', space=sflag, size = 0x4, scoped, tag = 'scoped memory for tpu_custom_call.1']
    #allocation4 [shape = 's32[1]{0}', space=sflag, size = 0x4, scoped, tag = 'scoped memory for tpu_custom_call.1']
    #allocation5 [shape = 'u8[4096]{0}', space=vmem, size = 0x1000, scoped, tag = 'output window, operand 0, single buffered']
    %12 = vsyncpa [#allocation3], 0
    %13 = vsyncpa [#allocation4], 0
    // Predicated region
    $region2: #{tpu_custom_call.1} parent=1 // pred_check
      _
    $region3: #{tpu_custom_call.1} parent=1 // pred_check_branch
      %15 = sbr.rel (0) target = $region5
    $region4: #{tpu_custom_call.1} parent=1 // pred_region
      _
    $region5: #{tpu_custom_call.1} parent=1 // pred_fallthru
      _
    // Predicated region
    $region6: #{tpu_custom_call.1} parent=1 // pred_check
      _
    $region7: #{tpu_custom_call.1} parent=1 // pred_check_branch
      %17 = sbr.rel (0) target = $region9
    $region8: #{tpu_custom_call.1} parent=1 // pred_region
      _
    $region9: #{tpu_custom_call.1} parent=1 // pred_fallthru
      _
    // Predicated region
    $region10: #{tpu_custom_call.1} parent=1 // pred_check
      _
    $region11: #{tpu_custom_call.1} parent=1 // pred_check_branch
      %19 = sbr.rel (0) target = $region13
    $region12: #{tpu_custom_call.1} parent=1 // pred_region
      %s21 = ssub.s32 8192, 8192
      %22 = vsyncadd [#allocation3], %s21
      %s23 = sshll.u32 [#allocation2], 4
      %s24 = int_to_ptr.vmem [resolvable:$true] %s23
      %29 = dma.hbm_to_vmem [thread:$0]  %s2, 8192, %s24, [#allocation3], 512, 512, 32
    $region13: #{tpu_custom_call.1} parent=1 // pred_fallthru
      _
    // Predicated region
    $region14: #{tpu_custom_call.1} parent=1 // pred_check
      _
    $region15: #{tpu_custom_call.1} parent=1 // pred_check_branch
      %31 = sbr.rel (0) target = $region17
    $region16: #{tpu_custom_call.1} parent=1 // pred_region
      _
    $region17: #{tpu_custom_call.1} parent=1 // pred_fallthru
      _
    // Predicated region
    $region18: #{tpu_custom_call.1} parent=1 // pred_check
      _
    $region19: #{tpu_custom_call.1} parent=1 // pred_check_branch
      %33 = sbr.rel (0) target = $region21
    $region20: #{tpu_custom_call.1} parent=1 // pred_region
      _
    $region21: #{tpu_custom_call.1} parent=1 // pred_fallthru
      _
    // Predicated region
    $region22: #{tpu_custom_call.1} parent=1 // pred_check
      _
    $region23: #{tpu_custom_call.1} parent=1 // pred_check_branch
      %35 = sbr.rel (0) target = $region25
    $region24: #{tpu_custom_call.1} parent=1 // pred_region
      _
    $region25: #{tpu_custom_call.1} parent=1 // pred_fallthru
      _
    // Predicated region
    $region26: #{tpu_custom_call.1} parent=1 // pred_check
      _
    $region27: #{tpu_custom_call.1} parent=1 // pred_check_branch
      %37 = sbr.rel (0) target = $region29
    $region28: #{tpu_custom_call.1} parent=1 // pred_region
      _
    $region29: #{tpu_custom_call.1} parent=1 // pred_fallthru
      _
    // Predicated region
    $region30: #{tpu_custom_call.1} parent=1 // pred_check
      _
    $region31: #{tpu_custom_call.1} parent=1 // pred_check_branch
      %39 = sbr.rel (0) target = $region33
    $region32: #{tpu_custom_call.1} parent=1 // pred_region
      %40 = dma.done [#allocation3], 8192
    $region33: #{tpu_custom_call.1} parent=1 // pred_fallthru
      _
    %v41 = vld [vmem:[%s0] sm:$0xff]
    %v42 = vld [vmem:[%s0 + $0x8] sm:$0xff]
    %v43 = vld [vmem:[%s0 + $0x10] sm:$0xff]
    %v44 = vld [vmem:[%s0 + $0x18] sm:$0xff]
    %v45 = vld [vmem:[%s0 + $0x20] sm:$0xff]
    %v46 = vld [vmem:[%s0 + $0x28] sm:$0xff]
    %v47 = vld [vmem:[%s0 + $0x30] sm:$0xff]
    %v48 = vld [vmem:[%s0 + $0x38] sm:$0xff]
    %v49 = vld [vmem:[%s1] sm:$0xf]
    %51 = vset.pattern.permute.xlu0 0
    %52 = vperm.xlu0 %51, %v41
    %v53 = vpop.permute.xlu0 %52
    %56 = vset.pattern.permute.xlu0 0
    %57 = vperm.xlu0 %56, %v42
    %v58 = vpop.permute.xlu0 %57
    %61 = vset.pattern.permute.xlu0 0
    %62 = vperm.xlu0 %61, %v43
    %v63 = vpop.permute.xlu0 %62
    %66 = vset.pattern.permute.xlu0 0
    %67 = vperm.xlu0 %66, %v44
    %v68 = vpop.permute.xlu0 %67
    %71 = vset.pattern.permute.xlu0 0
    %72 = vperm.xlu0 %71, %v45
    %v73 = vpop.permute.xlu0 %72
    %76 = vset.pattern.permute.xlu0 0
    %77 = vperm.xlu0 %76, %v46
    %v78 = vpop.permute.xlu0 %77
    %81 = vset.pattern.permute.xlu0 0
    %82 = vperm.xlu0 %81, %v47
    %v83 = vpop.permute.xlu0 %82
    %86 = vset.pattern.permute.xlu0 0
    %87 = vperm.xlu0 %86, %v48
    %v88 = vpop.permute.xlu0 %87
    %v91 = vlaneseq
    %v92 = vshrl.u32 %v91, 7
    %v93 = vsub.s32 0, %v92
    %v94 = vrot.slane %v49, %v93
    %v95 = vlaneseq
    %v96 = vshrl.u32 %v95, 7
    %v97 = vsub.s32 1, %v96
    %v98 = vrot.slane %v49, %v97
    %v99 = vlaneseq
    %v100 = vshrl.u32 %v99, 7
    %v101 = vsub.s32 2, %v100
    %v102 = vrot.slane %v49, %v101
    %v103 = vlaneseq
    %v104 = vshrl.u32 %v103, 7
    %v105 = vsub.s32 3, %v104
    %v106 = vrot.slane %v49, %v105
    %v111 = vmul.f32 %v53, %v94
    %v112 = vmul.f32 %v53, %v98
    %v113 = vmul.f32 %v53, %v102
    %v114 = vmul.f32 %v53, %v106
    %v115 = vmul.f32 %v58, %v94
    %v116 = vmul.f32 %v58, %v98
    %v117 = vmul.f32 %v58, %v102
    %v118 = vmul.f32 %v58, %v106
    %v119 = vmul.f32 %v63, %v94
    %v120 = vmul.f32 %v63, %v98
    %v121 = vmul.f32 %v63, %v102
    %v122 = vmul.f32 %v63, %v106
    %v123 = vmul.f32 %v68, %v94
    %v124 = vmul.f32 %v68, %v98
    %v125 = vmul.f32 %v68, %v102
    %v126 = vmul.f32 %v68, %v106
    %v127 = vmul.f32 %v73, %v94
    %v128 = vmul.f32 %v73, %v98
    %v129 = vmul.f32 %v73, %v102
    %v130 = vmul.f32 %v73, %v106
    %v131 = vmul.f32 %v78, %v94
    %v132 = vmul.f32 %v78, %v98
    %v133 = vmul.f32 %v78, %v102
    %v134 = vmul.f32 %v78, %v106
    %v135 = vmul.f32 %v83, %v94
    %v136 = vmul.f32 %v83, %v98
    %v137 = vmul.f32 %v83, %v102
    %v138 = vmul.f32 %v83, %v106
    %v139 = vmul.f32 %v88, %v94
    %v140 = vmul.f32 %v88, %v98
    %v141 = vmul.f32 %v88, %v102
    %v142 = vmul.f32 %v88, %v106
    %v143 = vld [vmem:[#allocation2] sm:$0xff]
    %v144 = vld [vmem:[#allocation2 + $0x8] sm:$0xff]
    %v145 = vld [vmem:[#allocation2 + $0x10] sm:$0xff]
    %v146 = vld [vmem:[#allocation2 + $0x18] sm:$0xff]
    %v147 = vld [vmem:[#allocation2 + $0x20] sm:$0xff]
    %v148 = vld [vmem:[#allocation2 + $0x28] sm:$0xff]
    %v149 = vld [vmem:[#allocation2 + $0x30] sm:$0xff]
    %v150 = vld [vmem:[#allocation2 + $0x38] sm:$0xff]
    %v151 = vld [vmem:[#allocation2 + $0x40] sm:$0xff]
    %v152 = vld [vmem:[#allocation2 + $0x48] sm:$0xff]
    %v153 = vld [vmem:[#allocation2 + $0x50] sm:$0xff]
    %v154 = vld [vmem:[#allocation2 + $0x58] sm:$0xff]
    %v155 = vld [vmem:[#allocation2 + $0x60] sm:$0xff]
    %v156 = vld [vmem:[#allocation2 + $0x68] sm:$0xff]
    %v157 = vld [vmem:[#allocation2 + $0x70] sm:$0xff]
    %v158 = vld [vmem:[#allocation2 + $0x78] sm:$0xff]
    %v159 = vld [vmem:[#allocation2 + $0x80] sm:$0xff]
    %v160 = vld [vmem:[#allocation2 + $0x88] sm:$0xff]
    %v161 = vld [vmem:[#allocation2 + $0x90] sm:$0xff]
    %v162 = vld [vmem:[#allocation2 + $0x98] sm:$0xff]
    %v163 = vld [vmem:[#allocation2 + $0xa0] sm:$0xff]
    %v164 = vld [vmem:[#allocation2 + $0xa8] sm:$0xff]
    %v165 = vld [vmem:[#allocation2 + $0xb0] sm:$0xff]
    %v166 = vld [vmem:[#allocation2 + $0xb8] sm:$0xff]
    %v167 = vld [vmem:[#allocation2 + $0xc0] sm:$0xff]
    %v168 = vld [vmem:[#allocation2 + $0xc8] sm:$0xff]
    %v169 = vld [vmem:[#allocation2 + $0xd0] sm:$0xff]
    %v170 = vld [vmem:[#allocation2 + $0xd8] sm:$0xff]
    %v171 = vld [vmem:[#allocation2 + $0xe0] sm:$0xff]
    %v172 = vld [vmem:[#allocation2 + $0xe8] sm:$0xff]
    %v173 = vld [vmem:[#allocation2 + $0xf0] sm:$0xff]
    %v174 = vld [vmem:[#allocation2 + $0xf8] sm:$0xff]
    %v175 = vld [vmem:[#allocation2 + $0x100] sm:$0xff]
    %v176 = vld [vmem:[#allocation2 + $0x108] sm:$0xff]
    %v177 = vld [vmem:[#allocation2 + $0x110] sm:$0xff]
    %v178 = vld [vmem:[#allocation2 + $0x118] sm:$0xff]
    %v179 = vld [vmem:[#allocation2 + $0x120] sm:$0xff]
    %v180 = vld [vmem:[#allocation2 + $0x128] sm:$0xff]
    %v181 = vld [vmem:[#allocation2 + $0x130] sm:$0xff]
    %v182 = vld [vmem:[#allocation2 + $0x138] sm:$0xff]
    %v183 = vld [vmem:[#allocation2 + $0x140] sm:$0xff]
    %v184 = vld [vmem:[#allocation2 + $0x148] sm:$0xff]
    %v185 = vld [vmem:[#allocation2 + $0x150] sm:$0xff]
    %v186 = vld [vmem:[#allocation2 + $0x158] sm:$0xff]
    %v187 = vld [vmem:[#allocation2 + $0x160] sm:$0xff]
    %v188 = vld [vmem:[#allocation2 + $0x168] sm:$0xff]
    %v189 = vld [vmem:[#allocation2 + $0x170] sm:$0xff]
    %v190 = vld [vmem:[#allocation2 + $0x178] sm:$0xff]
    %v191 = vld [vmem:[#allocation2 + $0x180] sm:$0xff]
    %v192 = vld [vmem:[#allocation2 + $0x188] sm:$0xff]
    %v193 = vld [vmem:[#allocation2 + $0x190] sm:$0xff]
    %v194 = vld [vmem:[#allocation2 + $0x198] sm:$0xff]
    %v195 = vld [vmem:[#allocation2 + $0x1a0] sm:$0xff]
    %v196 = vld [vmem:[#allocation2 + $0x1a8] sm:$0xff]
    %v197 = vld [vmem:[#allocation2 + $0x1b0] sm:$0xff]
    %v198 = vld [vmem:[#allocation2 + $0x1b8] sm:$0xff]
    %v199 = vld [vmem:[#allocation2 + $0x1c0] sm:$0xff]
    %v200 = vld [vmem:[#allocation2 + $0x1c8] sm:$0xff]
    %v201 = vld [vmem:[#allocation2 + $0x1d0] sm:$0xff]
    %v202 = vld [vmem:[#allocation2 + $0x1d8] sm:$0xff]
    %v203 = vld [vmem:[#allocation2 + $0x1e0] sm:$0xff]
    %v204 = vld [vmem:[#allocation2 + $0x1e8] sm:$0xff]
    %v205 = vld [vmem:[#allocation2 + $0x1f0] sm:$0xff]
    %v206 = vld [vmem:[#allocation2 + $0x1f8] sm:$0xff]
    %v207 = vld [vmem:[%s3] sm:$0xf]
    %v208 = vld [vmem:[%s4] sm:$0xff]
    %v209 = vld [vmem:[%s4 + $0x8] sm:$0xff]
    %v210 = vld [vmem:[%s4 + $0x10] sm:$0xff]
    %v211 = vld [vmem:[%s4 + $0x18] sm:$0xff]
    %v212 = vld [vmem:[%s4 + $0x20] sm:$0xff]
    %v213 = vld [vmem:[%s4 + $0x28] sm:$0xff]
    %v214 = vld [vmem:[%s4 + $0x30] sm:$0xff]
    %v215 = vld [vmem:[%s4 + $0x38] sm:$0xff]
    %v216 = vld [vmem:[%s4 + $0x40] sm:$0xff]
    %v217 = vld [vmem:[%s4 + $0x48] sm:$0xff]
    %v218 = vld [vmem:[%s4 + $0x50] sm:$0xff]
    %v219 = vld [vmem:[%s4 + $0x58] sm:$0xff]
    %v220 = vld [vmem:[%s4 + $0x60] sm:$0xff]
    %v221 = vld [vmem:[%s4 + $0x68] sm:$0xff]
    %v222 = vld [vmem:[%s4 + $0x70] sm:$0xff]
    %v223 = vld [vmem:[%s4 + $0x78] sm:$0xff]
    %v224 = vld [vmem:[%s5] sm:$0x1]
    %v225 = vld [vmem:[%s6] sm:$0x1]
    %226 = vmatprep.subr.mxu0 %v144
    %227 = vmatpush1.msra.mxu0 %v143
    %228 = vmatprep.subr.mxu0 %v148
    %229 = vmatpush1.msra.mxu0 %v147
    %230 = vmatprep.subr.mxu0 %v152
    %231 = vmatpush1.msra.mxu0 %v151
    %232 = vmatprep.subr.mxu0 %v156
    %233 = vmatpush1.msra.mxu0 %v155
    %234 = vmatprep.subr.mxu0 %v160
    %235 = vmatpush1.msra.mxu0 %v159
    %236 = vmatprep.subr.mxu0 %v164
    %237 = vmatpush1.msra.mxu0 %v163
    %238 = vmatprep.subr.mxu0 %v168
    %239 = vmatpush1.msra.mxu0 %v167
    %240 = vmatprep.subr.mxu0 %v172
    %241 = vmatpush1.msra.mxu0 %v171
    %242 = vmatprep.subr.mxu0 %v176
    %243 = vmatpush1.msra.mxu0 %v175
    %244 = vmatprep.subr.mxu0 %v180
    %245 = vmatpush1.msra.mxu0 %v179
    %246 = vmatprep.subr.mxu0 %v184
    %247 = vmatpush1.msra.mxu0 %v183
    %248 = vmatprep.subr.mxu0 %v188
    %249 = vmatpush1.msra.mxu0 %v187
    %250 = vmatprep.subr.mxu0 %v192
    %251 = vmatpush1.msra.mxu0 %v191
    %252 = vmatprep.subr.mxu0 %v196
    %253 = vmatpush1.msra.mxu0 %v195
    %254 = vmatprep.subr.mxu0 %v200
    %255 = vmatpush1.msra.mxu0 %v199
    %256 = vmatprep.subr.mxu0 %v204
    %257 = vmatpush1.msra.mxu0 %v203
    %258 = vmatprep.subr.mxu0 0.0
    %259 = vmatpush1.msra.mxu0 0.0
    %260 = vmatprep.subr.mxu0 0.0
    %261 = vmatpush1.msra.mxu0 0.0
    %262 = vmatprep.subr.mxu0 0.0
    %263 = vmatpush1.msra.mxu0 0.0
    %264 = vmatprep.subr.mxu0 0.0
    %265 = vmatpush1.msra.mxu0 0.0
    %266 = vmatprep.subr.mxu0 0.0
    %267 = vmatpush1.msra.mxu0 0.0
    %268 = vmatprep.subr.mxu0 0.0
    %269 = vmatpush1.msra.mxu0 0.0
    %270 = vmatprep.subr.mxu0 0.0
    %271 = vmatpush1.msra.mxu0 0.0
    %272 = vmatprep.subr.mxu0 0.0
    %273 = vmatpush1.msra.mxu0 0.0
    %274 = vmatprep.subr.mxu0 0.0
    %275 = vmatpush1.msra.mxu0 0.0
    %276 = vmatprep.subr.mxu0 0.0
    %277 = vmatpush1.msra.mxu0 0.0
    %278 = vmatprep.subr.mxu0 0.0
    %279 = vmatpush1.msra.mxu0 0.0
    %280 = vmatprep.subr.mxu0 0.0
    %281 = vmatpush1.msra.mxu0 0.0
    %282 = vmatprep.subr.mxu0 0.0
    %283 = vmatpush1.msra.mxu0 0.0
    %284 = vmatprep.subr.mxu0 0.0
    %285 = vmatpush1.msra.mxu0 0.0
    %286 = vmatprep.subr.mxu0 0.0
    %287 = vmatpush1.msra.mxu0 0.0
    %288 = vmatprep.subr.mxu0 0.0
    %289 = vmatpush1.msra.mxu0 0.0
    %290 = vmatprep.mubr.f32.mxu0 0.0
    %291 = vmatmul.mubr.f32.gmra.mrb[0].mxu0 0.0
    %v292 = vpop.f32.mrb[0].mxu0
    %v293 = vadd.f32 0.0, %v292
    %v294 = vpop.f32.mrb[0].mxu0
    %v295 = vadd.f32 0.0, %v294
    %296 = vdwg.mxu0
    %297 = vmatprep.subr.mxu0 %v146
    %298 = vmatpush1.msra.mxu0 %v145
    %299 = vmatprep.subr.mxu0 %v150
    %300 = vmatpush1.msra.mxu0 %v149
    %301 = vmatprep.subr.mxu0 %v154
    %302 = vmatpush1.msra.mxu0 %v153
    %303 = vmatprep.subr.mxu0 %v158
    %304 = vmatpush1.msra.mxu0 %v157
    %305 = vmatprep.subr.mxu0 %v162
    %306 = vmatpush1.msra.mxu0 %v161
    %307 = vmatprep.subr.mxu0 %v166
    %308 = vmatpush1.msra.mxu0 %v165
    %309 = vmatprep.subr.mxu0 %v170
    %310 = vmatpush1.msra.mxu0 %v169
    %311 = vmatprep.subr.mxu0 %v174
    %312 = vmatpush1.msra.mxu0 %v173
    %313 = vmatprep.subr.mxu0 %v178
    %314 = vmatpush1.msra.mxu0 %v177
    %315 = vmatprep.subr.mxu0 %v182
    %316 = vmatpush1.msra.mxu0 %v181
    %317 = vmatprep.subr.mxu0 %v186
    %318 = vmatpush1.msra.mxu0 %v185
    %319 = vmatprep.subr.mxu0 %v190
    %320 = vmatpush1.msra.mxu0 %v189
    %321 = vmatprep.subr.mxu0 %v194
    %322 = vmatpush1.msra.mxu0 %v193
    %323 = vmatprep.subr.mxu0 %v198
    %324 = vmatpush1.msra.mxu0 %v197
    %325 = vmatprep.subr.mxu0 %v202
    %326 = vmatpush1.msra.mxu0 %v201
    %327 = vmatprep.subr.mxu0 %v206
    %328 = vmatpush1.msra.mxu0 %v205
    %329 = vmatprep.subr.mxu0 0.0
    %330 = vmatpush1.msra.mxu0 0.0
    %331 = vmatprep.subr.mxu0 0.0
    %332 = vmatpush1.msra.mxu0 0.0
    %333 = vmatprep.subr.mxu0 0.0
    %334 = vmatpush1.msra.mxu0 0.0
    %335 = vmatprep.subr.mxu0 0.0
    %336 = vmatpush1.msra.mxu0 0.0
    %337 = vmatprep.subr.mxu0 0.0
    %338 = vmatpush1.msra.mxu0 0.0
    %339 = vmatprep.subr.mxu0 0.0
    %340 = vmatpush1.msra.mxu0 0.0
    %341 = vmatprep.subr.mxu0 0.0
    %342 = vmatpush1.msra.mxu0 0.0
    %343 = vmatprep.subr.mxu0 0.0
    %344 = vmatpush1.msra.mxu0 0.0
    %345 = vmatprep.subr.mxu0 0.0
    %346 = vmatpush1.msra.mxu0 0.0
    %347 = vmatprep.subr.mxu0 0.0
    %348 = vmatpush1.msra.mxu0 0.0
    %349 = vmatprep.subr.mxu0 0.0
    %350 = vmatpush1.msra.mxu0 0.0
    %351 = vmatprep.subr.mxu0 0.0
    %352 = vmatpush1.msra.mxu0 0.0
    %353 = vmatprep.subr.mxu0 0.0
    %354 = vmatpush1.msra.mxu0 0.0
    %355 = vmatprep.subr.mxu0 0.0
    %356 = vmatpush1.msra.mxu0 0.0
    %357 = vmatprep.subr.mxu0 0.0
    %358 = vmatpush1.msra.mxu0 0.0
    %359 = vmatprep.subr.mxu0 0.0
    %360 = vmatpush1.msra.mxu0 0.0
    %361 = vmatprep.mubr.f32.mxu0 0.0
    %362 = vmatmul.mubr.f32.gmra.mrb[0].mxu0 0.0
    %v363 = vpop.f32.mrb[0].mxu0
    %v364 = vadd.f32 0.0, %v363
    %v365 = vpop.f32.mrb[0].mxu0
    %v366 = vadd.f32 0.0, %v365
    %367 = vdwg.mxu0
    %v368 = vadd.f32 %v111, %v293
    %v369 = vadd.f32 %v112, %v295
    %v370 = vadd.f32 %v113, %v364
    %v371 = vadd.f32 %v114, %v366
    %v373 = vlaneseq
    %v374 = vshrl.u32 %v373, 7
    %v375 = vsub.s32 0, %v374
    %v376 = vrot.slane %v207, %v375
    %v377 = vlaneseq
    %v378 = vshrl.u32 %v377, 7
    %v379 = vsub.s32 1, %v378
    %v380 = vrot.slane %v207, %v379
    %v381 = vlaneseq
    %v382 = vshrl.u32 %v381, 7
    %v383 = vsub.s32 2, %v382
    %v384 = vrot.slane %v207, %v383
    %v385 = vlaneseq
    %v386 = vshrl.u32 %v385, 7
    %v387 = vsub.s32 3, %v386
    %v388 = vrot.slane %v207, %v387
    %v393 = vadd.f32 %v368, %v376
    %v394 = vadd.f32 %v369, %v380
    %v395 = vadd.f32 %v370, %v384
    %v396 = vadd.f32 %v371, %v388
    %v397 = vxor.u32 %v393, 2147483648
    %v398 = vmul.f32 %v397, 1.442695
    %v399 = vpow.pop %v398
    %v400 = vadd.f32 %v399, 1.0
    %v401 = vrcp.pop %v400
    %v402 = vmul.f32 1.0, %v401
    %v403 = vxor.u32 %v394, 2147483648
    %v404 = vmul.f32 %v403, 1.442695
    %v405 = vpow.pop %v404
    %v406 = vadd.f32 %v405, 1.0
    %v407 = vrcp.pop %v406
    %v408 = vmul.f32 1.0, %v407
    %v409 = vtanh.pop %v395
    %v410 = vxor.u32 %v396, 2147483648
    %v411 = vmul.f32 %v410, 1.442695
    %v412 = vpow.pop %v411
    %v413 = vadd.f32 %v412, 1.0
    %v414 = vrcp.pop %v413
    %v415 = vmul.f32 1.0, %v414
    %v416 = vmul.f32 %v408, 0.0
    %v417 = vmul.f32 %v402, %v409
    %v418 = vadd.f32 %v416, %v417
    %v419 = vtanh.pop %v418
    %v420 = vmul.f32 %v415, %v419
    %v422 = vlaneseq
    %v423 = vshrl.u32 %v422, 7
    %v424 = vsub.s32 0, %v423
    %v425 = vrot.slane %v224, %v424
    %v427 = vmul.f32 %v425, 0.0
    %428 = vmatprep.subr.mxu0 0.0
    %429 = vmatpush1.msra.mxu0 %v208
    %430 = vmatprep.subr.mxu0 0.0
    %431 = vmatpush1.msra.mxu0 %v209
    %432 = vmatprep.subr.mxu0 0.0
    %433 = vmatpush1.msra.mxu0 %v210
    %434 = vmatprep.subr.mxu0 0.0
    %435 = vmatpush1.msra.mxu0 %v211
    %436 = vmatprep.subr.mxu0 0.0
    %437 = vmatpush1.msra.mxu0 %v212
    %438 = vmatprep.subr.mxu0 0.0
    %439 = vmatpush1.msra.mxu0 %v213
    %440 = vmatprep.subr.mxu0 0.0
    %441 = vmatpush1.msra.mxu0 %v214
    %442 = vmatprep.subr.mxu0 0.0
    %443 = vmatpush1.msra.mxu0 %v215
    %444 = vmatprep.subr.mxu0 0.0
    %445 = vmatpush1.msra.mxu0 %v216
    %446 = vmatprep.subr.mxu0 0.0
    %447 = vmatpush1.msra.mxu0 %v217
    %448 = vmatprep.subr.mxu0 0.0
    %449 = vmatpush1.msra.mxu0 %v218
    %450 = vmatprep.subr.mxu0 0.0
    %451 = vmatpush1.msra.mxu0 %v219
    %452 = vmatprep.subr.mxu0 0.0
    %453 = vmatpush1.msra.mxu0 %v220
    %454 = vmatprep.subr.mxu0 0.0
    %455 = vmatpush1.msra.mxu0 %v221
    %456 = vmatprep.subr.mxu0 0.0
    %457 = vmatpush1.msra.mxu0 %v222
    %458 = vmatprep.subr.mxu0 0.0
    %459 = vmatpush1.msra.mxu0 %v223
    %460 = vmatprep.subr.mxu0 0.0
    %461 = vmatpush1.msra.mxu0 0.0
    %462 = vmatprep.subr.mxu0 0.0
    %463 = vmatpush1.msra.mxu0 0.0
    %464 = vmatprep.subr.mxu0 0.0
    %465 = vmatpush1.msra.mxu0 0.0
    %466 = vmatprep.subr.mxu0 0.0
    %467 = vmatpush1.msra.mxu0 0.0
    %468 = vmatprep.subr.mxu0 0.0
    %469 = vmatpush1.msra.mxu0 0.0
    %470 = vmatprep.subr.mxu0 0.0
    %471 = vmatpush1.msra.mxu0 0.0
    %472 = vmatprep.subr.mxu0 0.0
    %473 = vmatpush1.msra.mxu0 0.0
    %474 = vmatprep.subr.mxu0 0.0
    %475 = vmatpush1.msra.mxu0 0.0
    %476 = vmatprep.subr.mxu0 0.0
    %477 = vmatpush1.msra.mxu0 0.0
    %478 = vmatprep.subr.mxu0 0.0
    %479 = vmatpush1.msra.mxu0 0.0
    %480 = vmatprep.subr.mxu0 0.0
    %481 = vmatpush1.msra.mxu0 0.0
    %482 = vmatprep.subr.mxu0 0.0
    %483 = vmatpush1.msra.mxu0 0.0
    %484 = vmatprep.subr.mxu0 0.0
    %485 = vmatpush1.msra.mxu0 0.0
    %486 = vmatprep.subr.mxu0 0.0
    %487 = vmatpush1.msra.mxu0 0.0
    %488 = vmatprep.subr.mxu0 0.0
    %489 = vmatpush1.msra.mxu0 0.0
    %490 = vmatprep.subr.mxu0 0.0
    %491 = vmatpush1.msra.mxu0 0.0
    %492 = vmatprep.mubr.f32.mxu0 0.0
    %493 = vmatmul.mubr.f32.gmra.mrb[0].mxu0 %v420
    %v494 = vpop.f32.mrb[0].mxu0
    %v495 = vadd.f32 %v427, %v494
    %v496 = vpop.f32.mrb[0].mxu0
    %497 = vdwg.mxu0
    %v499 = vlaneseq
    %v500 = vshrl.u32 %v499, 7
    %v501 = vsub.s32 0, %v500
    %v502 = vrot.slane %v225, %v501
    %v504 = vadd.f32 %v495, %v502
    %v505 = vxor.u32 %v504, 2147483648
    %v506 = vmul.f32 %v505, 1.442695
    %v507 = vpow.pop %v506
    %v508 = vadd.f32 %v507, 1.0
    %v509 = vrcp.pop %v508
    %v510 = vmul.f32 1.0, %v509
    %v511 = vtanh.pop %v504
    %v512 = vmul.f32 %v510, 0.0
    %514 = vrot.lane.b32.xlu0 %v511, 126
    %v515 = vpop.permute.xlu0 %514
    %v517 = vmul.f32 %v510, %v515
    %519 = vrot.lane.b32.xlu0 %v517, 1
    %v520 = vpop.permute.xlu0 %519
    %v522 = vadd.f32 %v512, %v520
    %v523 = vtanh.pop %v522
    %525 = vrot.lane.b32.xlu0 %v523, 2
    %v526 = vpop.permute.xlu0 %525
    %v528 = vmul.f32 %v510, %v526
    %530 = vrot.lane.b32.xlu0 %v528, 125
    %v531 = vpop.permute.xlu0 %530
    %vm533 = vcmask 7168
    %534 = vst.msk [vmem:[#allocation5] sm:$0xff] %vm533, %v531
    %535 = vmatprep.subr.mxu0 %v144
    %536 = vmatpush1.msra.mxu0 %v143
    %537 = vmatprep.subr.mxu0 %v148
    %538 = vmatpush1.msra.mxu0 %v147
    %539 = vmatprep.subr.mxu0 %v152
    %540 = vmatpush1.msra.mxu0 %v151
    %541 = vmatprep.subr.mxu0 %v156
    %542 = vmatpush1.msra.mxu0 %v155
    %543 = vmatprep.subr.mxu0 %v160
    %544 = vmatpush1.msra.mxu0 %v159
    %545 = vmatprep.subr.mxu0 %v164
    %546 = vmatpush1.msra.mxu0 %v163
    %547 = vmatprep.subr.mxu0 %v168
    %548 = vmatpush1.msra.mxu0 %v167
    %549 = vmatprep.subr.mxu0 %v172
    %550 = vmatpush1.msra.mxu0 %v171
    %551 = vmatprep.subr.mxu0 %v176
    %552 = vmatpush1.msra.mxu0 %v175
    %553 = vmatprep.subr.mxu0 %v180
    %554 = vmatpush1.msra.mxu0 %v179
    %555 = vmatprep.subr.mxu0 %v184
    %556 = vmatpush1.msra.mxu0 %v183
    %557 = vmatprep.subr.mxu0 %v188
    %558 = vmatpush1.msra.mxu0 %v187
    %559 = vmatprep.subr.mxu0 %v192
    %560 = vmatpush1.msra.mxu0 %v191
    %561 = vmatprep.subr.mxu0 %v196
    %562 = vmatpush1.msra.mxu0 %v195
    %563 = vmatprep.subr.mxu0 %v200
    %564 = vmatpush1.msra.mxu0 %v199
    %565 = vmatprep.subr.mxu0 %v204
    %566 = vmatpush1.msra.mxu0 %v203
    %567 = vmatprep.subr.mxu0 0.0
    %568 = vmatpush1.msra.mxu0 0.0
    %569 = vmatprep.subr.mxu0 0.0
    %570 = vmatpush1.msra.mxu0 0.0
    %571 = vmatprep.subr.mxu0 0.0
    %572 = vmatpush1.msra.mxu0 0.0
    %573 = vmatprep.subr.mxu0 0.0
    %574 = vmatpush1.msra.mxu0 0.0
    %575 = vmatprep.subr.mxu0 0.0
    %576 = vmatpush1.msra.mxu0 0.0
    %577 = vmatprep.subr.mxu0 0.0
    %578 = vmatpush1.msra.mxu0 0.0
    %579 = vmatprep.subr.mxu0 0.0
    %580 = vmatpush1.msra.mxu0 0.0
    %581 = vmatprep.subr.mxu0 0.0
    %582 = vmatpush1.msra.mxu0 0.0
    %583 = vmatprep.subr.mxu0 0.0
    %584 = vmatpush1.msra.mxu0 0.0
    %585 = vmatprep.subr.mxu0 0.0
    %586 = vmatpush1.msra.mxu0 0.0
    %587 = vmatprep.subr.mxu0 0.0
    %588 = vmatpush1.msra.mxu0 0.0
    %589 = vmatprep.subr.mxu0 0.0
    %590 = vmatpush1.msra.mxu0 0.0
    %591 = vmatprep.subr.mxu0 0.0
    %592 = vmatpush1.msra.mxu0 0.0
    %593 = vmatprep.subr.mxu0 0.0
    %594 = vmatpush1.msra.mxu0 0.0
    %595 = vmatprep.subr.mxu0 0.0
    %596 = vmatpush1.msra.mxu0 0.0
    %597 = vmatprep.subr.mxu0 0.0
    %598 = vmatpush1.msra.mxu0 0.0
    %599 = vmatprep.mubr.f32.mxu0 0.0
    %600 = vmatmul.mubr.f32.gmra.mrb[0].mxu0 %v420
    %v601 = vpop.f32.mrb[0].mxu0
    %v602 = vadd.f32 0.0, %v601
    %v603 = vpop.f32.mrb[0].mxu0
    %v604 = vadd.f32 0.0, %v603
    %605 = vdwg.mxu0
    %606 = vmatprep.subr.mxu0 %v146
    %607 = vmatpush1.msra.mxu0 %v145
    %608 = vmatprep.subr.mxu0 %v150
    %609 = vmatpush1.msra.mxu0 %v149
    %610 = vmatprep.subr.mxu0 %v154
    %611 = vmatpush1.msra.mxu0 %v153
    %612 = vmatprep.subr.mxu0 %v158
    %613 = vmatpush1.msra.mxu0 %v157
    %614 = vmatprep.subr.mxu0 %v162
    %615 = vmatpush1.msra.mxu0 %v161
    %616 = vmatprep.subr.mxu0 %v166
    %617 = vmatpush1.msra.mxu0 %v165
    %618 = vmatprep.subr.mxu0 %v170
    %619 = vmatpush1.msra.mxu0 %v169
    %620 = vmatprep.subr.mxu0 %v174
    %621 = vmatpush1.msra.mxu0 %v173
    %622 = vmatprep.subr.mxu0 %v178
    %623 = vmatpush1.msra.mxu0 %v177
    %624 = vmatprep.subr.mxu0 %v182
    %625 = vmatpush1.msra.mxu0 %v181
    %626 = vmatprep.subr.mxu0 %v186
    %627 = vmatpush1.msra.mxu0 %v185
    %628 = vmatprep.subr.mxu0 %v190
    %629 = vmatpush1.msra.mxu0 %v189
    %630 = vmatprep.subr.mxu0 %v194
    %631 = vmatpush1.msra.mxu0 %v193
    %632 = vmatprep.subr.mxu0 %v198
    %633 = vmatpush1.msra.mxu0 %v197
    %634 = vmatprep.subr.mxu0 %v202
    %635 = vmatpush1.msra.mxu0 %v201
    %636 = vmatprep.subr.mxu0 %v206
    %637 = vmatpush1.msra.mxu0 %v205
    %638 = vmatprep.subr.mxu0 0.0
    %639 = vmatpush1.msra.mxu0 0.0
    %640 = vmatprep.subr.mxu0 0.0
    %641 = vmatpush1.msra.mxu0 0.0
    %642 = vmatprep.subr.mxu0 0.0
    %643 = vmatpush1.msra.mxu0 0.0
    %644 = vmatprep.subr.mxu0 0.0
    %645 = vmatpush1.msra.mxu0 0.0
    %646 = vmatprep.subr.mxu0 0.0
    %647 = vmatpush1.msra.mxu0 0.0
    %648 = vmatprep.subr.mxu0 0.0
    %649 = vmatpush1.msra.mxu0 0.0
    %650 = vmatprep.subr.mxu0 0.0
    %651 = vmatpush1.msra.mxu0 0.0
    %652 = vmatprep.subr.mxu0 0.0
    %653 = vmatpush1.msra.mxu0 0.0
    %654 = vmatprep.subr.mxu0 0.0
    %655 = vmatpush1.msra.mxu0 0.0
    %656 = vmatprep.subr.mxu0 0.0
    %657 = vmatpush1.msra.mxu0 0.0
    %658 = vmatprep.subr.mxu0 0.0
    %659 = vmatpush1.msra.mxu0 0.0
    %660 = vmatprep.subr.mxu0 0.0
    %661 = vmatpush1.msra.mxu0 0.0
    %662 = vmatprep.subr.mxu0 0.0
    %663 = vmatpush1.msra.mxu0 0.0
    %664 = vmatprep.subr.mxu0 0.0
    %665 = vmatpush1.msra.mxu0 0.0
    %666 = vmatprep.subr.mxu0 0.0
    %667 = vmatpush1.msra.mxu0 0.0
    %668 = vmatprep.subr.mxu0 0.0
    %669 = vmatpush1.msra.mxu0 0.0
    %670 = vmatprep.mubr.f32.mxu0 0.0
    %671 = vmatmul.mubr.f32.gmra.mrb[0].mxu0 %v420
    %v672 = vpop.f32.mrb[0].mxu0
    %v673 = vadd.f32 0.0, %v672
    %v674 = vpop.f32.mrb[0].mxu0
    %v675 = vadd.f32 0.0, %v674
    %676 = vdwg.mxu0
    %v677 = vadd.f32 %v115, %v602
    %v678 = vadd.f32 %v116, %v604
    %v679 = vadd.f32 %v117, %v673
    %v680 = vadd.f32 %v118, %v675
    %v681 = vadd.f32 %v677, %v376
    %v682 = vadd.f32 %v678, %v380
    %v683 = vadd.f32 %v679, %v384
    %v684 = vadd.f32 %v680, %v388
    %v685 = vxor.u32 %v681, 2147483648
    %v686 = vmul.f32 %v685, 1.442695
    %v687 = vpow.pop %v686
    %v688 = vadd.f32 %v687, 1.0
    %v689 = vrcp.pop %v688
    %v690 = vmul.f32 1.0, %v689
    %v691 = vxor.u32 %v682, 2147483648
    %v692 = vmul.f32 %v691, 1.442695
    %v693 = vpow.pop %v692
    %v694 = vadd.f32 %v693, 1.0
    %v695 = vrcp.pop %v694
    %v696 = vmul.f32 1.0, %v695
    %v697 = vtanh.pop %v683
    %v698 = vxor.u32 %v684, 2147483648
    %v699 = vmul.f32 %v698, 1.442695
    %v700 = vpow.pop %v699
    %v701 = vadd.f32 %v700, 1.0
    %v702 = vrcp.pop %v701
    %v703 = vmul.f32 1.0, %v702
    %v704 = vmul.f32 %v696, %v418
    %v705 = vmul.f32 %v690, %v697
    %v706 = vadd.f32 %v704, %v705
    %v707 = vtanh.pop %v706
    %v708 = vmul.f32 %v703, %v707
    %709 = vset.pattern.permute.xlu0 3
    %710 = vperm.xlu0 %709, %v528
    %v711 = vpop.permute.xlu0 %710
    %v713 = vmul.f32 %v711, %v425
    %714 = vmatprep.subr.mxu0 0.0
    %715 = vmatpush1.msra.mxu0 %v208
    %716 = vmatprep.subr.mxu0 0.0
    %717 = vmatpush1.msra.mxu0 %v209
    %718 = vmatprep.subr.mxu0 0.0
    %719 = vmatpush1.msra.mxu0 %v210
    %720 = vmatprep.subr.mxu0 0.0
    %721 = vmatpush1.msra.mxu0 %v211
    %722 = vmatprep.subr.mxu0 0.0
    %723 = vmatpush1.msra.mxu0 %v212
    %724 = vmatprep.subr.mxu0 0.0
    %725 = vmatpush1.msra.mxu0 %v213
    %726 = vmatprep.subr.mxu0 0.0
    %727 = vmatpush1.msra.mxu0 %v214
    %728 = vmatprep.subr.mxu0 0.0
    %729 = vmatpush1.msra.mxu0 %v215
    %730 = vmatprep.subr.mxu0 0.0
    %731 = vmatpush1.msra.mxu0 %v216
    %732 = vmatprep.subr.mxu0 0.0
    %733 = vmatpush1.msra.mxu0 %v217
    %734 = vmatprep.subr.mxu0 0.0
    %735 = vmatpush1.msra.mxu0 %v218
    %736 = vmatprep.subr.mxu0 0.0
    %737 = vmatpush1.msra.mxu0 %v219
    %738 = vmatprep.subr.mxu0 0.0
    %739 = vmatpush1.msra.mxu0 %v220
    %740 = vmatprep.subr.mxu0 0.0
    %741 = vmatpush1.msra.mxu0 %v221
    %742 = vmatprep.subr.mxu0 0.0
    %743 = vmatpush1.msra.mxu0 %v222
    %744 = vmatprep.subr.mxu0 0.0
    %745 = vmatpush1.msra.mxu0 %v223
    %746 = vmatprep.subr.mxu0 0.0
    %747 = vmatpush1.msra.mxu0 0.0
    %748 = vmatprep.subr.mxu0 0.0
    %749 = vmatpush1.msra.mxu0 0.0
    %750 = vmatprep.subr.mxu0 0.0
    %751 = vmatpush1.msra.mxu0 0.0
    %752 = vmatprep.subr.mxu0 0.0
    %753 = vmatpush1.msra.mxu0 0.0
    %754 = vmatprep.subr.mxu0 0.0
    %755 = vmatpush1.msra.mxu0 0.0
    %756 = vmatprep.subr.mxu0 0.0
    %757 = vmatpush1.msra.mxu0 0.0
    %758 = vmatprep.subr.mxu0 0.0
    %759 = vmatpush1.msra.mxu0 0.0
    %760 = vmatprep.subr.mxu0 0.0
    %761 = vmatpush1.msra.mxu0 0.0
    %762 = vmatprep.subr.mxu0 0.0
    %763 = vmatpush1.msra.mxu0 0.0
    %764 = vmatprep.subr.mxu0 0.0
    %765 = vmatpush1.msra.mxu0 0.0
    %766 = vmatprep.subr.mxu0 0.0
    %767 = vmatpush1.msra.mxu0 0.0
    %768 = vmatprep.subr.mxu0 0.0
    %769 = vmatpush1.msra.mxu0 0.0
    %770 = vmatprep.subr.mxu0 0.0
    %771 = vmatpush1.msra.mxu0 0.0
    %772 = vmatprep.subr.mxu0 0.0
    %773 = vmatpush1.msra.mxu0 0.0
    %774 = vmatprep.subr.mxu0 0.0
    %775 = vmatpush1.msra.mxu0 0.0
    %776 = vmatprep.subr.mxu0 0.0
    %777 = vmatpush1.msra.mxu0 0.0
    %778 = vmatprep.mubr.f32.mxu0 0.0
    %779 = vmatmul.mubr.f32.gmra.mrb[0].mxu0 %v708
    %v780 = vpop.f32.mrb[0].mxu0
    %v781 = vadd.f32 %v713, %v780
    %v782 = vpop.f32.mrb[0].mxu0
    %783 = vdwg.mxu0
    %v784 = vadd.f32 %v781, %v502
    %v785 = vxor.u32 %v784, 2147483648
    %v786 = vmul.f32 %v785, 1.442695
    %v787 = vpow.pop %v786
    %v788 = vadd.f32 %v787, 1.0
    %v789 = vrcp.pop %v788
    %v790 = vmul.f32 1.0, %v789
    %v791 = vtanh.pop %v784
    %v792 = vmul.f32 %v790, %v522
    %794 = vrot.lane.b32.xlu0 %v791, 126
    %v795 = vpop.permute.xlu0 %794
    %v797 = vmul.f32 %v790, %v795
    %799 = vrot.lane.b32.xlu0 %v797, 1
    %v800 = vpop.permute.xlu0 %799
    %v802 = vadd.f32 %v792, %v800
    %v803 = vtanh.pop %v802
    %805 = vrot.lane.b32.xlu0 %v803, 2
    %v806 = vpop.permute.xlu0 %805
    %v808 = vmul.f32 %v790, %v806
    %810 = vrot.lane.b32.xlu0 %v808, 126
    %v811 = vpop.permute.xlu0 %810
    %vm813 = vcmask 15368
    %814 = vst.msk [vmem:[#allocation5] sm:$0xff] %vm813, %v811
    %815 = vmatprep.subr.mxu0 %v144
    %816 = vmatpush1.msra.mxu0 %v143
    %817 = vmatprep.subr.mxu0 %v148
    %818 = vmatpush1.msra.mxu0 %v147
    %819 = vmatprep.subr.mxu0 %v152
    %820 = vmatpush1.msra.mxu0 %v151
    %821 = vmatprep.subr.mxu0 %v156
    %822 = vmatpush1.msra.mxu0 %v155
    %823 = vmatprep.subr.mxu0 %v160
    %824 = vmatpush1.msra.mxu0 %v159
    %825 = vmatprep.subr.mxu0 %v164
    %826 = vmatpush1.msra.mxu0 %v163
    %827 = vmatprep.subr.mxu0 %v168
    %828 = vmatpush1.msra.mxu0 %v167
    %829 = vmatprep.subr.mxu0 %v172
    %830 = vmatpush1.msra.mxu0 %v171
    %831 = vmatprep.subr.mxu0 %v176
    %832 = vmatpush1.msra.mxu0 %v175
    %833 = vmatprep.subr.mxu0 %v180
    %834 = vmatpush1.msra.mxu0 %v179
    %835 = vmatprep.subr.mxu0 %v184
    %836 = vmatpush1.msra.mxu0 %v183
    %837 = vmatprep.subr.mxu0 %v188
    %838 = vmatpush1.msra.mxu0 %v187
    %839 = vmatprep.subr.mxu0 %v192
    %840 = vmatpush1.msra.mxu0 %v191
    %841 = vmatprep.subr.mxu0 %v196
    %842 = vmatpush1.msra.mxu0 %v195
    %843 = vmatprep.subr.mxu0 %v200
    %844 = vmatpush1.msra.mxu0 %v199
    %845 = vmatprep.subr.mxu0 %v204
    %846 = vmatpush1.msra.mxu0 %v203
    %847 = vmatprep.subr.mxu0 0.0
    %848 = vmatpush1.msra.mxu0 0.0
    %849 = vmatprep.subr.mxu0 0.0
    %850 = vmatpush1.msra.mxu0 0.0
    %851 = vmatprep.subr.mxu0 0.0
    %852 = vmatpush1.msra.mxu0 0.0
    %853 = vmatprep.subr.mxu0 0.0
    %854 = vmatpush1.msra.mxu0 0.0
    %855 = vmatprep.subr.mxu0 0.0
    %856 = vmatpush1.msra.mxu0 0.0
    %857 = vmatprep.subr.mxu0 0.0
    %858 = vmatpush1.msra.mxu0 0.0
    %859 = vmatprep.subr.mxu0 0.0
    %860 = vmatpush1.msra.mxu0 0.0
    %861 = vmatprep.subr.mxu0 0.0
    %862 = vmatpush1.msra.mxu0 0.0
    %863 = vmatprep.subr.mxu0 0.0
    %864 = vmatpush1.msra.mxu0 0.0
    %865 = vmatprep.subr.mxu0 0.0
    %866 = vmatpush1.msra.mxu0 0.0
    %867 = vmatprep.subr.mxu0 0.0
    %868 = vmatpush1.msra.mxu0 0.0
    %869 = vmatprep.subr.mxu0 0.0
    %870 = vmatpush1.msra.mxu0 0.0
    %871 = vmatprep.subr.mxu0 0.0
    %872 = vmatpush1.msra.mxu0 0.0
    %873 = vmatprep.subr.mxu0 0.0
    %874 = vmatpush1.msra.mxu0 0.0
    %875 = vmatprep.subr.mxu0 0.0
    %876 = vmatpush1.msra.mxu0 0.0
    %877 = vmatprep.subr.mxu0 0.0
    %878 = vmatpush1.msra.mxu0 0.0
    %879 = vmatprep.mubr.f32.mxu0 0.0
    %880 = vmatmul.mubr.f32.gmra.mrb[0].mxu0 %v708
    %v881 = vpop.f32.mrb[0].mxu0
    %v882 = vadd.f32 0.0, %v881
    %v883 = vpop.f32.mrb[0].mxu0
    %v884 = vadd.f32 0.0, %v883
    %885 = vdwg.mxu0
    %886 = vmatprep.subr.mxu0 %v146
    %887 = vmatpush1.msra.mxu0 %v145
    %888 = vmatprep.subr.mxu0 %v150
    %889 = vmatpush1.msra.mxu0 %v149
    %890 = vmatprep.subr.mxu0 %v154
    %891 = vmatpush1.msra.mxu0 %v153
    %892 = vmatprep.subr.mxu0 %v158
    %893 = vmatpush1.msra.mxu0 %v157
    %894 = vmatprep.subr.mxu0 %v162
    %895 = vmatpush1.msra.mxu0 %v161
    %896 = vmatprep.subr.mxu0 %v166
    %897 = vmatpush1.msra.mxu0 %v165
    %898 = vmatprep.subr.mxu0 %v170
    %899 = vmatpush1.msra.mxu0 %v169
    %900 = vmatprep.subr.mxu0 %v174
    %901 = vmatpush1.msra.mxu0 %v173
    %902 = vmatprep.subr.mxu0 %v178
    %903 = vmatpush1.msra.mxu0 %v177
    %904 = vmatprep.subr.mxu0 %v182
    %905 = vmatpush1.msra.mxu0 %v181
    %906 = vmatprep.subr.mxu0 %v186
    %907 = vmatpush1.msra.mxu0 %v185
    %908 = vmatprep.subr.mxu0 %v190
    %909 = vmatpush1.msra.mxu0 %v189
    %910 = vmatprep.subr.mxu0 %v194
    %911 = vmatpush1.msra.mxu0 %v193
    %912 = vmatprep.subr.mxu0 %v198
    %913 = vmatpush1.msra.mxu0 %v197
    %914 = vmatprep.subr.mxu0 %v202
    %915 = vmatpush1.msra.mxu0 %v201
    %916 = vmatprep.subr.mxu0 %v206
    %917 = vmatpush1.msra.mxu0 %v205
    %918 = vmatprep.subr.mxu0 0.0
    %919 = vmatpush1.msra.mxu0 0.0
    %920 = vmatprep.subr.mxu0 0.0
    %921 = vmatpush1.msra.mxu0 0.0
    %922 = vmatprep.subr.mxu0 0.0
    %923 = vmatpush1.msra.mxu0 0.0
    %924 = vmatprep.subr.mxu0 0.0
    %925 = vmatpush1.msra.mxu0 0.0
    %926 = vmatprep.subr.mxu0 0.0
    %927 = vmatpush1.msra.mxu0 0.0
    %928 = vmatprep.subr.mxu0 0.0
    %929 = vmatpush1.msra.mxu0 0.0
    %930 = vmatprep.subr.mxu0 0.0
    %931 = vmatpush1.msra.mxu0 0.0
    %932 = vmatprep.subr.mxu0 0.0
    %933 = vmatpush1.msra.mxu0 0.0
    %934 = vmatprep.subr.mxu0 0.0
    %935 = vmatpush1.msra.mxu0 0.0
    %936 = vmatprep.subr.mxu0 0.0
    %937 = vmatpush1.msra.mxu0 0.0
    %938 = vmatprep.subr.mxu0 0.0
    %939 = vmatpush1.msra.mxu0 0.0
    %940 = vmatprep.subr.mxu0 0.0
    %941 = vmatpush1.msra.mxu0 0.0
    %942 = vmatprep.subr.mxu0 0.0
    %943 = vmatpush1.msra.mxu0 0.0
    %944 = vmatprep.subr.mxu0 0.0
    %945 = vmatpush1.msra.mxu0 0.0
    %946 = vmatprep.subr.mxu0 0.0
    %947 = vmatpush1.msra.mxu0 0.0
    %948 = vmatprep.subr.mxu0 0.0
    %949 = vmatpush1.msra.mxu0 0.0
    %950 = vmatprep.mubr.f32.mxu0 0.0
    %951 = vmatmul.mubr.f32.gmra.mrb[0].mxu0 %v708
    %v952 = vpop.f32.mrb[0].mxu0
    %v953 = vadd.f32 0.0, %v952
    %v954 = vpop.f32.mrb[0].mxu0
    %v955 = vadd.f32 0.0, %v954
    %956 = vdwg.mxu0
    %v957 = vadd.f32 %v119, %v882
    %v958 = vadd.f32 %v120, %v884
    %v959 = vadd.f32 %v121, %v953
    %v960 = vadd.f32 %v122, %v955
    %v961 = vadd.f32 %v957, %v376
    %v962 = vadd.f32 %v958, %v380
    %v963 = vadd.f32 %v959, %v384
    %v964 = vadd.f32 %v960, %v388
    %v965 = vxor.u32 %v961, 2147483648
    %v966 = vmul.f32 %v965, 1.442695
    %v967 = vpow.pop %v966
    %v968 = vadd.f32 %v967, 1.0
    %v969 = vrcp.pop %v968
    %v970 = vmul.f32 1.0, %v969
    %v971 = vxor.u32 %v962, 2147483648
    %v972 = vmul.f32 %v971, 1.442695
    %v973 = vpow.pop %v972
    %v974 = vadd.f32 %v973, 1.0
    %v975 = vrcp.pop %v974
    %v976 = vmul.f32 1.0, %v975
    %v977 = vtanh.pop %v963
    %v978 = vxor.u32 %v964, 2147483648
    %v979 = vmul.f32 %v978, 1.442695
    %v980 = vpow.pop %v979
    %v981 = vadd.f32 %v980, 1.0
    %v982 = vrcp.pop %v981
    %v983 = vmul.f32 1.0, %v982
    %v984 = vmul.f32 %v976, %v706
    %v985 = vmul.f32 %v970, %v977
    %v986 = vadd.f32 %v984, %v985
    %v987 = vtanh.pop %v986
    %v988 = vmul.f32 %v983, %v987
    %989 = vset.pattern.permute.xlu0 3
    %990 = vperm.xlu0 %989, %v808
    %v991 = vpop.permute.xlu0 %990
    %v993 = vmul.f32 %v991, %v425
    %994 = vmatprep.subr.mxu0 0.0
    %995 = vmatpush1.msra.mxu0 %v208
    %996 = vmatprep.subr.mxu0 0.0
    %997 = vmatpush1.msra.mxu0 %v209
    %998 = vmatprep.subr.mxu0 0.0
    %999 = vmatpush1.msra.mxu0 %v210
    %1000 = vmatprep.subr.mxu0 0.0
    %1001 = vmatpush1.msra.mxu0 %v211
    %1002 = vmatprep.subr.mxu0 0.0
    %1003 = vmatpush1.msra.mxu0 %v212
    %1004 = vmatprep.subr.mxu0 0.0
    %1005 = vmatpush1.msra.mxu0 %v213
    %1006 = vmatprep.subr.mxu0 0.0
    %1007 = vmatpush1.msra.mxu0 %v214
    %1008 = vmatprep.subr.mxu0 0.0
    %1009 = vmatpush1.msra.mxu0 %v215
    %1010 = vmatprep.subr.mxu0 0.0
    %1011 = vmatpush1.msra.mxu0 %v216
    %1012 = vmatprep.subr.mxu0 0.0
    %1013 = vmatpush1.msra.mxu0 %v217
    %1014 = vmatprep.subr.mxu0 0.0
    %1015 = vmatpush1.msra.mxu0 %v218
    %1016 = vmatprep.subr.mxu0 0.0
    %1017 = vmatpush1.msra.mxu0 %v219
    %1018 = vmatprep.subr.mxu0 0.0
    %1019 = vmatpush1.msra.mxu0 %v220
    %1020 = vmatprep.subr.mxu0 0.0
    %1021 = vmatpush1.msra.mxu0 %v221
    %1022 = vmatprep.subr.mxu0 0.0
    %1023 = vmatpush1.msra.mxu0 %v222
    %1024 = vmatprep.subr.mxu0 0.0
    %1025 = vmatpush1.msra.mxu0 %v223
    %1026 = vmatprep.subr.mxu0 0.0
    %1027 = vmatpush1.msra.mxu0 0.0
    %1028 = vmatprep.subr.mxu0 0.0
    %1029 = vmatpush1.msra.mxu0 0.0
    %1030 = vmatprep.subr.mxu0 0.0
    %1031 = vmatpush1.msra.mxu0 0.0
    %1032 = vmatprep.subr.mxu0 0.0
    %1033 = vmatpush1.msra.mxu0 0.0
    %1034 = vmatprep.subr.mxu0 0.0
    %1035 = vmatpush1.msra.mxu0 0.0
    %1036 = vmatprep.subr.mxu0 0.0
    %1037 = vmatpush1.msra.mxu0 0.0
    %1038 = vmatprep.subr.mxu0 0.0
    %1039 = vmatpush1.msra.mxu0 0.0
    %1040 = vmatprep.subr.mxu0 0.0
    %1041 = vmatpush1.msra.mxu0 0.0
    %1042 = vmatprep.subr.mxu0 0.0
    %1043 = vmatpush1.msra.mxu0 0.0
    %1044 = vmatprep.subr.mxu0 0.0
    %1045 = vmatpush1.msra.mxu0 0.0
    %1046 = vmatprep.subr.mxu0 0.0
    %1047 = vmatpush1.msra.mxu0 0.0
    %1048 = vmatprep.subr.mxu0 0.0
    %1049 = vmatpush1.msra.mxu0 0.0
    %1050 = vmatprep.subr.mxu0 0.0
    %1051 = vmatpush1.msra.mxu0 0.0
    %1052 = vmatprep.subr.mxu0 0.0
    %1053 = vmatpush1.msra.mxu0 0.0
    %1054 = vmatprep.subr.mxu0 0.0
    %1055 = vmatpush1.msra.mxu0 0.0
    %1056 = vmatprep.subr.mxu0 0.0
    %1057 = vmatpush1.msra.mxu0 0.0
    %1058 = vmatprep.mubr.f32.mxu0 0.0
    %1059 = vmatmul.mubr.f32.gmra.mrb[0].mxu0 %v988
    %v1060 = vpop.f32.mrb[0].mxu0
    %v1061 = vadd.f32 %v993, %v1060
    %v1062 = vpop.f32.mrb[0].mxu0
    %1063 = vdwg.mxu0
    %v1064 = vadd.f32 %v1061, %v502
    %v1065 = vxor.u32 %v1064, 2147483648
    %v1066 = vmul.f32 %v1065, 1.442695
    %v1067 = vpow.pop %v1066
    %v1068 = vadd.f32 %v1067, 1.0
    %v1069 = vrcp.pop %v1068
    %v1070 = vmul.f32 1.0, %v1069
    %v1071 = vtanh.pop %v1064
    %v1072 = vmul.f32 %v1070, %v802
    %1074 = vrot.lane.b32.xlu0 %v1071, 126
    %v1075 = vpop.permute.xlu0 %1074
    %v1077 = vmul.f32 %v1070, %v1075
    %1079 = vrot.lane.b32.xlu0 %v1077, 1
    %v1080 = vpop.permute.xlu0 %1079
    %v1082 = vadd.f32 %v1072, %v1080
    %v1083 = vtanh.pop %v1082
    %1085 = vrot.lane.b32.xlu0 %v1083, 2
    %v1086 = vpop.permute.xlu0 %1085
    %v1088 = vmul.f32 %v1070, %v1086
    %1090 = vrot.lane.b32.xlu0 %v1088, 127
    %v1091 = vpop.permute.xlu0 %1090
    %vm1093 = vcmask 23568
    %1094 = vst.msk [vmem:[#allocation5] sm:$0xff] %vm1093, %v1091
    %1095 = vmatprep.subr.mxu0 %v144
    %1096 = vmatpush1.msra.mxu0 %v143
    %1097 = vmatprep.subr.mxu0 %v148
    %1098 = vmatpush1.msra.mxu0 %v147
    %1099 = vmatprep.subr.mxu0 %v152
    %1100 = vmatpush1.msra.mxu0 %v151
    %1101 = vmatprep.subr.mxu0 %v156
    %1102 = vmatpush1.msra.mxu0 %v155
    %1103 = vmatprep.subr.mxu0 %v160
    %1104 = vmatpush1.msra.mxu0 %v159
    %1105 = vmatprep.subr.mxu0 %v164
    %1106 = vmatpush1.msra.mxu0 %v163
    %1107 = vmatprep.subr.mxu0 %v168
    %1108 = vmatpush1.msra.mxu0 %v167
    %1109 = vmatprep.subr.mxu0 %v172
    %1110 = vmatpush1.msra.mxu0 %v171
    %1111 = vmatprep.subr.mxu0 %v176
    %1112 = vmatpush1.msra.mxu0 %v175
    %1113 = vmatprep.subr.mxu0 %v180
    %1114 = vmatpush1.msra.mxu0 %v179
    %1115 = vmatprep.subr.mxu0 %v184
    %1116 = vmatpush1.msra.mxu0 %v183
    %1117 = vmatprep.subr.mxu0 %v188
    %1118 = vmatpush1.msra.mxu0 %v187
    %1119 = vmatprep.subr.mxu0 %v192
    %1120 = vmatpush1.msra.mxu0 %v191
    %1121 = vmatprep.subr.mxu0 %v196
    %1122 = vmatpush1.msra.mxu0 %v195
    %1123 = vmatprep.subr.mxu0 %v200
    %1124 = vmatpush1.msra.mxu0 %v199
    %1125 = vmatprep.subr.mxu0 %v204
    %1126 = vmatpush1.msra.mxu0 %v203
    %1127 = vmatprep.subr.mxu0 0.0
    %1128 = vmatpush1.msra.mxu0 0.0
    %1129 = vmatprep.subr.mxu0 0.0
    %1130 = vmatpush1.msra.mxu0 0.0
    %1131 = vmatprep.subr.mxu0 0.0
    %1132 = vmatpush1.msra.mxu0 0.0
    %1133 = vmatprep.subr.mxu0 0.0
    %1134 = vmatpush1.msra.mxu0 0.0
    %1135 = vmatprep.subr.mxu0 0.0
    %1136 = vmatpush1.msra.mxu0 0.0
    %1137 = vmatprep.subr.mxu0 0.0
    %1138 = vmatpush1.msra.mxu0 0.0
    %1139 = vmatprep.subr.mxu0 0.0
    %1140 = vmatpush1.msra.mxu0 0.0
    %1141 = vmatprep.subr.mxu0 0.0
    %1142 = vmatpush1.msra.mxu0 0.0
    %1143 = vmatprep.subr.mxu0 0.0
    %1144 = vmatpush1.msra.mxu0 0.0
    %1145 = vmatprep.subr.mxu0 0.0
    %1146 = vmatpush1.msra.mxu0 0.0
    %1147 = vmatprep.subr.mxu0 0.0
    %1148 = vmatpush1.msra.mxu0 0.0
    %1149 = vmatprep.subr.mxu0 0.0
    %1150 = vmatpush1.msra.mxu0 0.0
    %1151 = vmatprep.subr.mxu0 0.0
    %1152 = vmatpush1.msra.mxu0 0.0
    %1153 = vmatprep.subr.mxu0 0.0
    %1154 = vmatpush1.msra.mxu0 0.0
    %1155 = vmatprep.subr.mxu0 0.0
    %1156 = vmatpush1.msra.mxu0 0.0
    %1157 = vmatprep.subr.mxu0 0.0
    %1158 = vmatpush1.msra.mxu0 0.0
    %1159 = vmatprep.mubr.f32.mxu0 0.0
    %1160 = vmatmul.mubr.f32.gmra.mrb[0].mxu0 %v988
    %v1161 = vpop.f32.mrb[0].mxu0
    %v1162 = vadd.f32 0.0, %v1161
    %v1163 = vpop.f32.mrb[0].mxu0
    %v1164 = vadd.f32 0.0, %v1163
    %1165 = vdwg.mxu0
    %1166 = vmatprep.subr.mxu0 %v146
    %1167 = vmatpush1.msra.mxu0 %v145
    %1168 = vmatprep.subr.mxu0 %v150
    %1169 = vmatpush1.msra.mxu0 %v149
    %1170 = vmatprep.subr.mxu0 %v154
    %1171 = vmatpush1.msra.mxu0 %v153
    %1172 = vmatprep.subr.mxu0 %v158
    %1173 = vmatpush1.msra.mxu0 %v157
    %1174 = vmatprep.subr.mxu0 %v162
    %1175 = vmatpush1.msra.mxu0 %v161
    %1176 = vmatprep.subr.mxu0 %v166
    %1177 = vmatpush1.msra.mxu0 %v165
    %1178 = vmatprep.subr.mxu0 %v170
    %1179 = vmatpush1.msra.mxu0 %v169
    %1180 = vmatprep.subr.mxu0 %v174
    %1181 = vmatpush1.msra.mxu0 %v173
    %1182 = vmatprep.subr.mxu0 %v178
    %1183 = vmatpush1.msra.mxu0 %v177
    %1184 = vmatprep.subr.mxu0 %v182
    %1185 = vmatpush1.msra.mxu0 %v181
    %1186 = vmatprep.subr.mxu0 %v186
    %1187 = vmatpush1.msra.mxu0 %v185
    %1188 = vmatprep.subr.mxu0 %v190
    %1189 = vmatpush1.msra.mxu0 %v189
    %1190 = vmatprep.subr.mxu0 %v194
    %1191 = vmatpush1.msra.mxu0 %v193
    %1192 = vmatprep.subr.mxu0 %v198
    %1193 = vmatpush1.msra.mxu0 %v197
    %1194 = vmatprep.subr.mxu0 %v202
    %1195 = vmatpush1.msra.mxu0 %v201
    %1196 = vmatprep.subr.mxu0 %v206
    %1197 = vmatpush1.msra.mxu0 %v205
    %1198 = vmatprep.subr.mxu0 0.0
    %1199 = vmatpush1.msra.mxu0 0.0
    %1200 = vmatprep.subr.mxu0 0.0
    %1201 = vmatpush1.msra.mxu0 0.0
    %1202 = vmatprep.subr.mxu0 0.0
    %1203 = vmatpush1.msra.mxu0 0.0
    %1204 = vmatprep.subr.mxu0 0.0
    %1205 = vmatpush1.msra.mxu0 0.0
    %1206 = vmatprep.subr.mxu0 0.0
    %1207 = vmatpush1.msra.mxu0 0.0
    %1208 = vmatprep.subr.mxu0 0.0
    %1209 = vmatpush1.msra.mxu0 0.0
    %1210 = vmatprep.subr.mxu0 0.0
    %1211 = vmatpush1.msra.mxu0 0.0
    %1212 = vmatprep.subr.mxu0 0.0
    %1213 = vmatpush1.msra.mxu0 0.0
    %1214 = vmatprep.subr.mxu0 0.0
    %1215 = vmatpush1.msra.mxu0 0.0
    %1216 = vmatprep.subr.mxu0 0.0
    %1217 = vmatpush1.msra.mxu0 0.0
    %1218 = vmatprep.subr.mxu0 0.0
    %1219 = vmatpush1.msra.mxu0 0.0
    %1220 = vmatprep.subr.mxu0 0.0
    %1221 = vmatpush1.msra.mxu0 0.0
    %1222 = vmatprep.subr.mxu0 0.0
    %1223 = vmatpush1.msra.mxu0 0.0
    %1224 = vmatprep.subr.mxu0 0.0
    %1225 = vmatpush1.msra.mxu0 0.0
    %1226 = vmatprep.subr.mxu0 0.0
    %1227 = vmatpush1.msra.mxu0 0.0
    %1228 = vmatprep.subr.mxu0 0.0
    %1229 = vmatpush1.msra.mxu0 0.0
    %1230 = vmatprep.mubr.f32.mxu0 0.0
    %1231 = vmatmul.mubr.f32.gmra.mrb[0].mxu0 %v988
    %v1232 = vpop.f32.mrb[0].mxu0
    %v1233 = vadd.f32 0.0, %v1232
    %v1234 = vpop.f32.mrb[0].mxu0
    %v1235 = vadd.f32 0.0, %v1234
    %1236 = vdwg.mxu0
    %v1237 = vadd.f32 %v123, %v1162
    %v1238 = vadd.f32 %v124, %v1164
    %v1239 = vadd.f32 %v125, %v1233
    %v1240 = vadd.f32 %v126, %v1235
    %v1241 = vadd.f32 %v1237, %v376
    %v1242 = vadd.f32 %v1238, %v380
    %v1243 = vadd.f32 %v1239, %v384
    %v1244 = vadd.f32 %v1240, %v388
    %v1245 = vxor.u32 %v1241, 2147483648
    %v1246 = vmul.f32 %v1245, 1.442695
    %v1247 = vpow.pop %v1246
    %v1248 = vadd.f32 %v1247, 1.0
    %v1249 = vrcp.pop %v1248
    %v1250 = vmul.f32 1.0, %v1249
    %v1251 = vxor.u32 %v1242, 2147483648
    %v1252 = vmul.f32 %v1251, 1.442695
    %v1253 = vpow.pop %v1252
    %v1254 = vadd.f32 %v1253, 1.0
    %v1255 = vrcp.pop %v1254
    %v1256 = vmul.f32 1.0, %v1255
    %v1257 = vtanh.pop %v1243
    %v1258 = vxor.u32 %v1244, 2147483648
    %v1259 = vmul.f32 %v1258, 1.442695
    %v1260 = vpow.pop %v1259
    %v1261 = vadd.f32 %v1260, 1.0
    %v1262 = vrcp.pop %v1261
    %v1263 = vmul.f32 1.0, %v1262
    %v1264 = vmul.f32 %v1256, %v986
    %v1265 = vmul.f32 %v1250, %v1257
    %v1266 = vadd.f32 %v1264, %v1265
    %v1267 = vtanh.pop %v1266
    %v1268 = vmul.f32 %v1263, %v1267
    %1269 = vset.pattern.permute.xlu0 3
    %1270 = vperm.xlu0 %1269, %v1088
    %v1271 = vpop.permute.xlu0 %1270
    %v1273 = vmul.f32 %v1271, %v425
    %1274 = vmatprep.subr.mxu0 0.0
    %1275 = vmatpush1.msra.mxu0 %v208
    %1276 = vmatprep.subr.mxu0 0.0
    %1277 = vmatpush1.msra.mxu0 %v209
    %1278 = vmatprep.subr.mxu0 0.0
    %1279 = vmatpush1.msra.mxu0 %v210
    %1280 = vmatprep.subr.mxu0 0.0
    %1281 = vmatpush1.msra.mxu0 %v211
    %1282 = vmatprep.subr.mxu0 0.0
    %1283 = vmatpush1.msra.mxu0 %v212
    %1284 = vmatprep.subr.mxu0 0.0
    %1285 = vmatpush1.msra.mxu0 %v213
    %1286 = vmatprep.subr.mxu0 0.0
    %1287 = vmatpush1.msra.mxu0 %v214
    %1288 = vmatprep.subr.mxu0 0.0
    %1289 = vmatpush1.msra.mxu0 %v215
    %1290 = vmatprep.subr.mxu0 0.0
    %1291 = vmatpush1.msra.mxu0 %v216
    %1292 = vmatprep.subr.mxu0 0.0
    %1293 = vmatpush1.msra.mxu0 %v217
    %1294 = vmatprep.subr.mxu0 0.0
    %1295 = vmatpush1.msra.mxu0 %v218
    %1296 = vmatprep.subr.mxu0 0.0
    %1297 = vmatpush1.msra.mxu0 %v219
    %1298 = vmatprep.subr.mxu0 0.0
    %1299 = vmatpush1.msra.mxu0 %v220
    %1300 = vmatprep.subr.mxu0 0.0
    %1301 = vmatpush1.msra.mxu0 %v221
    %1302 = vmatprep.subr.mxu0 0.0
    %1303 = vmatpush1.msra.mxu0 %v222
    %1304 = vmatprep.subr.mxu0 0.0
    %1305 = vmatpush1.msra.mxu0 %v223
    %1306 = vmatprep.subr.mxu0 0.0
    %1307 = vmatpush1.msra.mxu0 0.0
    %1308 = vmatprep.subr.mxu0 0.0
    %1309 = vmatpush1.msra.mxu0 0.0
    %1310 = vmatprep.subr.mxu0 0.0
    %1311 = vmatpush1.msra.mxu0 0.0
    %1312 = vmatprep.subr.mxu0 0.0
    %1313 = vmatpush1.msra.mxu0 0.0
    %1314 = vmatprep.subr.mxu0 0.0
    %1315 = vmatpush1.msra.mxu0 0.0
    %1316 = vmatprep.subr.mxu0 0.0
    %1317 = vmatpush1.msra.mxu0 0.0
    %1318 = vmatprep.subr.mxu0 0.0
    %1319 = vmatpush1.msra.mxu0 0.0
    %1320 = vmatprep.subr.mxu0 0.0
    %1321 = vmatpush1.msra.mxu0 0.0
    %1322 = vmatprep.subr.mxu0 0.0
    %1323 = vmatpush1.msra.mxu0 0.0
    %1324 = vmatprep.subr.mxu0 0.0
    %1325 = vmatpush1.msra.mxu0 0.0
    %1326 = vmatprep.subr.mxu0 0.0
    %1327 = vmatpush1.msra.mxu0 0.0
    %1328 = vmatprep.subr.mxu0 0.0
    %1329 = vmatpush1.msra.mxu0 0.0
    %1330 = vmatprep.subr.mxu0 0.0
    %1331 = vmatpush1.msra.mxu0 0.0
    %1332 = vmatprep.subr.mxu0 0.0
    %1333 = vmatpush1.msra.mxu0 0.0
    %1334 = vmatprep.subr.mxu0 0.0
    %1335 = vmatpush1.msra.mxu0 0.0
    %1336 = vmatprep.subr.mxu0 0.0
    %1337 = vmatpush1.msra.mxu0 0.0
    %1338 = vmatprep.mubr.f32.mxu0 0.0
    %1339 = vmatmul.mubr.f32.gmra.mrb[0].mxu0 %v1268
    %v1340 = vpop.f32.mrb[0].mxu0
    %v1341 = vadd.f32 %v1273, %v1340
    %v1342 = vpop.f32.mrb[0].mxu0
    %1343 = vdwg.mxu0
    %v1344 = vadd.f32 %v1341, %v502
    %v1345 = vxor.u32 %v1344, 2147483648
    %v1346 = vmul.f32 %v1345, 1.442695
    %v1347 = vpow.pop %v1346
    %v1348 = vadd.f32 %v1347, 1.0
    %v1349 = vrcp.pop %v1348
    %v1350 = vmul.f32 1.0, %v1349
    %v1351 = vtanh.pop %v1344
    %v1352 = vmul.f32 %v1350, %v1082
    %1354 = vrot.lane.b32.xlu0 %v1351, 126
    %v1355 = vpop.permute.xlu0 %1354
    %v1357 = vmul.f32 %v1350, %v1355
    %1359 = vrot.lane.b32.xlu0 %v1357, 1
    %v1360 = vpop.permute.xlu0 %1359
    %v1362 = vadd.f32 %v1352, %v1360
    %v1363 = vtanh.pop %v1362
    %1365 = vrot.lane.b32.xlu0 %v1363, 2
    %v1366 = vpop.permute.xlu0 %1365
    %v1368 = vmul.f32 %v1350, %v1366
    %vm1369 = vcmask 31768
    %1370 = vst.msk [vmem:[#allocation5] sm:$0xff] %vm1369, %v1368
    %1371 = vmatprep.subr.mxu0 %v144
    %1372 = vmatpush1.msra.mxu0 %v143
    %1373 = vmatprep.subr.mxu0 %v148
    %1374 = vmatpush1.msra.mxu0 %v147
    %1375 = vmatprep.subr.mxu0 %v152
    %1376 = vmatpush1.msra.mxu0 %v151
    %1377 = vmatprep.subr.mxu0 %v156
    %1378 = vmatpush1.msra.mxu0 %v155
    %1379 = vmatprep.subr.mxu0 %v160
    %1380 = vmatpush1.msra.mxu0 %v159
    %1381 = vmatprep.subr.mxu0 %v164
    %1382 = vmatpush1.msra.mxu0 %v163
    %1383 = vmatprep.subr.mxu0 %v168
    %1384 = vmatpush1.msra.mxu0 %v167
    %1385 = vmatprep.subr.mxu0 %v172
    %1386 = vmatpush1.msra.mxu0 %v171
    %1387 = vmatprep.subr.mxu0 %v176
    %1388 = vmatpush1.msra.mxu0 %v175
    %1389 = vmatprep.subr.mxu0 %v180
    %1390 = vmatpush1.msra.mxu0 %v179
    %1391 = vmatprep.subr.mxu0 %v184
    %1392 = vmatpush1.msra.mxu0 %v183
    %1393 = vmatprep.subr.mxu0 %v188
    %1394 = vmatpush1.msra.mxu0 %v187
    %1395 = vmatprep.subr.mxu0 %v192
    %1396 = vmatpush1.msra.mxu0 %v191
    %1397 = vmatprep.subr.mxu0 %v196
    %1398 = vmatpush1.msra.mxu0 %v195
    %1399 = vmatprep.subr.mxu0 %v200
    %1400 = vmatpush1.msra.mxu0 %v199
    %1401 = vmatprep.subr.mxu0 %v204
    %1402 = vmatpush1.msra.mxu0 %v203
    %1403 = vmatprep.subr.mxu0 0.0
    %1404 = vmatpush1.msra.mxu0 0.0
    %1405 = vmatprep.subr.mxu0 0.0
    %1406 = vmatpush1.msra.mxu0 0.0
    %1407 = vmatprep.subr.mxu0 0.0
    %1408 = vmatpush1.msra.mxu0 0.0
    %1409 = vmatprep.subr.mxu0 0.0
    %1410 = vmatpush1.msra.mxu0 0.0
    %1411 = vmatprep.subr.mxu0 0.0
    %1412 = vmatpush1.msra.mxu0 0.0
    %1413 = vmatprep.subr.mxu0 0.0
    %1414 = vmatpush1.msra.mxu0 0.0
    %1415 = vmatprep.subr.mxu0 0.0
    %1416 = vmatpush1.msra.mxu0 0.0
    %1417 = vmatprep.subr.mxu0 0.0
    %1418 = vmatpush1.msra.mxu0 0.0
    %1419 = vmatprep.subr.mxu0 0.0
    %1420 = vmatpush1.msra.mxu0 0.0
    %1421 = vmatprep.subr.mxu0 0.0
    %1422 = vmatpush1.msra.mxu0 0.0
    %1423 = vmatprep.subr.mxu0 0.0
    %1424 = vmatpush1.msra.mxu0 0.0
    %1425 = vmatprep.subr.mxu0 0.0
    %1426 = vmatpush1.msra.mxu0 0.0
    %1427 = vmatprep.subr.mxu0 0.0
    %1428 = vmatpush1.msra.mxu0 0.0
    %1429 = vmatprep.subr.mxu0 0.0
    %1430 = vmatpush1.msra.mxu0 0.0
    %1431 = vmatprep.subr.mxu0 0.0
    %1432 = vmatpush1.msra.mxu0 0.0
    %1433 = vmatprep.subr.mxu0 0.0
    %1434 = vmatpush1.msra.mxu0 0.0
    %1435 = vmatprep.mubr.f32.mxu0 0.0
    %1436 = vmatmul.mubr.f32.gmra.mrb[0].mxu0 %v1268
    %v1437 = vpop.f32.mrb[0].mxu0
    %v1438 = vadd.f32 0.0, %v1437
    %v1439 = vpop.f32.mrb[0].mxu0
    %v1440 = vadd.f32 0.0, %v1439
    %1441 = vdwg.mxu0
    %1442 = vmatprep.subr.mxu0 %v146
    %1443 = vmatpush1.msra.mxu0 %v145
    %1444 = vmatprep.subr.mxu0 %v150
    %1445 = vmatpush1.msra.mxu0 %v149
    %1446 = vmatprep.subr.mxu0 %v154
    %1447 = vmatpush1.msra.mxu0 %v153
    %1448 = vmatprep.subr.mxu0 %v158
    %1449 = vmatpush1.msra.mxu0 %v157
    %1450 = vmatprep.subr.mxu0 %v162
    %1451 = vmatpush1.msra.mxu0 %v161
    %1452 = vmatprep.subr.mxu0 %v166
    %1453 = vmatpush1.msra.mxu0 %v165
    %1454 = vmatprep.subr.mxu0 %v170
    %1455 = vmatpush1.msra.mxu0 %v169
    %1456 = vmatprep.subr.mxu0 %v174
    %1457 = vmatpush1.msra.mxu0 %v173
    %1458 = vmatprep.subr.mxu0 %v178
    %1459 = vmatpush1.msra.mxu0 %v177
    %1460 = vmatprep.subr.mxu0 %v182
    %1461 = vmatpush1.msra.mxu0 %v181
    %1462 = vmatprep.subr.mxu0 %v186
    %1463 = vmatpush1.msra.mxu0 %v185
    %1464 = vmatprep.subr.mxu0 %v190
    %1465 = vmatpush1.msra.mxu0 %v189
    %1466 = vmatprep.subr.mxu0 %v194
    %1467 = vmatpush1.msra.mxu0 %v193
    %1468 = vmatprep.subr.mxu0 %v198
    %1469 = vmatpush1.msra.mxu0 %v197
    %1470 = vmatprep.subr.mxu0 %v202
    %1471 = vmatpush1.msra.mxu0 %v201
    %1472 = vmatprep.subr.mxu0 %v206
    %1473 = vmatpush1.msra.mxu0 %v205
    %1474 = vmatprep.subr.mxu0 0.0
    %1475 = vmatpush1.msra.mxu0 0.0
    %1476 = vmatprep.subr.mxu0 0.0
    %1477 = vmatpush1.msra.mxu0 0.0
    %1478 = vmatprep.subr.mxu0 0.0
    %1479 = vmatpush1.msra.mxu0 0.0
    %1480 = vmatprep.subr.mxu0 0.0
    %1481 = vmatpush1.msra.mxu0 0.0
    %1482 = vmatprep.subr.mxu0 0.0
    %1483 = vmatpush1.msra.mxu0 0.0
    %1484 = vmatprep.subr.mxu0 0.0
    %1485 = vmatpush1.msra.mxu0 0.0
    %1486 = vmatprep.subr.mxu0 0.0
    %1487 = vmatpush1.msra.mxu0 0.0
    %1488 = vmatprep.subr.mxu0 0.0
    %1489 = vmatpush1.msra.mxu0 0.0
    %1490 = vmatprep.subr.mxu0 0.0
    %1491 = vmatpush1.msra.mxu0 0.0
    %1492 = vmatprep.subr.mxu0 0.0
    %1493 = vmatpush1.msra.mxu0 0.0
    %1494 = vmatprep.subr.mxu0 0.0
    %1495 = vmatpush1.msra.mxu0 0.0
    %1496 = vmatprep.subr.mxu0 0.0
    %1497 = vmatpush1.msra.mxu0 0.0
    %1498 = vmatprep.subr.mxu0 0.0
    %1499 = vmatpush1.msra.mxu0 0.0
    %1500 = vmatprep.subr.mxu0 0.0
    %1501 = vmatpush1.msra.mxu0 0.0
    %1502 = vmatprep.subr.mxu0 0.0
    %1503 = vmatpush1.msra.mxu0 0.0
    %1504 = vmatprep.subr.mxu0 0.0
    %1505 = vmatpush1.msra.mxu0 0.0
    %1506 = vmatprep.mubr.f32.mxu0 0.0
    %1507 = vmatmul.mubr.f32.gmra.mrb[0].mxu0 %v1268
    %v1508 = vpop.f32.mrb[0].mxu0
    %v1509 = vadd.f32 0.0, %v1508
    %v1510 = vpop.f32.mrb[0].mxu0
    %v1511 = vadd.f32 0.0, %v1510
    %1512 = vdwg.mxu0
    %v1513 = vadd.f32 %v127, %v1438
    %v1514 = vadd.f32 %v128, %v1440
    %v1515 = vadd.f32 %v129, %v1509
    %v1516 = vadd.f32 %v130, %v1511
    %v1517 = vadd.f32 %v1513, %v376
    %v1518 = vadd.f32 %v1514, %v380
    %v1519 = vadd.f32 %v1515, %v384
    %v1520 = vadd.f32 %v1516, %v388
    %v1521 = vxor.u32 %v1517, 2147483648
    %v1522 = vmul.f32 %v1521, 1.442695
    %v1523 = vpow.pop %v1522
    %v1524 = vadd.f32 %v1523, 1.0
    %v1525 = vrcp.pop %v1524
    %v1526 = vmul.f32 1.0, %v1525
    %v1527 = vxor.u32 %v1518, 2147483648
    %v1528 = vmul.f32 %v1527, 1.442695
    %v1529 = vpow.pop %v1528
    %v1530 = vadd.f32 %v1529, 1.0
    %v1531 = vrcp.pop %v1530
    %v1532 = vmul.f32 1.0, %v1531
    %v1533 = vtanh.pop %v1519
    %v1534 = vxor.u32 %v1520, 2147483648
    %v1535 = vmul.f32 %v1534, 1.442695
    %v1536 = vpow.pop %v1535
    %v1537 = vadd.f32 %v1536, 1.0
    %v1538 = vrcp.pop %v1537
    %v1539 = vmul.f32 1.0, %v1538
    %v1540 = vmul.f32 %v1532, %v1266
    %v1541 = vmul.f32 %v1526, %v1533
    %v1542 = vadd.f32 %v1540, %v1541
    %v1543 = vtanh.pop %v1542
    %v1544 = vmul.f32 %v1539, %v1543
    %1546 = vset.pattern.permute.xlu0 3
    %1547 = vperm.xlu0 %1546, %v1368
    %v1548 = vpop.permute.xlu0 %1547
    %v1550 = vmul.f32 %v1548, %v425
    %1551 = vmatprep.subr.mxu0 0.0
    %1552 = vmatpush1.msra.mxu0 %v208
    %1553 = vmatprep.subr.mxu0 0.0
    %1554 = vmatpush1.msra.mxu0 %v209
    %1555 = vmatprep.subr.mxu0 0.0
    %1556 = vmatpush1.msra.mxu0 %v210
    %1557 = vmatprep.subr.mxu0 0.0
    %1558 = vmatpush1.msra.mxu0 %v211
    %1559 = vmatprep.subr.mxu0 0.0
    %1560 = vmatpush1.msra.mxu0 %v212
    %1561 = vmatprep.subr.mxu0 0.0
    %1562 = vmatpush1.msra.mxu0 %v213
    %1563 = vmatprep.subr.mxu0 0.0
    %1564 = vmatpush1.msra.mxu0 %v214
    %1565 = vmatprep.subr.mxu0 0.0
    %1566 = vmatpush1.msra.mxu0 %v215
    %1567 = vmatprep.subr.mxu0 0.0
    %1568 = vmatpush1.msra.mxu0 %v216
    %1569 = vmatprep.subr.mxu0 0.0
    %1570 = vmatpush1.msra.mxu0 %v217
    %1571 = vmatprep.subr.mxu0 0.0
    %1572 = vmatpush1.msra.mxu0 %v218
    %1573 = vmatprep.subr.mxu0 0.0
    %1574 = vmatpush1.msra.mxu0 %v219
    %1575 = vmatprep.subr.mxu0 0.0
    %1576 = vmatpush1.msra.mxu0 %v220
    %1577 = vmatprep.subr.mxu0 0.0
    %1578 = vmatpush1.msra.mxu0 %v221
    %1579 = vmatprep.subr.mxu0 0.0
    %1580 = vmatpush1.msra.mxu0 %v222
    %1581 = vmatprep.subr.mxu0 0.0
    %1582 = vmatpush1.msra.mxu0 %v223
    %1583 = vmatprep.subr.mxu0 0.0
    %1584 = vmatpush1.msra.mxu0 0.0
    %1585 = vmatprep.subr.mxu0 0.0
    %1586 = vmatpush1.msra.mxu0 0.0
    %1587 = vmatprep.subr.mxu0 0.0
    %1588 = vmatpush1.msra.mxu0 0.0
    %1589 = vmatprep.subr.mxu0 0.0
    %1590 = vmatpush1.msra.mxu0 0.0
    %1591 = vmatprep.subr.mxu0 0.0
    %1592 = vmatpush1.msra.mxu0 0.0
    %1593 = vmatprep.subr.mxu0 0.0
    %1594 = vmatpush1.msra.mxu0 0.0
    %1595 = vmatprep.subr.mxu0 0.0
    %1596 = vmatpush1.msra.mxu0 0.0
    %1597 = vmatprep.subr.mxu0 0.0
    %1598 = vmatpush1.msra.mxu0 0.0
    %1599 = vmatprep.subr.mxu0 0.0
    %1600 = vmatpush1.msra.mxu0 0.0
    %1601 = vmatprep.subr.mxu0 0.0
    %1602 = vmatpush1.msra.mxu0 0.0
    %1603 = vmatprep.subr.mxu0 0.0
    %1604 = vmatpush1.msra.mxu0 0.0
    %1605 = vmatprep.subr.mxu0 0.0
    %1606 = vmatpush1.msra.mxu0 0.0
    %1607 = vmatprep.subr.mxu0 0.0
    %1608 = vmatpush1.msra.mxu0 0.0
    %1609 = vmatprep.subr.mxu0 0.0
    %1610 = vmatpush1.msra.mxu0 0.0
    %1611 = vmatprep.subr.mxu0 0.0
    %1612 = vmatpush1.msra.mxu0 0.0
    %1613 = vmatprep.subr.mxu0 0.0
    %1614 = vmatpush1.msra.mxu0 0.0
    %1615 = vmatprep.mubr.f32.mxu0 0.0
    %1616 = vmatmul.mubr.f32.gmra.mrb[0].mxu0 %v1544
    %v1617 = vpop.f32.mrb[0].mxu0
    %v1618 = vadd.f32 %v1550, %v1617
    %v1619 = vpop.f32.mrb[0].mxu0
    %1620 = vdwg.mxu0
    %v1621 = vadd.f32 %v1618, %v502
    %v1622 = vxor.u32 %v1621, 2147483648
    %v1623 = vmul.f32 %v1622, 1.442695
    %v1624 = vpow.pop %v1623
    %v1625 = vadd.f32 %v1624, 1.0
    %v1626 = vrcp.pop %v1625
    %v1627 = vmul.f32 1.0, %v1626
    %v1628 = vtanh.pop %v1621
    %v1629 = vmul.f32 %v1627, %v1362
    %1631 = vrot.lane.b32.xlu0 %v1628, 126
    %v1632 = vpop.permute.xlu0 %1631
    %v1634 = vmul.f32 %v1627, %v1632
    %1636 = vrot.lane.b32.xlu0 %v1634, 1
    %v1637 = vpop.permute.xlu0 %1636
    %v1639 = vadd.f32 %v1629, %v1637
    %v1640 = vtanh.pop %v1639
    %1642 = vrot.lane.b32.xlu0 %v1640, 2
    %v1643 = vpop.permute.xlu0 %1642
    %v1645 = vmul.f32 %v1627, %v1643
    %1647 = vrot.lane.b32.xlu0 %v1645, 1
    %v1648 = vpop.permute.xlu0 %1647
    %vm1650 = vcmask 39968
    %1651 = vst.msk [vmem:[#allocation5] sm:$0xff] %vm1650, %v1648
    %1652 = vmatprep.subr.mxu0 %v144
    %1653 = vmatpush1.msra.mxu0 %v143
    %1654 = vmatprep.subr.mxu0 %v148
    %1655 = vmatpush1.msra.mxu0 %v147
    %1656 = vmatprep.subr.mxu0 %v152
    %1657 = vmatpush1.msra.mxu0 %v151
    %1658 = vmatprep.subr.mxu0 %v156
    %1659 = vmatpush1.msra.mxu0 %v155
    %1660 = vmatprep.subr.mxu0 %v160
    %1661 = vmatpush1.msra.mxu0 %v159
    %1662 = vmatprep.subr.mxu0 %v164
    %1663 = vmatpush1.msra.mxu0 %v163
    %1664 = vmatprep.subr.mxu0 %v168
    %1665 = vmatpush1.msra.mxu0 %v167
    %1666 = vmatprep.subr.mxu0 %v172
    %1667 = vmatpush1.msra.mxu0 %v171
    %1668 = vmatprep.subr.mxu0 %v176
    %1669 = vmatpush1.msra.mxu0 %v175
    %1670 = vmatprep.subr.mxu0 %v180
    %1671 = vmatpush1.msra.mxu0 %v179
    %1672 = vmatprep.subr.mxu0 %v184
    %1673 = vmatpush1.msra.mxu0 %v183
    %1674 = vmatprep.subr.mxu0 %v188
    %1675 = vmatpush1.msra.mxu0 %v187
    %1676 = vmatprep.subr.mxu0 %v192
    %1677 = vmatpush1.msra.mxu0 %v191
    %1678 = vmatprep.subr.mxu0 %v196
    %1679 = vmatpush1.msra.mxu0 %v195
    %1680 = vmatprep.subr.mxu0 %v200
    %1681 = vmatpush1.msra.mxu0 %v199
    %1682 = vmatprep.subr.mxu0 %v204
    %1683 = vmatpush1.msra.mxu0 %v203
    %1684 = vmatprep.subr.mxu0 0.0
    %1685 = vmatpush1.msra.mxu0 0.0
    %1686 = vmatprep.subr.mxu0 0.0
    %1687 = vmatpush1.msra.mxu0 0.0
    %1688 = vmatprep.subr.mxu0 0.0
    %1689 = vmatpush1.msra.mxu0 0.0
    %1690 = vmatprep.subr.mxu0 0.0
    %1691 = vmatpush1.msra.mxu0 0.0
    %1692 = vmatprep.subr.mxu0 0.0
    %1693 = vmatpush1.msra.mxu0 0.0
    %1694 = vmatprep.subr.mxu0 0.0
    %1695 = vmatpush1.msra.mxu0 0.0
    %1696 = vmatprep.subr.mxu0 0.0
    %1697 = vmatpush1.msra.mxu0 0.0
    %1698 = vmatprep.subr.mxu0 0.0
    %1699 = vmatpush1.msra.mxu0 0.0
    %1700 = vmatprep.subr.mxu0 0.0
    %1701 = vmatpush1.msra.mxu0 0.0
    %1702 = vmatprep.subr.mxu0 0.0
    %1703 = vmatpush1.msra.mxu0 0.0
    %1704 = vmatprep.subr.mxu0 0.0
    %1705 = vmatpush1.msra.mxu0 0.0
    %1706 = vmatprep.subr.mxu0 0.0
    %1707 = vmatpush1.msra.mxu0 0.0
    %1708 = vmatprep.subr.mxu0 0.0
    %1709 = vmatpush1.msra.mxu0 0.0
    %1710 = vmatprep.subr.mxu0 0.0
    %1711 = vmatpush1.msra.mxu0 0.0
    %1712 = vmatprep.subr.mxu0 0.0
    %1713 = vmatpush1.msra.mxu0 0.0
    %1714 = vmatprep.subr.mxu0 0.0
    %1715 = vmatpush1.msra.mxu0 0.0
    %1716 = vmatprep.mubr.f32.mxu0 0.0
    %1717 = vmatmul.mubr.f32.gmra.mrb[0].mxu0 %v1544
    %v1718 = vpop.f32.mrb[0].mxu0
    %v1719 = vadd.f32 0.0, %v1718
    %v1720 = vpop.f32.mrb[0].mxu0
    %v1721 = vadd.f32 0.0, %v1720
    %1722 = vdwg.mxu0
    %1723 = vmatprep.subr.mxu0 %v146
    %1724 = vmatpush1.msra.mxu0 %v145
    %1725 = vmatprep.subr.mxu0 %v150
    %1726 = vmatpush1.msra.mxu0 %v149
    %1727 = vmatprep.subr.mxu0 %v154
    %1728 = vmatpush1.msra.mxu0 %v153
    %1729 = vmatprep.subr.mxu0 %v158
    %1730 = vmatpush1.msra.mxu0 %v157
    %1731 = vmatprep.subr.mxu0 %v162
    %1732 = vmatpush1.msra.mxu0 %v161
    %1733 = vmatprep.subr.mxu0 %v166
    %1734 = vmatpush1.msra.mxu0 %v165
    %1735 = vmatprep.subr.mxu0 %v170
    %1736 = vmatpush1.msra.mxu0 %v169
    %1737 = vmatprep.subr.mxu0 %v174
    %1738 = vmatpush1.msra.mxu0 %v173
    %1739 = vmatprep.subr.mxu0 %v178
    %1740 = vmatpush1.msra.mxu0 %v177
    %1741 = vmatprep.subr.mxu0 %v182
    %1742 = vmatpush1.msra.mxu0 %v181
    %1743 = vmatprep.subr.mxu0 %v186
    %1744 = vmatpush1.msra.mxu0 %v185
    %1745 = vmatprep.subr.mxu0 %v190
    %1746 = vmatpush1.msra.mxu0 %v189
    %1747 = vmatprep.subr.mxu0 %v194
    %1748 = vmatpush1.msra.mxu0 %v193
    %1749 = vmatprep.subr.mxu0 %v198
    %1750 = vmatpush1.msra.mxu0 %v197
    %1751 = vmatprep.subr.mxu0 %v202
    %1752 = vmatpush1.msra.mxu0 %v201
    %1753 = vmatprep.subr.mxu0 %v206
    %1754 = vmatpush1.msra.mxu0 %v205
    %1755 = vmatprep.subr.mxu0 0.0
    %1756 = vmatpush1.msra.mxu0 0.0
    %1757 = vmatprep.subr.mxu0 0.0
    %1758 = vmatpush1.msra.mxu0 0.0
    %1759 = vmatprep.subr.mxu0 0.0
    %1760 = vmatpush1.msra.mxu0 0.0
    %1761 = vmatprep.subr.mxu0 0.0
    %1762 = vmatpush1.msra.mxu0 0.0
    %1763 = vmatprep.subr.mxu0 0.0
    %1764 = vmatpush1.msra.mxu0 0.0
    %1765 = vmatprep.subr.mxu0 0.0
    %1766 = vmatpush1.msra.mxu0 0.0
    %1767 = vmatprep.subr.mxu0 0.0
    %1768 = vmatpush1.msra.mxu0 0.0
    %1769 = vmatprep.subr.mxu0 0.0
    %1770 = vmatpush1.msra.mxu0 0.0
    %1771 = vmatprep.subr.mxu0 0.0
    %1772 = vmatpush1.msra.mxu0 0.0
    %1773 = vmatprep.subr.mxu0 0.0
    %1774 = vmatpush1.msra.mxu0 0.0
    %1775 = vmatprep.subr.mxu0 0.0
    %1776 = vmatpush1.msra.mxu0 0.0
    %1777 = vmatprep.subr.mxu0 0.0
    %1778 = vmatpush1.msra.mxu0 0.0
    %1779 = vmatprep.subr.mxu0 0.0
    %1780 = vmatpush1.msra.mxu0 0.0
    %1781 = vmatprep.subr.mxu0 0.0
    %1782 = vmatpush1.msra.mxu0 0.0
    %1783 = vmatprep.subr.mxu0 0.0
    %1784 = vmatpush1.msra.mxu0 0.0
    %1785 = vmatprep.subr.mxu0 0.0
    %1786 = vmatpush1.msra.mxu0 0.0
    %1787 = vmatprep.mubr.f32.mxu0 0.0
    %1788 = vmatmul.mubr.f32.gmra.mrb[0].mxu0 %v1544
    %v1789 = vpop.f32.mrb[0].mxu0
    %v1790 = vadd.f32 0.0, %v1789
    %v1791 = vpop.f32.mrb[0].mxu0
    %v1792 = vadd.f32 0.0, %v1791
    %1793 = vdwg.mxu0
    %v1794 = vadd.f32 %v131, %v1719
    %v1795 = vadd.f32 %v132, %v1721
    %v1796 = vadd.f32 %v133, %v1790
    %v1797 = vadd.f32 %v134, %v1792
    %v1798 = vadd.f32 %v1794, %v376
    %v1799 = vadd.f32 %v1795, %v380
    %v1800 = vadd.f32 %v1796, %v384
    %v1801 = vadd.f32 %v1797, %v388
    %v1802 = vxor.u32 %v1798, 2147483648
    %v1803 = vmul.f32 %v1802, 1.442695
    %v1804 = vpow.pop %v1803
    %v1805 = vadd.f32 %v1804, 1.0
    %v1806 = vrcp.pop %v1805
    %v1807 = vmul.f32 1.0, %v1806
    %v1808 = vxor.u32 %v1799, 2147483648
    %v1809 = vmul.f32 %v1808, 1.442695
    %v1810 = vpow.pop %v1809
    %v1811 = vadd.f32 %v1810, 1.0
    %v1812 = vrcp.pop %v1811
    %v1813 = vmul.f32 1.0, %v1812
    %v1814 = vtanh.pop %v1800
    %v1815 = vxor.u32 %v1801, 2147483648
    %v1816 = vmul.f32 %v1815, 1.442695
    %v1817 = vpow.pop %v1816
    %v1818 = vadd.f32 %v1817, 1.0
    %v1819 = vrcp.pop %v1818
    %v1820 = vmul.f32 1.0, %v1819
    %v1821 = vmul.f32 %v1813, %v1542
    %v1822 = vmul.f32 %v1807, %v1814
    %v1823 = vadd.f32 %v1821, %v1822
    %v1824 = vtanh.pop %v1823
    %v1825 = vmul.f32 %v1820, %v1824
    %1826 = vset.pattern.permute.xlu0 3
    %1827 = vperm.xlu0 %1826, %v1645
    %v1828 = vpop.permute.xlu0 %1827
    %v1830 = vmul.f32 %v1828, %v425
    %1831 = vmatprep.subr.mxu0 0.0
    %1832 = vmatpush1.msra.mxu0 %v208
    %1833 = vmatprep.subr.mxu0 0.0
    %1834 = vmatpush1.msra.mxu0 %v209
    %1835 = vmatprep.subr.mxu0 0.0
    %1836 = vmatpush1.msra.mxu0 %v210
    %1837 = vmatprep.subr.mxu0 0.0
    %1838 = vmatpush1.msra.mxu0 %v211
    %1839 = vmatprep.subr.mxu0 0.0
    %1840 = vmatpush1.msra.mxu0 %v212
    %1841 = vmatprep.subr.mxu0 0.0
    %1842 = vmatpush1.msra.mxu0 %v213
    %1843 = vmatprep.subr.mxu0 0.0
    %1844 = vmatpush1.msra.mxu0 %v214
    %1845 = vmatprep.subr.mxu0 0.0
    %1846 = vmatpush1.msra.mxu0 %v215
    %1847 = vmatprep.subr.mxu0 0.0
    %1848 = vmatpush1.msra.mxu0 %v216
    %1849 = vmatprep.subr.mxu0 0.0
    %1850 = vmatpush1.msra.mxu0 %v217
    %1851 = vmatprep.subr.mxu0 0.0
    %1852 = vmatpush1.msra.mxu0 %v218
    %1853 = vmatprep.subr.mxu0 0.0
    %1854 = vmatpush1.msra.mxu0 %v219
    %1855 = vmatprep.subr.mxu0 0.0
    %1856 = vmatpush1.msra.mxu0 %v220
    %1857 = vmatprep.subr.mxu0 0.0
    %1858 = vmatpush1.msra.mxu0 %v221
    %1859 = vmatprep.subr.mxu0 0.0
    %1860 = vmatpush1.msra.mxu0 %v222
    %1861 = vmatprep.subr.mxu0 0.0
    %1862 = vmatpush1.msra.mxu0 %v223
    %1863 = vmatprep.subr.mxu0 0.0
    %1864 = vmatpush1.msra.mxu0 0.0
    %1865 = vmatprep.subr.mxu0 0.0
    %1866 = vmatpush1.msra.mxu0 0.0
    %1867 = vmatprep.subr.mxu0 0.0
    %1868 = vmatpush1.msra.mxu0 0.0
    %1869 = vmatprep.subr.mxu0 0.0
    %1870 = vmatpush1.msra.mxu0 0.0
    %1871 = vmatprep.subr.mxu0 0.0
    %1872 = vmatpush1.msra.mxu0 0.0
    %1873 = vmatprep.subr.mxu0 0.0
    %1874 = vmatpush1.msra.mxu0 0.0
    %1875 = vmatprep.subr.mxu0 0.0
    %1876 = vmatpush1.msra.mxu0 0.0
    %1877 = vmatprep.subr.mxu0 0.0
    %1878 = vmatpush1.msra.mxu0 0.0
    %1879 = vmatprep.subr.mxu0 0.0
    %1880 = vmatpush1.msra.mxu0 0.0
    %1881 = vmatprep.subr.mxu0 0.0
    %1882 = vmatpush1.msra.mxu0 0.0
    %1883 = vmatprep.subr.mxu0 0.0
    %1884 = vmatpush1.msra.mxu0 0.0
    %1885 = vmatprep.subr.mxu0 0.0
    %1886 = vmatpush1.msra.mxu0 0.0
    %1887 = vmatprep.subr.mxu0 0.0
    %1888 = vmatpush1.msra.mxu0 0.0
    %1889 = vmatprep.subr.mxu0 0.0
    %1890 = vmatpush1.msra.mxu0 0.0
    %1891 = vmatprep.subr.mxu0 0.0
    %1892 = vmatpush1.msra.mxu0 0.0
    %1893 = vmatprep.subr.mxu0 0.0
    %1894 = vmatpush1.msra.mxu0 0.0
    %1895 = vmatprep.mubr.f32.mxu0 0.0
    %1896 = vmatmul.mubr.f32.gmra.mrb[0].mxu0 %v1825
    %v1897 = vpop.f32.mrb[0].mxu0
    %v1898 = vadd.f32 %v1830, %v1897
    %v1899 = vpop.f32.mrb[0].mxu0
    %1900 = vdwg.mxu0
    %v1901 = vadd.f32 %v1898, %v502
    %v1902 = vxor.u32 %v1901, 2147483648
    %v1903 = vmul.f32 %v1902, 1.442695
    %v1904 = vpow.pop %v1903
    %v1905 = vadd.f32 %v1904, 1.0
    %v1906 = vrcp.pop %v1905
    %v1907 = vmul.f32 1.0, %v1906
    %v1908 = vtanh.pop %v1901
    %v1909 = vmul.f32 %v1907, %v1639
    %1911 = vrot.lane.b32.xlu0 %v1908, 126
    %v1912 = vpop.permute.xlu0 %1911
    %v1914 = vmul.f32 %v1907, %v1912
    %1916 = vrot.lane.b32.xlu0 %v1914, 1
    %v1917 = vpop.permute.xlu0 %1916
    %v1919 = vadd.f32 %v1909, %v1917
    %v1920 = vtanh.pop %v1919
    %1922 = vrot.lane.b32.xlu0 %v1920, 2
    %v1923 = vpop.permute.xlu0 %1922
    %v1925 = vmul.f32 %v1907, %v1923
    %1927 = vrot.lane.b32.xlu0 %v1925, 2
    %v1928 = vpop.permute.xlu0 %1927
    %vm1930 = vcmask 48168
    %1931 = vst.msk [vmem:[#allocation5] sm:$0xff] %vm1930, %v1928
    %1932 = vmatprep.subr.mxu0 %v144
    %1933 = vmatpush1.msra.mxu0 %v143
    %1934 = vmatprep.subr.mxu0 %v148
    %1935 = vmatpush1.msra.mxu0 %v147
    %1936 = vmatprep.subr.mxu0 %v152
    %1937 = vmatpush1.msra.mxu0 %v151
    %1938 = vmatprep.subr.mxu0 %v156
    %1939 = vmatpush1.msra.mxu0 %v155
    %1940 = vmatprep.subr.mxu0 %v160
    %1941 = vmatpush1.msra.mxu0 %v159
    %1942 = vmatprep.subr.mxu0 %v164
    %1943 = vmatpush1.msra.mxu0 %v163
    %1944 = vmatprep.subr.mxu0 %v168
    %1945 = vmatpush1.msra.mxu0 %v167
    %1946 = vmatprep.subr.mxu0 %v172
    %1947 = vmatpush1.msra.mxu0 %v171
    %1948 = vmatprep.subr.mxu0 %v176
    %1949 = vmatpush1.msra.mxu0 %v175
    %1950 = vmatprep.subr.mxu0 %v180
    %1951 = vmatpush1.msra.mxu0 %v179
    %1952 = vmatprep.subr.mxu0 %v184
    %1953 = vmatpush1.msra.mxu0 %v183
    %1954 = vmatprep.subr.mxu0 %v188
    %1955 = vmatpush1.msra.mxu0 %v187
    %1956 = vmatprep.subr.mxu0 %v192
    %1957 = vmatpush1.msra.mxu0 %v191
    %1958 = vmatprep.subr.mxu0 %v196
    %1959 = vmatpush1.msra.mxu0 %v195
    %1960 = vmatprep.subr.mxu0 %v200
    %1961 = vmatpush1.msra.mxu0 %v199
    %1962 = vmatprep.subr.mxu0 %v204
    %1963 = vmatpush1.msra.mxu0 %v203
    %1964 = vmatprep.subr.mxu0 0.0
    %1965 = vmatpush1.msra.mxu0 0.0
    %1966 = vmatprep.subr.mxu0 0.0
    %1967 = vmatpush1.msra.mxu0 0.0
    %1968 = vmatprep.subr.mxu0 0.0
    %1969 = vmatpush1.msra.mxu0 0.0
    %1970 = vmatprep.subr.mxu0 0.0
    %1971 = vmatpush1.msra.mxu0 0.0
    %1972 = vmatprep.subr.mxu0 0.0
    %1973 = vmatpush1.msra.mxu0 0.0
    %1974 = vmatprep.subr.mxu0 0.0
    %1975 = vmatpush1.msra.mxu0 0.0
    %1976 = vmatprep.subr.mxu0 0.0
    %1977 = vmatpush1.msra.mxu0 0.0
    %1978 = vmatprep.subr.mxu0 0.0
    %1979 = vmatpush1.msra.mxu0 0.0
    %1980 = vmatprep.subr.mxu0 0.0
    %1981 = vmatpush1.msra.mxu0 0.0
    %1982 = vmatprep.subr.mxu0 0.0
    %1983 = vmatpush1.msra.mxu0 0.0
    %1984 = vmatprep.subr.mxu0 0.0
    %1985 = vmatpush1.msra.mxu0 0.0
    %1986 = vmatprep.subr.mxu0 0.0
    %1987 = vmatpush1.msra.mxu0 0.0
    %1988 = vmatprep.subr.mxu0 0.0
    %1989 = vmatpush1.msra.mxu0 0.0
    %1990 = vmatprep.subr.mxu0 0.0
    %1991 = vmatpush1.msra.mxu0 0.0
    %1992 = vmatprep.subr.mxu0 0.0
    %1993 = vmatpush1.msra.mxu0 0.0
    %1994 = vmatprep.subr.mxu0 0.0
    %1995 = vmatpush1.msra.mxu0 0.0
    %1996 = vmatprep.mubr.f32.mxu0 0.0
    %1997 = vmatmul.mubr.f32.gmra.mrb[0].mxu0 %v1825
    %v1998 = vpop.f32.mrb[0].mxu0
    %v1999 = vadd.f32 0.0, %v1998
    %v2000 = vpop.f32.mrb[0].mxu0
    %v2001 = vadd.f32 0.0, %v2000
    %2002 = vdwg.mxu0
    %2003 = vmatprep.subr.mxu0 %v146
    %2004 = vmatpush1.msra.mxu0 %v145
    %2005 = vmatprep.subr.mxu0 %v150
    %2006 = vmatpush1.msra.mxu0 %v149
    %2007 = vmatprep.subr.mxu0 %v154
    %2008 = vmatpush1.msra.mxu0 %v153
    %2009 = vmatprep.subr.mxu0 %v158
    %2010 = vmatpush1.msra.mxu0 %v157
    %2011 = vmatprep.subr.mxu0 %v162
    %2012 = vmatpush1.msra.mxu0 %v161
    %2013 = vmatprep.subr.mxu0 %v166
    %2014 = vmatpush1.msra.mxu0 %v165
    %2015 = vmatprep.subr.mxu0 %v170
    %2016 = vmatpush1.msra.mxu0 %v169
    %2017 = vmatprep.subr.mxu0 %v174
    %2018 = vmatpush1.msra.mxu0 %v173
    %2019 = vmatprep.subr.mxu0 %v178
    %2020 = vmatpush1.msra.mxu0 %v177
    %2021 = vmatprep.subr.mxu0 %v182
    %2022 = vmatpush1.msra.mxu0 %v181
    %2023 = vmatprep.subr.mxu0 %v186
    %2024 = vmatpush1.msra.mxu0 %v185
    %2025 = vmatprep.subr.mxu0 %v190
    %2026 = vmatpush1.msra.mxu0 %v189
    %2027 = vmatprep.subr.mxu0 %v194
    %2028 = vmatpush1.msra.mxu0 %v193
    %2029 = vmatprep.subr.mxu0 %v198
    %2030 = vmatpush1.msra.mxu0 %v197
    %2031 = vmatprep.subr.mxu0 %v202
    %2032 = vmatpush1.msra.mxu0 %v201
    %2033 = vmatprep.subr.mxu0 %v206
    %2034 = vmatpush1.msra.mxu0 %v205
    %2035 = vmatprep.subr.mxu0 0.0
    %2036 = vmatpush1.msra.mxu0 0.0
    %2037 = vmatprep.subr.mxu0 0.0
    %2038 = vmatpush1.msra.mxu0 0.0
    %2039 = vmatprep.subr.mxu0 0.0
    %2040 = vmatpush1.msra.mxu0 0.0
    %2041 = vmatprep.subr.mxu0 0.0
    %2042 = vmatpush1.msra.mxu0 0.0
    %2043 = vmatprep.subr.mxu0 0.0
    %2044 = vmatpush1.msra.mxu0 0.0
    %2045 = vmatprep.subr.mxu0 0.0
    %2046 = vmatpush1.msra.mxu0 0.0
    %2047 = vmatprep.subr.mxu0 0.0
    %2048 = vmatpush1.msra.mxu0 0.0
    %2049 = vmatprep.subr.mxu0 0.0
    %2050 = vmatpush1.msra.mxu0 0.0
    %2051 = vmatprep.subr.mxu0 0.0
    %2052 = vmatpush1.msra.mxu0 0.0
    %2053 = vmatprep.subr.mxu0 0.0
    %2054 = vmatpush1.msra.mxu0 0.0
    %2055 = vmatprep.subr.mxu0 0.0
    %2056 = vmatpush1.msra.mxu0 0.0
    %2057 = vmatprep.subr.mxu0 0.0
    %2058 = vmatpush1.msra.mxu0 0.0
    %2059 = vmatprep.subr.mxu0 0.0
    %2060 = vmatpush1.msra.mxu0 0.0
    %2061 = vmatprep.subr.mxu0 0.0
    %2062 = vmatpush1.msra.mxu0 0.0
    %2063 = vmatprep.subr.mxu0 0.0
    %2064 = vmatpush1.msra.mxu0 0.0
    %2065 = vmatprep.subr.mxu0 0.0
    %2066 = vmatpush1.msra.mxu0 0.0
    %2067 = vmatprep.mubr.f32.mxu0 0.0
    %2068 = vmatmul.mubr.f32.gmra.mrb[0].mxu0 %v1825
    %v2069 = vpop.f32.mrb[0].mxu0
    %v2070 = vadd.f32 0.0, %v2069
    %v2071 = vpop.f32.mrb[0].mxu0
    %v2072 = vadd.f32 0.0, %v2071
    %2073 = vdwg.mxu0
    %v2074 = vadd.f32 %v135, %v1999
    %v2075 = vadd.f32 %v136, %v2001
    %v2076 = vadd.f32 %v137, %v2070
    %v2077 = vadd.f32 %v138, %v2072
    %v2078 = vadd.f32 %v2074, %v376
    %v2079 = vadd.f32 %v2075, %v380
    %v2080 = vadd.f32 %v2076, %v384
    %v2081 = vadd.f32 %v2077, %v388
    %v2082 = vxor.u32 %v2078, 2147483648
    %v2083 = vmul.f32 %v2082, 1.442695
    %v2084 = vpow.pop %v2083
    %v2085 = vadd.f32 %v2084, 1.0
    %v2086 = vrcp.pop %v2085
    %v2087 = vmul.f32 1.0, %v2086
    %v2088 = vxor.u32 %v2079, 2147483648
    %v2089 = vmul.f32 %v2088, 1.442695
    %v2090 = vpow.pop %v2089
    %v2091 = vadd.f32 %v2090, 1.0
    %v2092 = vrcp.pop %v2091
    %v2093 = vmul.f32 1.0, %v2092
    %v2094 = vtanh.pop %v2080
    %v2095 = vxor.u32 %v2081, 2147483648
    %v2096 = vmul.f32 %v2095, 1.442695
    %v2097 = vpow.pop %v2096
    %v2098 = vadd.f32 %v2097, 1.0
    %v2099 = vrcp.pop %v2098
    %v2100 = vmul.f32 1.0, %v2099
    %v2101 = vmul.f32 %v2093, %v1823
    %v2102 = vmul.f32 %v2087, %v2094
    %v2103 = vadd.f32 %v2101, %v2102
    %v2104 = vtanh.pop %v2103
    %v2105 = vmul.f32 %v2100, %v2104
    %2106 = vset.pattern.permute.xlu0 3
    %2107 = vperm.xlu0 %2106, %v1925
    %v2108 = vpop.permute.xlu0 %2107
    %v2110 = vmul.f32 %v2108, %v425
    %2111 = vmatprep.subr.mxu0 0.0
    %2112 = vmatpush1.msra.mxu0 %v208
    %2113 = vmatprep.subr.mxu0 0.0
    %2114 = vmatpush1.msra.mxu0 %v209
    %2115 = vmatprep.subr.mxu0 0.0
    %2116 = vmatpush1.msra.mxu0 %v210
    %2117 = vmatprep.subr.mxu0 0.0
    %2118 = vmatpush1.msra.mxu0 %v211
    %2119 = vmatprep.subr.mxu0 0.0
    %2120 = vmatpush1.msra.mxu0 %v212
    %2121 = vmatprep.subr.mxu0 0.0
    %2122 = vmatpush1.msra.mxu0 %v213
    %2123 = vmatprep.subr.mxu0 0.0
    %2124 = vmatpush1.msra.mxu0 %v214
    %2125 = vmatprep.subr.mxu0 0.0
    %2126 = vmatpush1.msra.mxu0 %v215
    %2127 = vmatprep.subr.mxu0 0.0
    %2128 = vmatpush1.msra.mxu0 %v216
    %2129 = vmatprep.subr.mxu0 0.0
    %2130 = vmatpush1.msra.mxu0 %v217
    %2131 = vmatprep.subr.mxu0 0.0
    %2132 = vmatpush1.msra.mxu0 %v218
    %2133 = vmatprep.subr.mxu0 0.0
    %2134 = vmatpush1.msra.mxu0 %v219
    %2135 = vmatprep.subr.mxu0 0.0
    %2136 = vmatpush1.msra.mxu0 %v220
    %2137 = vmatprep.subr.mxu0 0.0
    %2138 = vmatpush1.msra.mxu0 %v221
    %2139 = vmatprep.subr.mxu0 0.0
    %2140 = vmatpush1.msra.mxu0 %v222
    %2141 = vmatprep.subr.mxu0 0.0
    %2142 = vmatpush1.msra.mxu0 %v223
    %2143 = vmatprep.subr.mxu0 0.0
    %2144 = vmatpush1.msra.mxu0 0.0
    %2145 = vmatprep.subr.mxu0 0.0
    %2146 = vmatpush1.msra.mxu0 0.0
    %2147 = vmatprep.subr.mxu0 0.0
    %2148 = vmatpush1.msra.mxu0 0.0
    %2149 = vmatprep.subr.mxu0 0.0
    %2150 = vmatpush1.msra.mxu0 0.0
    %2151 = vmatprep.subr.mxu0 0.0
    %2152 = vmatpush1.msra.mxu0 0.0
    %2153 = vmatprep.subr.mxu0 0.0
    %2154 = vmatpush1.msra.mxu0 0.0
    %2155 = vmatprep.subr.mxu0 0.0
    %2156 = vmatpush1.msra.mxu0 0.0
    %2157 = vmatprep.subr.mxu0 0.0
    %2158 = vmatpush1.msra.mxu0 0.0
    %2159 = vmatprep.subr.mxu0 0.0
    %2160 = vmatpush1.msra.mxu0 0.0
    %2161 = vmatprep.subr.mxu0 0.0
    %2162 = vmatpush1.msra.mxu0 0.0
    %2163 = vmatprep.subr.mxu0 0.0
    %2164 = vmatpush1.msra.mxu0 0.0
    %2165 = vmatprep.subr.mxu0 0.0
    %2166 = vmatpush1.msra.mxu0 0.0
    %2167 = vmatprep.subr.mxu0 0.0
    %2168 = vmatpush1.msra.mxu0 0.0
    %2169 = vmatprep.subr.mxu0 0.0
    %2170 = vmatpush1.msra.mxu0 0.0
    %2171 = vmatprep.subr.mxu0 0.0
    %2172 = vmatpush1.msra.mxu0 0.0
    %2173 = vmatprep.subr.mxu0 0.0
    %2174 = vmatpush1.msra.mxu0 0.0
    %2175 = vmatprep.mubr.f32.mxu0 0.0
    %2176 = vmatmul.mubr.f32.gmra.mrb[0].mxu0 %v2105
    %v2177 = vpop.f32.mrb[0].mxu0
    %v2178 = vadd.f32 %v2110, %v2177
    %v2179 = vpop.f32.mrb[0].mxu0
    %2180 = vdwg.mxu0
    %v2181 = vadd.f32 %v2178, %v502
    %v2182 = vxor.u32 %v2181, 2147483648
    %v2183 = vmul.f32 %v2182, 1.442695
    %v2184 = vpow.pop %v2183
    %v2185 = vadd.f32 %v2184, 1.0
    %v2186 = vrcp.pop %v2185
    %v2187 = vmul.f32 1.0, %v2186
    %v2188 = vtanh.pop %v2181
    %v2189 = vmul.f32 %v2187, %v1919
    %2191 = vrot.lane.b32.xlu0 %v2188, 126
    %v2192 = vpop.permute.xlu0 %2191
    %v2194 = vmul.f32 %v2187, %v2192
    %2196 = vrot.lane.b32.xlu0 %v2194, 1
    %v2197 = vpop.permute.xlu0 %2196
    %v2199 = vadd.f32 %v2189, %v2197
    %v2200 = vtanh.pop %v2199
    %2202 = vrot.lane.b32.xlu0 %v2200, 2
    %v2203 = vpop.permute.xlu0 %2202
    %v2205 = vmul.f32 %v2187, %v2203
    %2207 = vrot.lane.b32.xlu0 %v2205, 3
    %v2208 = vpop.permute.xlu0 %2207
    %vm2210 = vcmask 56368
    %2211 = vst.msk [vmem:[#allocation5] sm:$0xff] %vm2210, %v2208
    %2212 = vmatprep.subr.mxu0 %v144
    %2213 = vmatpush1.msra.mxu0 %v143
    %2214 = vmatprep.subr.mxu0 %v148
    %2215 = vmatpush1.msra.mxu0 %v147
    %2216 = vmatprep.subr.mxu0 %v152
    %2217 = vmatpush1.msra.mxu0 %v151
    %2218 = vmatprep.subr.mxu0 %v156
    %2219 = vmatpush1.msra.mxu0 %v155
    %2220 = vmatprep.subr.mxu0 %v160
    %2221 = vmatpush1.msra.mxu0 %v159
    %2222 = vmatprep.subr.mxu0 %v164
    %2223 = vmatpush1.msra.mxu0 %v163
    %2224 = vmatprep.subr.mxu0 %v168
    %2225 = vmatpush1.msra.mxu0 %v167
    %2226 = vmatprep.subr.mxu0 %v172
    %2227 = vmatpush1.msra.mxu0 %v171
    %2228 = vmatprep.subr.mxu0 %v176
    %2229 = vmatpush1.msra.mxu0 %v175
    %2230 = vmatprep.subr.mxu0 %v180
    %2231 = vmatpush1.msra.mxu0 %v179
    %2232 = vmatprep.subr.mxu0 %v184
    %2233 = vmatpush1.msra.mxu0 %v183
    %2234 = vmatprep.subr.mxu0 %v188
    %2235 = vmatpush1.msra.mxu0 %v187
    %2236 = vmatprep.subr.mxu0 %v192
    %2237 = vmatpush1.msra.mxu0 %v191
    %2238 = vmatprep.subr.mxu0 %v196
    %2239 = vmatpush1.msra.mxu0 %v195
    %2240 = vmatprep.subr.mxu0 %v200
    %2241 = vmatpush1.msra.mxu0 %v199
    %2242 = vmatprep.subr.mxu0 %v204
    %2243 = vmatpush1.msra.mxu0 %v203
    %2244 = vmatprep.subr.mxu0 0.0
    %2245 = vmatpush1.msra.mxu0 0.0
    %2246 = vmatprep.subr.mxu0 0.0
    %2247 = vmatpush1.msra.mxu0 0.0
    %2248 = vmatprep.subr.mxu0 0.0
    %2249 = vmatpush1.msra.mxu0 0.0
    %2250 = vmatprep.subr.mxu0 0.0
    %2251 = vmatpush1.msra.mxu0 0.0
    %2252 = vmatprep.subr.mxu0 0.0
    %2253 = vmatpush1.msra.mxu0 0.0
    %2254 = vmatprep.subr.mxu0 0.0
    %2255 = vmatpush1.msra.mxu0 0.0
    %2256 = vmatprep.subr.mxu0 0.0
    %2257 = vmatpush1.msra.mxu0 0.0
    %2258 = vmatprep.subr.mxu0 0.0
    %2259 = vmatpush1.msra.mxu0 0.0
    %2260 = vmatprep.subr.mxu0 0.0
    %2261 = vmatpush1.msra.mxu0 0.0
    %2262 = vmatprep.subr.mxu0 0.0
    %2263 = vmatpush1.msra.mxu0 0.0
    %2264 = vmatprep.subr.mxu0 0.0
    %2265 = vmatpush1.msra.mxu0 0.0
    %2266 = vmatprep.subr.mxu0 0.0
    %2267 = vmatpush1.msra.mxu0 0.0
    %2268 = vmatprep.subr.mxu0 0.0
    %2269 = vmatpush1.msra.mxu0 0.0
    %2270 = vmatprep.subr.mxu0 0.0
    %2271 = vmatpush1.msra.mxu0 0.0
    %2272 = vmatprep.subr.mxu0 0.0
    %2273 = vmatpush1.msra.mxu0 0.0
    %2274 = vmatprep.subr.mxu0 0.0
    %2275 = vmatpush1.msra.mxu0 0.0
    %2276 = vmatprep.mubr.f32.mxu0 0.0
    %2277 = vmatmul.mubr.f32.gmra.mrb[0].mxu0 %v2105
    %v2278 = vpop.f32.mrb[0].mxu0
    %v2279 = vadd.f32 0.0, %v2278
    %v2280 = vpop.f32.mrb[0].mxu0
    %v2281 = vadd.f32 0.0, %v2280
    %2282 = vdwg.mxu0
    %2283 = vmatprep.subr.mxu0 %v146
    %2284 = vmatpush1.msra.mxu0 %v145
    %2285 = vmatprep.subr.mxu0 %v150
    %2286 = vmatpush1.msra.mxu0 %v149
    %2287 = vmatprep.subr.mxu0 %v154
    %2288 = vmatpush1.msra.mxu0 %v153
    %2289 = vmatprep.subr.mxu0 %v158
    %2290 = vmatpush1.msra.mxu0 %v157
    %2291 = vmatprep.subr.mxu0 %v162
    %2292 = vmatpush1.msra.mxu0 %v161
    %2293 = vmatprep.subr.mxu0 %v166
    %2294 = vmatpush1.msra.mxu0 %v165
    %2295 = vmatprep.subr.mxu0 %v170
    %2296 = vmatpush1.msra.mxu0 %v169
    %2297 = vmatprep.subr.mxu0 %v174
    %2298 = vmatpush1.msra.mxu0 %v173
    %2299 = vmatprep.subr.mxu0 %v178
    %2300 = vmatpush1.msra.mxu0 %v177
    %2301 = vmatprep.subr.mxu0 %v182
    %2302 = vmatpush1.msra.mxu0 %v181
    %2303 = vmatprep.subr.mxu0 %v186
    %2304 = vmatpush1.msra.mxu0 %v185
    %2305 = vmatprep.subr.mxu0 %v190
    %2306 = vmatpush1.msra.mxu0 %v189
    %2307 = vmatprep.subr.mxu0 %v194
    %2308 = vmatpush1.msra.mxu0 %v193
    %2309 = vmatprep.subr.mxu0 %v198
    %2310 = vmatpush1.msra.mxu0 %v197
    %2311 = vmatprep.subr.mxu0 %v202
    %2312 = vmatpush1.msra.mxu0 %v201
    %2313 = vmatprep.subr.mxu0 %v206
    %2314 = vmatpush1.msra.mxu0 %v205
    %2315 = vmatprep.subr.mxu0 0.0
    %2316 = vmatpush1.msra.mxu0 0.0
    %2317 = vmatprep.subr.mxu0 0.0
    %2318 = vmatpush1.msra.mxu0 0.0
    %2319 = vmatprep.subr.mxu0 0.0
    %2320 = vmatpush1.msra.mxu0 0.0
    %2321 = vmatprep.subr.mxu0 0.0
    %2322 = vmatpush1.msra.mxu0 0.0
    %2323 = vmatprep.subr.mxu0 0.0
    %2324 = vmatpush1.msra.mxu0 0.0
    %2325 = vmatprep.subr.mxu0 0.0
    %2326 = vmatpush1.msra.mxu0 0.0
    %2327 = vmatprep.subr.mxu0 0.0
    %2328 = vmatpush1.msra.mxu0 0.0
    %2329 = vmatprep.subr.mxu0 0.0
    %2330 = vmatpush1.msra.mxu0 0.0
    %2331 = vmatprep.subr.mxu0 0.0
    %2332 = vmatpush1.msra.mxu0 0.0
    %2333 = vmatprep.subr.mxu0 0.0
    %2334 = vmatpush1.msra.mxu0 0.0
    %2335 = vmatprep.subr.mxu0 0.0
    %2336 = vmatpush1.msra.mxu0 0.0
    %2337 = vmatprep.subr.mxu0 0.0
    %2338 = vmatpush1.msra.mxu0 0.0
    %2339 = vmatprep.subr.mxu0 0.0
    %2340 = vmatpush1.msra.mxu0 0.0
    %2341 = vmatprep.subr.mxu0 0.0
    %2342 = vmatpush1.msra.mxu0 0.0
    %2343 = vmatprep.subr.mxu0 0.0
    %2344 = vmatpush1.msra.mxu0 0.0
    %2345 = vmatprep.subr.mxu0 0.0
    %2346 = vmatpush1.msra.mxu0 0.0
    %2347 = vmatprep.mubr.f32.mxu0 0.0
    %2348 = vmatmul.mubr.f32.gmra.mrb[0].mxu0 %v2105
    %v2349 = vpop.f32.mrb[0].mxu0
    %v2350 = vadd.f32 0.0, %v2349
    %v2351 = vpop.f32.mrb[0].mxu0
    %v2352 = vadd.f32 0.0, %v2351
    %2353 = vdwg.mxu0
    %v2354 = vadd.f32 %v139, %v2279
    %v2355 = vadd.f32 %v140, %v2281
    %v2356 = vadd.f32 %v141, %v2350
    %v2357 = vadd.f32 %v142, %v2352
    %v2358 = vadd.f32 %v2354, %v376
    %v2359 = vadd.f32 %v2355, %v380
    %v2360 = vadd.f32 %v2356, %v384
    %v2361 = vadd.f32 %v2357, %v388
    %v2362 = vxor.u32 %v2358, 2147483648
    %v2363 = vmul.f32 %v2362, 1.442695
    %v2364 = vpow.pop %v2363
    %v2365 = vadd.f32 %v2364, 1.0
    %v2366 = vrcp.pop %v2365
    %v2367 = vmul.f32 1.0, %v2366
    %v2368 = vxor.u32 %v2359, 2147483648
    %v2369 = vmul.f32 %v2368, 1.442695
    %v2370 = vpow.pop %v2369
    %v2371 = vadd.f32 %v2370, 1.0
    %v2372 = vrcp.pop %v2371
    %v2373 = vmul.f32 1.0, %v2372
    %v2374 = vtanh.pop %v2360
    %v2375 = vxor.u32 %v2361, 2147483648
    %v2376 = vmul.f32 %v2375, 1.442695
    %v2377 = vpow.pop %v2376
    %v2378 = vadd.f32 %v2377, 1.0
    %v2379 = vrcp.pop %v2378
    %v2380 = vmul.f32 1.0, %v2379
    %v2381 = vmul.f32 %v2373, %v2103
    %v2382 = vmul.f32 %v2367, %v2374
    %v2383 = vadd.f32 %v2381, %v2382
    %v2384 = vtanh.pop %v2383
    %v2385 = vmul.f32 %v2380, %v2384
    %2386 = vset.pattern.permute.xlu0 3
    %2387 = vperm.xlu0 %2386, %v2205
    %v2388 = vpop.permute.xlu0 %2387
    %v2390 = vmul.f32 %v2388, %v425
    %2391 = vmatprep.subr.mxu0 0.0
    %2392 = vmatpush1.msra.mxu0 %v208
    %2393 = vmatprep.subr.mxu0 0.0
    %2394 = vmatpush1.msra.mxu0 %v209
    %2395 = vmatprep.subr.mxu0 0.0
    %2396 = vmatpush1.msra.mxu0 %v210
    %2397 = vmatprep.subr.mxu0 0.0
    %2398 = vmatpush1.msra.mxu0 %v211
    %2399 = vmatprep.subr.mxu0 0.0
    %2400 = vmatpush1.msra.mxu0 %v212
    %2401 = vmatprep.subr.mxu0 0.0
    %2402 = vmatpush1.msra.mxu0 %v213
    %2403 = vmatprep.subr.mxu0 0.0
    %2404 = vmatpush1.msra.mxu0 %v214
    %2405 = vmatprep.subr.mxu0 0.0
    %2406 = vmatpush1.msra.mxu0 %v215
    %2407 = vmatprep.subr.mxu0 0.0
    %2408 = vmatpush1.msra.mxu0 %v216
    %2409 = vmatprep.subr.mxu0 0.0
    %2410 = vmatpush1.msra.mxu0 %v217
    %2411 = vmatprep.subr.mxu0 0.0
    %2412 = vmatpush1.msra.mxu0 %v218
    %2413 = vmatprep.subr.mxu0 0.0
    %2414 = vmatpush1.msra.mxu0 %v219
    %2415 = vmatprep.subr.mxu0 0.0
    %2416 = vmatpush1.msra.mxu0 %v220
    %2417 = vmatprep.subr.mxu0 0.0
    %2418 = vmatpush1.msra.mxu0 %v221
    %2419 = vmatprep.subr.mxu0 0.0
    %2420 = vmatpush1.msra.mxu0 %v222
    %2421 = vmatprep.subr.mxu0 0.0
    %2422 = vmatpush1.msra.mxu0 %v223
    %2423 = vmatprep.subr.mxu0 0.0
    %2424 = vmatpush1.msra.mxu0 0.0
    %2425 = vmatprep.subr.mxu0 0.0
    %2426 = vmatpush1.msra.mxu0 0.0
    %2427 = vmatprep.subr.mxu0 0.0
    %2428 = vmatpush1.msra.mxu0 0.0
    %2429 = vmatprep.subr.mxu0 0.0
    %2430 = vmatpush1.msra.mxu0 0.0
    %2431 = vmatprep.subr.mxu0 0.0
    %2432 = vmatpush1.msra.mxu0 0.0
    %2433 = vmatprep.subr.mxu0 0.0
    %2434 = vmatpush1.msra.mxu0 0.0
    %2435 = vmatprep.subr.mxu0 0.0
    %2436 = vmatpush1.msra.mxu0 0.0
    %2437 = vmatprep.subr.mxu0 0.0
    %2438 = vmatpush1.msra.mxu0 0.0
    %2439 = vmatprep.subr.mxu0 0.0
    %2440 = vmatpush1.msra.mxu0 0.0
    %2441 = vmatprep.subr.mxu0 0.0
    %2442 = vmatpush1.msra.mxu0 0.0
    %2443 = vmatprep.subr.mxu0 0.0
    %2444 = vmatpush1.msra.mxu0 0.0
    %2445 = vmatprep.subr.mxu0 0.0
    %2446 = vmatpush1.msra.mxu0 0.0
    %2447 = vmatprep.subr.mxu0 0.0
    %2448 = vmatpush1.msra.mxu0 0.0
    %2449 = vmatprep.subr.mxu0 0.0
    %2450 = vmatpush1.msra.mxu0 0.0
    %2451 = vmatprep.subr.mxu0 0.0
    %2452 = vmatpush1.msra.mxu0 0.0
    %2453 = vmatprep.subr.mxu0 0.0
    %2454 = vmatpush1.msra.mxu0 0.0
    %2455 = vmatprep.mubr.f32.mxu0 0.0
    %2456 = vmatmul.mubr.f32.gmra.mrb[0].mxu0 %v2385
    %v2457 = vpop.f32.mrb[0].mxu0
    %v2458 = vadd.f32 %v2390, %v2457
    %v2459 = vpop.f32.mrb[0].mxu0
    %2460 = vdwg.mxu0
    %v2461 = vadd.f32 %v2458, %v502
    %v2462 = vxor.u32 %v2461, 2147483648
    %v2463 = vmul.f32 %v2462, 1.442695
    %v2464 = vpow.pop %v2463
    %v2465 = vadd.f32 %v2464, 1.0
    %v2466 = vrcp.pop %v2465
    %v2467 = vmul.f32 1.0, %v2466
    %v2468 = vtanh.pop %v2461
    %v2469 = vmul.f32 %v2467, %v2199
    %2471 = vrot.lane.b32.xlu0 %v2468, 126
    %v2472 = vpop.permute.xlu0 %2471
    %v2474 = vmul.f32 %v2467, %v2472
    %2476 = vrot.lane.b32.xlu0 %v2474, 1
    %v2477 = vpop.permute.xlu0 %2476
    %v2479 = vadd.f32 %v2469, %v2477
    %v2480 = vtanh.pop %v2479
    %2482 = vrot.lane.b32.xlu0 %v2480, 2
    %v2483 = vpop.permute.xlu0 %2482
    %v2485 = vmul.f32 %v2467, %v2483
    %2487 = vrot.lane.b32.xlu0 %v2485, 4
    %v2488 = vpop.permute.xlu0 %2487
    %vm2490 = vcmask 64568
    %2491 = vst.msk [vmem:[#allocation5] sm:$0xff] %vm2490, %v2488
    // Predicated region
    $region34: #{tpu_custom_call.1} parent=1 // pred_check
      _
    $region35: #{tpu_custom_call.1} parent=1 // pred_check_branch
      %2493 = sbr.rel (0) target = $region37
    $region36: #{tpu_custom_call.1} parent=1 // pred_region
      %s2495 = ssub.s32 128, 128
      %2496 = vsyncadd [#allocation4], %s2495
      %s2498 = sshll.u32 [#allocation5], 4
      %s2499 = int_to_ptr.vmem [resolvable:$true] %s2498
      %2501 = dma.vmem_to_hbm [thread:$0]  %s2499, 128, %s7, [#allocation4]
    $region37: #{tpu_custom_call.1} parent=1 // pred_fallthru
      _
    // Predicated region
    $region38: #{tpu_custom_call.1} parent=1 // pred_check
      _
    $region39: #{tpu_custom_call.1} parent=1 // pred_check_branch
      %2503 = sbr.rel (0) target = $region41
    $region40: #{tpu_custom_call.1} parent=1 // pred_region
      %2504 = dma.done [#allocation4], 128
    $region41: #{tpu_custom_call.1} parent=1 // pred_fallthru
      _
    %2505 = vsyncpa [#allocation3], 1
    %2506 = vsyncpa [#allocation4], 1

</llo_original>
